<compile_context>
chip_gen: v5e
topology: v5e:2x2
jax: 0.10.0
libtpu: 0.0.40
codegen_flags: <defaults>
</compile_context>

<pallas_src>
import jax
import jax.numpy as jnp
from jax import lax
from jax.experimental import pallas as pl
from jax.experimental.pallas import tpu as pltpu

EPS = 1e-5


# ----------------------------------------------------------------------------
# In-kernel helpers (operate on channels-first tiles).
# ----------------------------------------------------------------------------
def _zero_pad_border(pad_ref, C, H, W):
    """Zero only the 1-element border of the (C, H+2, W+2) padding scratch."""
    zrow = jnp.zeros((C, 1, W + 2), pad_ref.dtype)
    zcol = jnp.zeros((C, H, 1), pad_ref.dtype)
    pad_ref[:, 0:1, :] = zrow
    pad_ref[:, H + 1:H + 2, :] = zrow
    pad_ref[:, 1:H + 1, 0:1] = zcol
    pad_ref[:, 1:H + 1, W + 1:W + 2] = zcol


def _im2col(pad_ref, col_ref, C, H, W):
    """col[(3*dh+dw)*C + ci, h*W + w] = pad[ci, h+dh, w+dw]."""
    for t in range(9):
        dh, dw = t // 3, t % 3
        col_ref[t * C:(t + 1) * C, :] = (
            pad_ref[:, dh:dh + H, dw:dw + W].reshape(C, H * W))


# ----------------------------------------------------------------------------
# Kernel 1: conv1 (fused im2col matmul) + per-sample BN statistics.
# ----------------------------------------------------------------------------
def conv1_stats_kernel(x_ref, w_ref, b_ref, h_ref, stats_ref, pad_ref, col_ref):
    # x_ref:     (1, C, H, W)   bf16  one batch element, NCHW layout
    # w_ref:     (C, 9*C)       bf16  W_mat[co, (3*dh+dw)*C + ci]
    # b_ref:     (C, 1)         f32
    # h_ref:     (1, C, H*W)    f32   conv1 output (pre-BN), lane-dense store
    # stats_ref: (1, C, 2)      f32   per-sample [sum, sum_of_squares]
    # pad_ref:   (C, H+2, W+2)  bf16  scratch (zero border == SAME padding)
    # col_ref:   (9*C, H*W)     bf16  im2col scratch
    C, Hp2, Wp2 = pad_ref.shape
    H, W = Hp2 - 2, Wp2 - 2

    _zero_pad_border(pad_ref, C, H, W)
    pad_ref[:, 1:H + 1, 1:W + 1] = x_ref[0]
    _im2col(pad_ref, col_ref, C, H, W)

    # One big MXU matmul: (C, 9C) x (9C, H*W), bf16 in / f32 accumulate.
    h = jnp.dot(w_ref[...], col_ref[...],
                preferred_element_type=jnp.float32) + b_ref[...]   # (C, H*W)
    h_ref[0] = h

    # Single-pass BN statistics (cross-lane reduce -> XLU, essentially free).
    stats_ref[0, :, 0:1] = jnp.sum(h, axis=1, keepdims=True)
    stats_ref[0, :, 1:2] = jnp.sum(h * h, axis=1, keepdims=True)


# ----------------------------------------------------------------------------
# Kernel 2: folded BN (scale/shift) + ReLU + conv2 + residual add.
# ----------------------------------------------------------------------------
def bn_relu_conv2_res_kernel(h_ref, scale_ref, shift_ref, w_ref, b_ref,
                             xres_ref, o_ref, pad_ref, col_ref):
    # h_ref:     (1, C, H*W)    f32   conv1 output
    # scale_ref: (C, 1)         f32   gamma * rsqrt(var + eps)
    # shift_ref: (C, 1)         f32   beta - mean * scale
    # w_ref:     (C, 9*C)       bf16
    # b_ref:     (C, 1)         f32
    # xres_ref:  (1, C, H*W)    f32   residual input (original x)
    # o_ref:     (1, C, H*W)    f32   block output, lane-dense store
    C, Hp2, Wp2 = pad_ref.shape
    H, W = Hp2 - 2, Wp2 - 2

    # BN (precomputed scale/shift) fused with ReLU, in f32 on the VPU.
    hn = jnp.maximum(h_ref[0] * scale_ref[...] + shift_ref[...], 0.0)

    _zero_pad_border(pad_ref, C, H, W)
    pad_ref[:, 1:H + 1, 1:W + 1] = hn.astype(pad_ref.dtype).reshape(C, H, W)
    _im2col(pad_ref, col_ref, C, H, W)

    y = jnp.dot(w_ref[...], col_ref[...],
                preferred_element_type=jnp.float32)                # (C, H*W)
    o_ref[0] = y + b_ref[...] + xres_ref[0]


# ----------------------------------------------------------------------------
# Wrapper
# ----------------------------------------------------------------------------
def resnet_block(x_nchw, w1, b1, w2, b2, gamma, beta):
    """x_nchw: (N, C, H, W); w1/w2: (3, 3, Cin, Cout) HWIO; b/gamma/beta: (C,)."""
    N, C, H, W = x_nchw.shape
    HW = H * W

    x32 = x_nchw.astype(jnp.float32)
    x_bf = x32.astype(jnp.bfloat16)           # MXU operand for conv1
    x_res = x32.reshape(N, C, HW)             # residual stays f32 (free reshape)

    # Fused conv weight matrices: W_mat[co, (3*dh+dw)*C + ci], bf16 for the MXU.
    w1m = jnp.transpose(w1.astype(jnp.float32).reshape(9 * C, C)).astype(jnp.bfloat16)
    w2m = jnp.transpose(w2.astype(jnp.float32).reshape(9 * C, C)).astype(jnp.bfloat16)
    b1c = b1.astype(jnp.float32).reshape(C, 1)
    b2c = b2.astype(jnp.float32).reshape(C, 1)

    cparams = pltpu.CompilerParams(
        dimension_semantics=("parallel",),
        vmem_limit_bytes=32 * 1024 * 1024,
    )
    conv_flops = 2 * N * HW * (9 * C) * C
    scratch = [pltpu.VMEM((C, H + 2, W + 2), jnp.bfloat16),   # padded activation
               pltpu.VMEM((9 * C, HW), jnp.bfloat16)]         # im2col buffer

    # ---- Pass 1: conv1 + per-sample BN statistics --------------------------
    cost1 = pl.CostEstimate(
        flops=conv_flops, transcendentals=0,
        bytes_accessed=(x_bf.size * 2 + w1m.size * 2 + b1c.size * 4
                        + N * C * HW * 4 + N * C * 2 * 4))
    h, stats = pl.pallas_call(
        conv1_stats_kernel,
        out_shape=(jax.ShapeDtypeStruct((N, C, HW), jnp.float32),
                   jax.ShapeDtypeStruct((N, C, 2), jnp.float32)),
        grid_spec=pltpu.PrefetchScalarGridSpec(
            num_scalar_prefetch=0,
            grid=(N,),
            in_specs=[pl.BlockSpec((1, C, H, W), lambda n: (n, 0, 0, 0)),
                      pl.BlockSpec((C, 9 * C), lambda n: (0, 0)),
                      pl.BlockSpec((C, 1), lambda n: (0, 0))],
            out_specs=(pl.BlockSpec((1, C, HW), lambda n: (n, 0, 0)),
                       pl.BlockSpec((1, C, 2), lambda n: (n, 0, 0))),
            scratch_shapes=scratch),
        compiler_params=cparams,
        cost_estimate=cost1,
    )(x_bf, w1m, b1c)

    # ---- BN batch statistics (train mode, biased variance); tiny (C,) math --
    cnt = jnp.float32(N * HW)
    total = jnp.sum(stats, axis=0)                      # (C, 2)
    mean = total[:, 0] / cnt
    var = jnp.maximum(total[:, 1] / cnt - mean * mean, 0.0)
    scale = gamma.astype(jnp.float32) * lax.rsqrt(var + EPS)
    shift = beta.astype(jnp.float32) - mean * scale

    # ---- Pass 2: BN apply + ReLU + conv2 + residual -------------------------
    cost2 = pl.CostEstimate(
        flops=conv_flops, transcendentals=0,
        bytes_accessed=(3 * N * C * HW * 4 + w2m.size * 2 + 3 * C * 4))
    y = pl.pallas_call(
        bn_relu_conv2_res_kernel,
        out_shape=jax.ShapeDtypeStruct((N, C, HW), jnp.float32),
        grid_spec=pltpu.PrefetchScalarGridSpec(
            num_scalar_prefetch=0,
            grid=(N,),
            in_specs=[pl.BlockSpec((1, C, HW), lambda n: (n, 0, 0)),
                      pl.BlockSpec((C, 1), lambda n: (0, 0)),
                      pl.BlockSpec((C, 1), lambda n: (0, 0)),
                      pl.BlockSpec((C, 9 * C), lambda n: (0, 0)),
                      pl.BlockSpec((C, 1), lambda n: (0, 0)),
                      pl.BlockSpec((1, C, HW), lambda n: (n, 0, 0))],
            out_specs=pl.BlockSpec((1, C, HW), lambda n: (n, 0, 0)),
            scratch_shapes=scratch),
        compiler_params=cparams,
        cost_estimate=cost2,
    )(h, scale.reshape(C, 1), shift.reshape(C, 1), w2m, b2c, x_res)

    return y.reshape(N, C, H, W)                        # free reshape, already NCHW


# ----------------------------------------------------------------------------
# Pure-JAX reference (same math as the PyTorch module in train mode).
# ----------------------------------------------------------------------------
def ref_forward(x_nchw, w1, b1, w2, b2, gamma, beta):
    x = jnp.transpose(x_nchw, (0, 2, 3, 1)).astype(jnp.float32)
    dn = ('NHWC', 'HWIO', 'NHWC')
    h = lax.conv_general_dilated(x, w1, (1, 1), 'SAME', dimension_numbers=dn,
                                 precision=lax.Precision.HIGHEST) + b1
    mean = h.mean(axis=(0, 1, 2))
    var = ((h - mean) ** 2).mean(axis=(0, 1, 2))
    h = (h - mean) * lax.rsqrt(var + EPS) * gamma + beta
    h = jnp.maximum(h, 0.0)
    y = lax.conv_general_dilated(h, w2, (1, 1), 'SAME', dimension_numbers=dn,
                                 precision=lax.Precision.HIGHEST) + b2
    y = y + x
    return jnp.transpose(y, (0, 3, 1, 2))


if __name__ == "__main__":
    key = jax.random.PRNGKey(0)
    N, C, H, W = 2, 4, 16, 16

    k_x, k_w1, k_b1, k_w2, k_b2 = jax.random.split(key, 5)
    x = jax.random.normal(k_x, (N, C, H, W), jnp.float32)

    # Conv weights in HWIO; BN affine params at PyTorch defaults (1, 0).
    w1 = jax.random.normal(k_w1, (3, 3, C, C), jnp.float32) * 0.1
    b1 = jax.random.normal(k_b1, (C,), jnp.float32) * 0.1
    w2 = jax.random.normal(k_w2, (3, 3, C, C), jnp.float32) * 0.1
    b2 = jax.random.normal(k_b2, (C,), jnp.float32) * 0.1
    gamma = jnp.ones((C,), jnp.float32)
    beta = jnp.zeros((C,), jnp.float32)

    out = jax.jit(resnet_block)(x, w1, b1, w2, b2, gamma, beta)
    out = jax.block_until_ready(out)

    ref = ref_forward(x, w1, b1, w2, b2, gamma, beta)
    assert out.shape == (N, C, H, W)
    err = jnp.max(jnp.abs(out - ref))
    # Tolerance loosened vs the pure-f32 kernel because conv operands are bf16
    # on the MXU (f32 accumulation); observed error is a few 1e-3.
    assert jnp.allclose(out, ref, atol=2e-2, rtol=2e-2), f"max abs err {err}"

    print("KERNEL_OK")
</pallas_src>

<mosaic_0001>
module attributes {stable_mosaic.version = 11 : i64} {
  func.func @conv1_stats_kernel(%arg0: i32, %arg1: memref<1x4x16x16xbf16, #tpu.memory_space<vmem>>, %arg2: memref<4x36xbf16, #tpu.memory_space<vmem>>, %arg3: memref<4x1xf32, #tpu.memory_space<vmem>>, %arg4: memref<1x4x256xf32, #tpu.memory_space<vmem>>, %arg5: memref<1x4x2xf32, #tpu.memory_space<vmem>>, %arg6: memref<4x18x18xbf16, #tpu.memory_space<vmem>>, %arg7: memref<36x256xbf16, #tpu.memory_space<vmem>>) attributes {dimension_semantics = [#tpu.dimension_semantics<parallel>], iteration_bounds = array<i64: 2>, scalar_prefetch = 0 : i64, scratch_operands = 2 : i64, tpu.core_type = #tpu.core_type<tc>, window_params = [{transform_indices = @transform_0, window_bounds = array<i64: 1, 4, 16, 16>}, {pipeline_mode = #tpu.pipeline_mode<synchronous>, transform_indices = @transform_1, window_bounds = array<i64: 4, 36>}, {pipeline_mode = #tpu.pipeline_mode<synchronous>, transform_indices = @transform_2, window_bounds = array<i64: 4, 1>}, {transform_indices = @transform_3, window_bounds = array<i64: 1, 4, 256>}, {transform_indices = @transform_4, window_bounds = array<i64: 1, 4, 2>}]} {
    %cst = arith.constant 0.000000e+00 : bf16
    %0 = vector.broadcast %cst : bf16 to vector<4x1x18xbf16>
    %cst_0 = arith.constant 0.000000e+00 : bf16
    %1 = vector.broadcast %cst_0 : bf16 to vector<4x16x1xbf16>
    %c0 = arith.constant 0 : index
    %c0_1 = arith.constant 0 : index
    %c0_2 = arith.constant 0 : index
    %2 = vector.load %arg6[%c0, %c0_1, %c0_2] : memref<4x18x18xbf16, #tpu.memory_space<vmem>>, vector<4x1x18xbf16>
    tpu.vector_store %arg6[%c0, %c0_1, %c0_2], %0 {strides = array<i32>} : memref<4x18x18xbf16, #tpu.memory_space<vmem>>, vector<4x1x18xbf16>,
    %c0_3 = arith.constant 0 : index
    %c17 = arith.constant 17 : index
    %c0_4 = arith.constant 0 : index
    %3 = vector.load %arg6[%c0_3, %c17, %c0_4] : memref<4x18x18xbf16, #tpu.memory_space<vmem>>, vector<4x1x18xbf16>
    tpu.vector_store %arg6[%c0_3, %c17, %c0_4], %0 {strides = array<i32>} : memref<4x18x18xbf16, #tpu.memory_space<vmem>>, vector<4x1x18xbf16>,
    %c0_5 = arith.constant 0 : index
    %c1 = arith.constant 1 : index
    %c0_6 = arith.constant 0 : index
    %4 = vector.load %arg6[%c0_5, %c1, %c0_6] : memref<4x18x18xbf16, #tpu.memory_space<vmem>>, vector<4x16x1xbf16>
    tpu.vector_store %arg6[%c0_5, %c1, %c0_6], %1 {strides = array<i32>} : memref<4x18x18xbf16, #tpu.memory_space<vmem>>, vector<4x16x1xbf16>,
    %c0_7 = arith.constant 0 : index
    %c1_8 = arith.constant 1 : index
    %c17_9 = arith.constant 17 : index
    %5 = vector.load %arg6[%c0_7, %c1_8, %c17_9] : memref<4x18x18xbf16, #tpu.memory_space<vmem>>, vector<4x16x1xbf16>
    tpu.vector_store %arg6[%c0_7, %c1_8, %c17_9], %1 {strides = array<i32>} : memref<4x18x18xbf16, #tpu.memory_space<vmem>>, vector<4x16x1xbf16>,
    %c0_10 = arith.constant 0 : index
    %c0_11 = arith.constant 0 : index
    %c0_12 = arith.constant 0 : index
    %c0_13 = arith.constant 0 : index
    %6 = vector.load %arg1[%c0_10, %c0_11, %c0_12, %c0_13] : memref<1x4x16x16xbf16, #tpu.memory_space<vmem>>, vector<1x4x16x16xbf16>
    %7 = vector.shape_cast %6 : vector<1x4x16x16xbf16> to vector<4x16x16xbf16>
    %c0_14 = arith.constant 0 : index
    %c1_15 = arith.constant 1 : index
    %c1_16 = arith.constant 1 : index
    %8 = vector.load %arg6[%c0_14, %c1_15, %c1_16] : memref<4x18x18xbf16, #tpu.memory_space<vmem>>, vector<4x16x16xbf16>
    tpu.vector_store %arg6[%c0_14, %c1_15, %c1_16], %7 {strides = array<i32>} : memref<4x18x18xbf16, #tpu.memory_space<vmem>>, vector<4x16x16xbf16>,
    %c0_17 = arith.constant 0 : index
    %c0_18 = arith.constant 0 : index
    %c0_19 = arith.constant 0 : index
    %9 = vector.load %arg6[%c0_17, %c0_18, %c0_19] : memref<4x18x18xbf16, #tpu.memory_space<vmem>>, vector<4x16x16xbf16>
    %10 = vector.shape_cast %9 : vector<4x16x16xbf16> to vector<4x256xbf16>
    %c0_20 = arith.constant 0 : index
    %c0_21 = arith.constant 0 : index
    %11 = vector.load %arg7[%c0_20, %c0_21] : memref<36x256xbf16, #tpu.memory_space<vmem>>, vector<4x256xbf16>
    tpu.vector_store %arg7[%c0_20, %c0_21], %10 {strides = array<i32>} : memref<36x256xbf16, #tpu.memory_space<vmem>>, vector<4x256xbf16>,
    %c0_22 = arith.constant 0 : index
    %c0_23 = arith.constant 0 : index
    %c1_24 = arith.constant 1 : index
    %12 = vector.load %arg6[%c0_22, %c0_23, %c1_24] : memref<4x18x18xbf16, #tpu.memory_space<vmem>>, vector<4x16x16xbf16>
    %13 = vector.shape_cast %12 : vector<4x16x16xbf16> to vector<4x256xbf16>
    %c4 = arith.constant 4 : index
    %c0_25 = arith.constant 0 : index
    %14 = vector.load %arg7[%c4, %c0_25] : memref<36x256xbf16, #tpu.memory_space<vmem>>, vector<4x256xbf16>
    tpu.vector_store %arg7[%c4, %c0_25], %13 {strides = array<i32>} : memref<36x256xbf16, #tpu.memory_space<vmem>>, vector<4x256xbf16>,
    %c0_26 = arith.constant 0 : index
    %c0_27 = arith.constant 0 : index
    %c2 = arith.constant 2 : index
    %15 = vector.load %arg6[%c0_26, %c0_27, %c2] : memref<4x18x18xbf16, #tpu.memory_space<vmem>>, vector<4x16x16xbf16>
    %16 = vector.shape_cast %15 : vector<4x16x16xbf16> to vector<4x256xbf16>
    %c8 = arith.constant 8 : index
    %c0_28 = arith.constant 0 : index
    %17 = vector.load %arg7[%c8, %c0_28] : memref<36x256xbf16, #tpu.memory_space<vmem>>, vector<4x256xbf16>
    tpu.vector_store %arg7[%c8, %c0_28], %16 {strides = array<i32>} : memref<36x256xbf16, #tpu.memory_space<vmem>>, vector<4x256xbf16>,
    %c0_29 = arith.constant 0 : index
    %c1_30 = arith.constant 1 : index
    %c0_31 = arith.constant 0 : index
    %18 = vector.load %arg6[%c0_29, %c1_30, %c0_31] : memref<4x18x18xbf16, #tpu.memory_space<vmem>>, vector<4x16x16xbf16>
    %19 = vector.shape_cast %18 : vector<4x16x16xbf16> to vector<4x256xbf16>
    %c12 = arith.constant 12 : index
    %c0_32 = arith.constant 0 : index
    %20 = vector.load %arg7[%c12, %c0_32] : memref<36x256xbf16, #tpu.memory_space<vmem>>, vector<4x256xbf16>
    tpu.vector_store %arg7[%c12, %c0_32], %19 {strides = array<i32>} : memref<36x256xbf16, #tpu.memory_space<vmem>>, vector<4x256xbf16>,
    %c0_33 = arith.constant 0 : index
    %c1_34 = arith.constant 1 : index
    %c1_35 = arith.constant 1 : index
    %21 = vector.load %arg6[%c0_33, %c1_34, %c1_35] : memref<4x18x18xbf16, #tpu.memory_space<vmem>>, vector<4x16x16xbf16>
    %22 = vector.shape_cast %21 : vector<4x16x16xbf16> to vector<4x256xbf16>
    %c16 = arith.constant 16 : index
    %c0_36 = arith.constant 0 : index
    %23 = vector.load %arg7[%c16, %c0_36] : memref<36x256xbf16, #tpu.memory_space<vmem>>, vector<4x256xbf16>
    tpu.vector_store %arg7[%c16, %c0_36], %22 {strides = array<i32>} : memref<36x256xbf16, #tpu.memory_space<vmem>>, vector<4x256xbf16>,
    %c0_37 = arith.constant 0 : index
    %c1_38 = arith.constant 1 : index
    %c2_39 = arith.constant 2 : index
    %24 = vector.load %arg6[%c0_37, %c1_38, %c2_39] : memref<4x18x18xbf16, #tpu.memory_space<vmem>>, vector<4x16x16xbf16>
    %25 = vector.shape_cast %24 : vector<4x16x16xbf16> to vector<4x256xbf16>
    %c20 = arith.constant 20 : index
    %c0_40 = arith.constant 0 : index
    %26 = vector.load %arg7[%c20, %c0_40] : memref<36x256xbf16, #tpu.memory_space<vmem>>, vector<4x256xbf16>
    tpu.vector_store %arg7[%c20, %c0_40], %25 {strides = array<i32>} : memref<36x256xbf16, #tpu.memory_space<vmem>>, vector<4x256xbf16>,
    %c0_41 = arith.constant 0 : index
    %c2_42 = arith.constant 2 : index
    %c0_43 = arith.constant 0 : index
    %27 = vector.load %arg6[%c0_41, %c2_42, %c0_43] : memref<4x18x18xbf16, #tpu.memory_space<vmem>>, vector<4x16x16xbf16>
    %28 = vector.shape_cast %27 : vector<4x16x16xbf16> to vector<4x256xbf16>
    %c24 = arith.constant 24 : index
    %c0_44 = arith.constant 0 : index
    %29 = vector.load %arg7[%c24, %c0_44] : memref<36x256xbf16, #tpu.memory_space<vmem>>, vector<4x256xbf16>
    tpu.vector_store %arg7[%c24, %c0_44], %28 {strides = array<i32>} : memref<36x256xbf16, #tpu.memory_space<vmem>>, vector<4x256xbf16>,
    %c0_45 = arith.constant 0 : index
    %c2_46 = arith.constant 2 : index
    %c1_47 = arith.constant 1 : index
    %30 = vector.load %arg6[%c0_45, %c2_46, %c1_47] : memref<4x18x18xbf16, #tpu.memory_space<vmem>>, vector<4x16x16xbf16>
    %31 = vector.shape_cast %30 : vector<4x16x16xbf16> to vector<4x256xbf16>
    %c28 = arith.constant 28 : index
    %c0_48 = arith.constant 0 : index
    %32 = vector.load %arg7[%c28, %c0_48] : memref<36x256xbf16, #tpu.memory_space<vmem>>, vector<4x256xbf16>
    tpu.vector_store %arg7[%c28, %c0_48], %31 {strides = array<i32>} : memref<36x256xbf16, #tpu.memory_space<vmem>>, vector<4x256xbf16>,
    %c0_49 = arith.constant 0 : index
    %c2_50 = arith.constant 2 : index
    %c2_51 = arith.constant 2 : index
    %33 = vector.load %arg6[%c0_49, %c2_50, %c2_51] : memref<4x18x18xbf16, #tpu.memory_space<vmem>>, vector<4x16x16xbf16>
    %34 = vector.shape_cast %33 : vector<4x16x16xbf16> to vector<4x256xbf16>
    %c32 = arith.constant 32 : index
    %c0_52 = arith.constant 0 : index
    %35 = vector.load %arg7[%c32, %c0_52] : memref<36x256xbf16, #tpu.memory_space<vmem>>, vector<4x256xbf16>
    tpu.vector_store %arg7[%c32, %c0_52], %34 {strides = array<i32>} : memref<36x256xbf16, #tpu.memory_space<vmem>>, vector<4x256xbf16>,
    %c0_53 = arith.constant 0 : index
    %c0_54 = arith.constant 0 : index
    %36 = vector.load %arg2[%c0_53, %c0_54] : memref<4x36xbf16, #tpu.memory_space<vmem>>, vector<4x36xbf16>
    %c0_55 = arith.constant 0 : index
    %c0_56 = arith.constant 0 : index
    %37 = vector.load %arg7[%c0_55, %c0_56] : memref<36x256xbf16, #tpu.memory_space<vmem>>, vector<36x256xbf16>
    %cst_57 = arith.constant dense<0.000000e+00> : vector<4x256xf32>
    %38 = tpu.matmul %36, %37, %cst_57 {dimension_numbers = #tpu.dot_dimension_numbers<[1], [0], [0], [1], [0, 0, 1, 1], [], []>} : vector<4x36xbf16>, vector<36x256xbf16>, vector<4x256xf32> -> vector<4x256xf32>
    %c0_58 = arith.constant 0 : index
    %c0_59 = arith.constant 0 : index
    %39 = vector.load %arg3[%c0_58, %c0_59] : memref<4x1xf32, #tpu.memory_space<vmem>>, vector<4x1xf32>
    %40 = vector.broadcast %39 : vector<4x1xf32> to vector<4x256xf32>
    %41 = arith.addf %38, %40 : vector<4x256xf32>
    %c0_60 = arith.constant 0 : index
    %c0_61 = arith.constant 0 : index
    %c0_62 = arith.constant 0 : index
    %42 = vector.load %arg4[%c0_60, %c0_61, %c0_62] : memref<1x4x256xf32, #tpu.memory_space<vmem>>, vector<1x4x256xf32>
    %43 = vector.shape_cast %42 : vector<1x4x256xf32> to vector<4x256xf32>
    %44 = vector.shape_cast %41 : vector<4x256xf32> to vector<1x4x256xf32>
    tpu.vector_store %arg4[%c0_60, %c0_61, %c0_62], %44 {strides = array<i32>} : memref<1x4x256xf32, #tpu.memory_space<vmem>>, vector<1x4x256xf32>,
    %cst_63 = arith.constant dense<0.000000e+00> : vector<4xf32>
    %45 = vector.multi_reduction <add>, %41, %cst_63 [1] : vector<4x256xf32> to vector<4xf32>
    %46 = vector.shape_cast %45 : vector<4xf32> to vector<4x1xf32>
    %c0_64 = arith.constant 0 : index
    %c0_65 = arith.constant 0 : index
    %c0_66 = arith.constant 0 : index
    %47 = vector.load %arg5[%c0_64, %c0_65, %c0_66] : memref<1x4x2xf32, #tpu.memory_space<vmem>>, vector<1x4x1xf32>
    %48 = vector.shape_cast %47 : vector<1x4x1xf32> to vector<4x1xf32>
    %49 = vector.shape_cast %46 : vector<4x1xf32> to vector<1x4x1xf32>
    tpu.vector_store %arg5[%c0_64, %c0_65, %c0_66], %49 {strides = array<i32>} : memref<1x4x2xf32, #tpu.memory_space<vmem>>, vector<1x4x1xf32>,
    %50 = arith.mulf %41, %41 : vector<4x256xf32>
    %cst_67 = arith.constant dense<0.000000e+00> : vector<4xf32>
    %51 = vector.multi_reduction <add>, %50, %cst_67 [1] : vector<4x256xf32> to vector<4xf32>
    %52 = vector.shape_cast %51 : vector<4xf32> to vector<4x1xf32>
    %c0_68 = arith.constant 0 : index
    %c0_69 = arith.constant 0 : index
    %c1_70 = arith.constant 1 : index
    %53 = vector.load %arg5[%c0_68, %c0_69, %c1_70] : memref<1x4x2xf32, #tpu.memory_space<vmem>>, vector<1x4x1xf32>
    %54 = vector.shape_cast %53 : vector<1x4x1xf32> to vector<4x1xf32>
    %55 = vector.shape_cast %52 : vector<4x1xf32> to vector<1x4x1xf32>
    tpu.vector_store %arg5[%c0_68, %c0_69, %c1_70], %55 {strides = array<i32>} : memref<1x4x2xf32, #tpu.memory_space<vmem>>, vector<1x4x1xf32>,
    return
  }
  func.func @transform_0(%arg0: i32) -> (i32, i32, i32, i32) {
    %c0_i32 = arith.constant 0 : i32
    %c0_i32_0 = arith.constant 0 : i32
    %c0_i32_1 = arith.constant 0 : i32
    %c0_i32_2 = arith.constant 0 : i32
    return %arg0, %c0_i32, %c0_i32_0, %c0_i32_1 : i32, i32, i32, i32
  }
  func.func @transform_1(%arg0: i32) -> (i32, i32) {
    %c0_i32 = arith.constant 0 : i32
    %c0_i32_0 = arith.constant 0 : i32
    %c0_i32_1 = arith.constant 0 : i32
    return %c0_i32, %c0_i32_0 : i32, i32
  }
  func.func @transform_2(%arg0: i32) -> (i32, i32) {
    %c0_i32 = arith.constant 0 : i32
    %c0_i32_0 = arith.constant 0 : i32
    %c0_i32_1 = arith.constant 0 : i32
    return %c0_i32, %c0_i32_0 : i32, i32
  }
  func.func @transform_3(%arg0: i32) -> (i32, i32, i32) {
    %c0_i32 = arith.constant 0 : i32
    %c0_i32_0 = arith.constant 0 : i32
    %c0_i32_1 = arith.constant 0 : i32
    return %arg0, %c0_i32, %c0_i32_0 : i32, i32, i32
  }
  func.func @transform_4(%arg0: i32) -> (i32, i32, i32) {
    %c0_i32 = arith.constant 0 : i32
    %c0_i32_0 = arith.constant 0 : i32
    %c0_i32_1 = arith.constant 0 : i32
    return %arg0, %c0_i32, %c0_i32_0 : i32, i32, i32
  }
}

module attributes {stable_mosaic.version = 11 : i64} {
  func.func @bn_relu_conv2_res_kernel(%arg0: i32, %arg1: memref<1x4x256xf32, #tpu.memory_space<vmem>>, %arg2: memref<4x1xf32, #tpu.memory_space<vmem>>, %arg3: memref<4x1xf32, #tpu.memory_space<vmem>>, %arg4: memref<4x36xbf16, #tpu.memory_space<vmem>>, %arg5: memref<4x1xf32, #tpu.memory_space<vmem>>, %arg6: memref<1x4x256xf32, #tpu.memory_space<vmem>>, %arg7: memref<1x4x256xf32, #tpu.memory_space<vmem>>, %arg8: memref<4x18x18xbf16, #tpu.memory_space<vmem>>, %arg9: memref<36x256xbf16, #tpu.memory_space<vmem>>) attributes {dimension_semantics = [#tpu.dimension_semantics<parallel>], iteration_bounds = array<i64: 2>, scalar_prefetch = 0 : i64, scratch_operands = 2 : i64, tpu.core_type = #tpu.core_type<tc>, window_params = [{transform_indices = @transform_0, window_bounds = array<i64: 1, 4, 256>}, {pipeline_mode = #tpu.pipeline_mode<synchronous>, transform_indices = @transform_1, window_bounds = array<i64: 4, 1>}, {pipeline_mode = #tpu.pipeline_mode<synchronous>, transform_indices = @transform_2, window_bounds = array<i64: 4, 1>}, {pipeline_mode = #tpu.pipeline_mode<synchronous>, transform_indices = @transform_3, window_bounds = array<i64: 4, 36>}, {pipeline_mode = #tpu.pipeline_mode<synchronous>, transform_indices = @transform_4, window_bounds = array<i64: 4, 1>}, {transform_indices = @transform_5, window_bounds = array<i64: 1, 4, 256>}, {transform_indices = @transform_6, window_bounds = array<i64: 1, 4, 256>}]} {
    %c0 = arith.constant 0 : index
    %c0_0 = arith.constant 0 : index
    %c0_1 = arith.constant 0 : index
    %0 = vector.load %arg1[%c0, %c0_0, %c0_1] : memref<1x4x256xf32, #tpu.memory_space<vmem>>, vector<1x4x256xf32>
    %1 = vector.shape_cast %0 : vector<1x4x256xf32> to vector<4x256xf32>
    %c0_2 = arith.constant 0 : index
    %c0_3 = arith.constant 0 : index
    %2 = vector.load %arg2[%c0_2, %c0_3] : memref<4x1xf32, #tpu.memory_space<vmem>>, vector<4x1xf32>
    %3 = vector.broadcast %2 : vector<4x1xf32> to vector<4x256xf32>
    %4 = arith.mulf %1, %3 : vector<4x256xf32>
    %c0_4 = arith.constant 0 : index
    %c0_5 = arith.constant 0 : index
    %5 = vector.load %arg3[%c0_4, %c0_5] : memref<4x1xf32, #tpu.memory_space<vmem>>, vector<4x1xf32>
    %6 = vector.broadcast %5 : vector<4x1xf32> to vector<4x256xf32>
    %7 = arith.addf %4, %6 : vector<4x256xf32>
    %cst = arith.constant 0.000000e+00 : f32
    %8 = vector.broadcast %cst : f32 to vector<4x256xf32>
    %9 = arith.maximumf %7, %8 : vector<4x256xf32>
    %cst_6 = arith.constant 0.000000e+00 : bf16
    %10 = vector.broadcast %cst_6 : bf16 to vector<4x1x18xbf16>
    %cst_7 = arith.constant 0.000000e+00 : bf16
    %11 = vector.broadcast %cst_7 : bf16 to vector<4x16x1xbf16>
    %c0_8 = arith.constant 0 : index
    %c0_9 = arith.constant 0 : index
    %c0_10 = arith.constant 0 : index
    %12 = vector.load %arg8[%c0_8, %c0_9, %c0_10] : memref<4x18x18xbf16, #tpu.memory_space<vmem>>, vector<4x1x18xbf16>
    tpu.vector_store %arg8[%c0_8, %c0_9, %c0_10], %10 {strides = array<i32>} : memref<4x18x18xbf16, #tpu.memory_space<vmem>>, vector<4x1x18xbf16>,
    %c0_11 = arith.constant 0 : index
    %c17 = arith.constant 17 : index
    %c0_12 = arith.constant 0 : index
    %13 = vector.load %arg8[%c0_11, %c17, %c0_12] : memref<4x18x18xbf16, #tpu.memory_space<vmem>>, vector<4x1x18xbf16>
    tpu.vector_store %arg8[%c0_11, %c17, %c0_12], %10 {strides = array<i32>} : memref<4x18x18xbf16, #tpu.memory_space<vmem>>, vector<4x1x18xbf16>,
    %c0_13 = arith.constant 0 : index
    %c1 = arith.constant 1 : index
    %c0_14 = arith.constant 0 : index
    %14 = vector.load %arg8[%c0_13, %c1, %c0_14] : memref<4x18x18xbf16, #tpu.memory_space<vmem>>, vector<4x16x1xbf16>
    tpu.vector_store %arg8[%c0_13, %c1, %c0_14], %11 {strides = array<i32>} : memref<4x18x18xbf16, #tpu.memory_space<vmem>>, vector<4x16x1xbf16>,
    %c0_15 = arith.constant 0 : index
    %c1_16 = arith.constant 1 : index
    %c17_17 = arith.constant 17 : index
    %15 = vector.load %arg8[%c0_15, %c1_16, %c17_17] : memref<4x18x18xbf16, #tpu.memory_space<vmem>>, vector<4x16x1xbf16>
    tpu.vector_store %arg8[%c0_15, %c1_16, %c17_17], %11 {strides = array<i32>} : memref<4x18x18xbf16, #tpu.memory_space<vmem>>, vector<4x16x1xbf16>,
    %16 = arith.truncf %9 : vector<4x256xf32> to vector<4x256xbf16>
    %17 = vector.shape_cast %16 : vector<4x256xbf16> to vector<4x16x16xbf16>
    %c0_18 = arith.constant 0 : index
    %c1_19 = arith.constant 1 : index
    %c1_20 = arith.constant 1 : index
    %18 = vector.load %arg8[%c0_18, %c1_19, %c1_20] : memref<4x18x18xbf16, #tpu.memory_space<vmem>>, vector<4x16x16xbf16>
    tpu.vector_store %arg8[%c0_18, %c1_19, %c1_20], %17 {strides = array<i32>} : memref<4x18x18xbf16, #tpu.memory_space<vmem>>, vector<4x16x16xbf16>,
    %c0_21 = arith.constant 0 : index
    %c0_22 = arith.constant 0 : index
    %c0_23 = arith.constant 0 : index
    %19 = vector.load %arg8[%c0_21, %c0_22, %c0_23] : memref<4x18x18xbf16, #tpu.memory_space<vmem>>, vector<4x16x16xbf16>
    %20 = vector.shape_cast %19 : vector<4x16x16xbf16> to vector<4x256xbf16>
    %c0_24 = arith.constant 0 : index
    %c0_25 = arith.constant 0 : index
    %21 = vector.load %arg9[%c0_24, %c0_25] : memref<36x256xbf16, #tpu.memory_space<vmem>>, vector<4x256xbf16>
    tpu.vector_store %arg9[%c0_24, %c0_25], %20 {strides = array<i32>} : memref<36x256xbf16, #tpu.memory_space<vmem>>, vector<4x256xbf16>,
    %c0_26 = arith.constant 0 : index
    %c0_27 = arith.constant 0 : index
    %c1_28 = arith.constant 1 : index
    %22 = vector.load %arg8[%c0_26, %c0_27, %c1_28] : memref<4x18x18xbf16, #tpu.memory_space<vmem>>, vector<4x16x16xbf16>
    %23 = vector.shape_cast %22 : vector<4x16x16xbf16> to vector<4x256xbf16>
    %c4 = arith.constant 4 : index
    %c0_29 = arith.constant 0 : index
    %24 = vector.load %arg9[%c4, %c0_29] : memref<36x256xbf16, #tpu.memory_space<vmem>>, vector<4x256xbf16>
    tpu.vector_store %arg9[%c4, %c0_29], %23 {strides = array<i32>} : memref<36x256xbf16, #tpu.memory_space<vmem>>, vector<4x256xbf16>,
    %c0_30 = arith.constant 0 : index
    %c0_31 = arith.constant 0 : index
    %c2 = arith.constant 2 : index
    %25 = vector.load %arg8[%c0_30, %c0_31, %c2] : memref<4x18x18xbf16, #tpu.memory_space<vmem>>, vector<4x16x16xbf16>
    %26 = vector.shape_cast %25 : vector<4x16x16xbf16> to vector<4x256xbf16>
    %c8 = arith.constant 8 : index
    %c0_32 = arith.constant 0 : index
    %27 = vector.load %arg9[%c8, %c0_32] : memref<36x256xbf16, #tpu.memory_space<vmem>>, vector<4x256xbf16>
    tpu.vector_store %arg9[%c8, %c0_32], %26 {strides = array<i32>} : memref<36x256xbf16, #tpu.memory_space<vmem>>, vector<4x256xbf16>,
    %c0_33 = arith.constant 0 : index
    %c1_34 = arith.constant 1 : index
    %c0_35 = arith.constant 0 : index
    %28 = vector.load %arg8[%c0_33, %c1_34, %c0_35] : memref<4x18x18xbf16, #tpu.memory_space<vmem>>, vector<4x16x16xbf16>
    %29 = vector.shape_cast %28 : vector<4x16x16xbf16> to vector<4x256xbf16>
    %c12 = arith.constant 12 : index
    %c0_36 = arith.constant 0 : index
    %30 = vector.load %arg9[%c12, %c0_36] : memref<36x256xbf16, #tpu.memory_space<vmem>>, vector<4x256xbf16>
    tpu.vector_store %arg9[%c12, %c0_36], %29 {strides = array<i32>} : memref<36x256xbf16, #tpu.memory_space<vmem>>, vector<4x256xbf16>,
    %c0_37 = arith.constant 0 : index
    %c1_38 = arith.constant 1 : index
    %c1_39 = arith.constant 1 : index
    %31 = vector.load %arg8[%c0_37, %c1_38, %c1_39] : memref<4x18x18xbf16, #tpu.memory_space<vmem>>, vector<4x16x16xbf16>
    %32 = vector.shape_cast %31 : vector<4x16x16xbf16> to vector<4x256xbf16>
    %c16 = arith.constant 16 : index
    %c0_40 = arith.constant 0 : index
    %33 = vector.load %arg9[%c16, %c0_40] : memref<36x256xbf16, #tpu.memory_space<vmem>>, vector<4x256xbf16>
    tpu.vector_store %arg9[%c16, %c0_40], %32 {strides = array<i32>} : memref<36x256xbf16, #tpu.memory_space<vmem>>, vector<4x256xbf16>,
    %c0_41 = arith.constant 0 : index
    %c1_42 = arith.constant 1 : index
    %c2_43 = arith.constant 2 : index
    %34 = vector.load %arg8[%c0_41, %c1_42, %c2_43] : memref<4x18x18xbf16, #tpu.memory_space<vmem>>, vector<4x16x16xbf16>
    %35 = vector.shape_cast %34 : vector<4x16x16xbf16> to vector<4x256xbf16>
    %c20 = arith.constant 20 : index
    %c0_44 = arith.constant 0 : index
    %36 = vector.load %arg9[%c20, %c0_44] : memref<36x256xbf16, #tpu.memory_space<vmem>>, vector<4x256xbf16>
    tpu.vector_store %arg9[%c20, %c0_44], %35 {strides = array<i32>} : memref<36x256xbf16, #tpu.memory_space<vmem>>, vector<4x256xbf16>,
    %c0_45 = arith.constant 0 : index
    %c2_46 = arith.constant 2 : index
    %c0_47 = arith.constant 0 : index
    %37 = vector.load %arg8[%c0_45, %c2_46, %c0_47] : memref<4x18x18xbf16, #tpu.memory_space<vmem>>, vector<4x16x16xbf16>
    %38 = vector.shape_cast %37 : vector<4x16x16xbf16> to vector<4x256xbf16>
    %c24 = arith.constant 24 : index
    %c0_48 = arith.constant 0 : index
    %39 = vector.load %arg9[%c24, %c0_48] : memref<36x256xbf16, #tpu.memory_space<vmem>>, vector<4x256xbf16>
    tpu.vector_store %arg9[%c24, %c0_48], %38 {strides = array<i32>} : memref<36x256xbf16, #tpu.memory_space<vmem>>, vector<4x256xbf16>,
    %c0_49 = arith.constant 0 : index
    %c2_50 = arith.constant 2 : index
    %c1_51 = arith.constant 1 : index
    %40 = vector.load %arg8[%c0_49, %c2_50, %c1_51] : memref<4x18x18xbf16, #tpu.memory_space<vmem>>, vector<4x16x16xbf16>
    %41 = vector.shape_cast %40 : vector<4x16x16xbf16> to vector<4x256xbf16>
    %c28 = arith.constant 28 : index
    %c0_52 = arith.constant 0 : index
    %42 = vector.load %arg9[%c28, %c0_52] : memref<36x256xbf16, #tpu.memory_space<vmem>>, vector<4x256xbf16>
    tpu.vector_store %arg9[%c28, %c0_52], %41 {strides = array<i32>} : memref<36x256xbf16, #tpu.memory_space<vmem>>, vector<4x256xbf16>,
    %c0_53 = arith.constant 0 : index
    %c2_54 = arith.constant 2 : index
    %c2_55 = arith.constant 2 : index
    %43 = vector.load %arg8[%c0_53, %c2_54, %c2_55] : memref<4x18x18xbf16, #tpu.memory_space<vmem>>, vector<4x16x16xbf16>
    %44 = vector.shape_cast %43 : vector<4x16x16xbf16> to vector<4x256xbf16>
    %c32 = arith.constant 32 : index
    %c0_56 = arith.constant 0 : index
    %45 = vector.load %arg9[%c32, %c0_56] : memref<36x256xbf16, #tpu.memory_space<vmem>>, vector<4x256xbf16>
    tpu.vector_store %arg9[%c32, %c0_56], %44 {strides = array<i32>} : memref<36x256xbf16, #tpu.memory_space<vmem>>, vector<4x256xbf16>,
    %c0_57 = arith.constant 0 : index
    %c0_58 = arith.constant 0 : index
    %46 = vector.load %arg4[%c0_57, %c0_58] : memref<4x36xbf16, #tpu.memory_space<vmem>>, vector<4x36xbf16>
    %c0_59 = arith.constant 0 : index
    %c0_60 = arith.constant 0 : index
    %47 = vector.load %arg9[%c0_59, %c0_60] : memref<36x256xbf16, #tpu.memory_space<vmem>>, vector<36x256xbf16>
    %cst_61 = arith.constant dense<0.000000e+00> : vector<4x256xf32>
    %48 = tpu.matmul %46, %47, %cst_61 {dimension_numbers = #tpu.dot_dimension_numbers<[1], [0], [0], [1], [0, 0, 1, 1], [], []>} : vector<4x36xbf16>, vector<36x256xbf16>, vector<4x256xf32> -> vector<4x256xf32>
    %c0_62 = arith.constant 0 : index
    %c0_63 = arith.constant 0 : index
    %49 = vector.load %arg5[%c0_62, %c0_63] : memref<4x1xf32, #tpu.memory_space<vmem>>, vector<4x1xf32>
    %50 = vector.broadcast %49 : vector<4x1xf32> to vector<4x256xf32>
    %51 = arith.addf %48, %50 : vector<4x256xf32>
    %c0_64 = arith.constant 0 : index
    %c0_65 = arith.constant 0 : index
    %c0_66 = arith.constant 0 : index
    %52 = vector.load %arg6[%c0_64, %c0_65, %c0_66] : memref<1x4x256xf32, #tpu.memory_space<vmem>>, vector<1x4x256xf32>
    %53 = vector.shape_cast %52 : vector<1x4x256xf32> to vector<4x256xf32>
    %54 = arith.addf %51, %53 : vector<4x256xf32>
    %c0_67 = arith.constant 0 : index
    %c0_68 = arith.constant 0 : index
    %c0_69 = arith.constant 0 : index
    %55 = vector.load %arg7[%c0_67, %c0_68, %c0_69] : memref<1x4x256xf32, #tpu.memory_space<vmem>>, vector<1x4x256xf32>
    %56 = vector.shape_cast %55 : vector<1x4x256xf32> to vector<4x256xf32>
    %57 = vector.shape_cast %54 : vector<4x256xf32> to vector<1x4x256xf32>
    tpu.vector_store %arg7[%c0_67, %c0_68, %c0_69], %57 {strides = array<i32>} : memref<1x4x256xf32, #tpu.memory_space<vmem>>, vector<1x4x256xf32>,
    return
  }
  func.func @transform_0(%arg0: i32) -> (i32, i32, i32) {
    %c0_i32 = arith.constant 0 : i32
    %c0_i32_0 = arith.constant 0 : i32
    %c0_i32_1 = arith.constant 0 : i32
    return %arg0, %c0_i32, %c0_i32_0 : i32, i32, i32
  }
  func.func @transform_1(%arg0: i32) -> (i32, i32) {
    %c0_i32 = arith.constant 0 : i32
    %c0_i32_0 = arith.constant 0 : i32
    %c0_i32_1 = arith.constant 0 : i32
    return %c0_i32, %c0_i32_0 : i32, i32
  }
  func.func @transform_2(%arg0: i32) -> (i32, i32) {
    %c0_i32 = arith.constant 0 : i32
    %c0_i32_0 = arith.constant 0 : i32
    %c0_i32_1 = arith.constant 0 : i32
    return %c0_i32, %c0_i32_0 : i32, i32
  }
  func.func @transform_3(%arg0: i32) -> (i32, i32) {
    %c0_i32 = arith.constant 0 : i32
    %c0_i32_0 = arith.constant 0 : i32
    %c0_i32_1 = arith.constant 0 : i32
    return %c0_i32, %c0_i32_0 : i32, i32
  }
  func.func @transform_4(%arg0: i32) -> (i32, i32) {
    %c0_i32 = arith.constant 0 : i32
    %c0_i32_0 = arith.constant 0 : i32
    %c0_i32_1 = arith.constant 0 : i32
    return %c0_i32, %c0_i32_0 : i32, i32
  }
  func.func @transform_5(%arg0: i32) -> (i32, i32, i32) {
    %c0_i32 = arith.constant 0 : i32
    %c0_i32_0 = arith.constant 0 : i32
    %c0_i32_1 = arith.constant 0 : i32
    return %arg0, %c0_i32, %c0_i32_0 : i32, i32, i32
  }
  func.func @transform_6(%arg0: i32) -> (i32, i32, i32) {
    %c0_i32 = arith.constant 0 : i32
    %c0_i32_0 = arith.constant 0 : i32
    %c0_i32_1 = arith.constant 0 : i32
    return %arg0, %c0_i32, %c0_i32_0 : i32, i32, i32
  }
}

</mosaic_0001>

<llo_original>
// kernel: resnet_block.2
$region0: #{resnet_block.2}
  #allocation0 [shape = 'u32[]', space=smem, size = 0x4, offset = 0x4, fixed_abs, tag = 'smem constant byte address 0x4 - core index']
  #allocation1 [shape = 'u32[72,128]{1,0:T(1,128)}', space=vmem, size = 0x9000, scoped, tag = 'internal scratch']
  #allocation2 [shape = 'bf16[4,18,18]{2,1,0:T(8,128)(2,1)}', space=vmem, size = 0x6000, scoped, tag = 'scratch operand']
  #allocation3 [shape = 'bf16[36,256]{1,0:T(8,128)(2,1)}', space=vmem, size = 0x5000, scoped, tag = 'scratch operand']
  %s0 = inlined_call_operand.vmem [shape: bf16[2,4,16,16], index: 0, kind: input, shape index: {}]
  %s1 = inlined_call_operand.vmem [shape: bf16[4,36], index: 1, kind: input, shape index: {}]
  %s2 = inlined_call_operand.vmem [shape: f32[4,1], index: 2, kind: input, shape index: {}]
  %s3 = inlined_call_operand.vmem [shape: f32[2,4,256], index: 3, kind: output, shape index: {0}]
  %s4 = inlined_call_operand.vmem [shape: f32[2,4,2], index: 4, kind: output, shape index: {1}]
  %5 = xla_tuple %s3, %s4
  %s6 = sld [smem:[#allocation0]]
  $region53: #{resnet_block.2} parent=0
    _
  %s8 = ssub.s32 1, %s6
  %s9 = scalar_select 0, %s8, %s6
  loop: start=0, step=1, limit=4
  $region2: #{resnet_block.2} parent=0 // loop_pre_header
    _
  $region3: #{resnet_block.2} parent=0 // loop_header
    %s11 = sphi 0, %s15
    %p12 = scmp.ge.s32.totalorder %s11, 4
    %s21 = sphi 0, %s23
    %s24 = sphi 0, %s21
    %s25 = sphi 0, %s24
    %s41 = sphi 0, %s25
    %s45 = sphi 0, %s45
    %s47 = sphi 0, %s45
    %s48 = sphi 0, %s47
    %s62 = sphi 0, %s48
    %s66 = sphi 0, %s66
    %s68 = sphi 0, %s66
    %s69 = sphi 0, %s68
    %s83 = sphi 0, %s69
    %s89 = sphi 0, %s91
    %s92 = sphi 0, %s89
    %s93 = sphi 0, %s92
    %s109 = sphi 0, %s93
    %s115 = sphi 0, %s117
    %s118 = sphi 0, %s115
    %s119 = sphi 0, %s118
    %s135 = sphi 0, %s119
  $region4: #{resnet_block.2} parent=0 // loop_header_branch
    %14 = sbr.rel (%p12) target = $region8
  $region5: #{resnet_block.2} parent=0 // loop_body
    %s16 = ssub.s32 %s11, 1
    %s17 = ssub.s32 %s11, 2
    %s18 = sadd.s32 %s11, 1
    %s19 = ssub.s32 %s11, %s18
    %p20 = scmp.eq.s32.totalorder %s19, 0
    %s22 = sadd.s32 %s21, 1
    %s23 = scalar_select %p20, %s21, %s22
    %p26 = pneg %p20
    %p27 = scmp.eq.s32.totalorder %s11, 1
    %p28 = por %p26, %p27
    %p29 = scmp.ne.s32.totalorder %s21, %s24
    %p30 = scmp.eq.s32.totalorder %s11, 0
    %p31 = por %p29, %p30
    %p32 = scmp.ne.s32.totalorder %s21, %s24
    %p33 = scmp.eq.s32.totalorder %s16, 1
    %p34 = por %p32, %p33
    %p35 = scmp.ne.s32.totalorder %s24, %s25
    %p36 = scmp.eq.s32.totalorder %s16, 0
    %p37 = por %p35, %p36
    %p38 = scmp.ne.s32.totalorder %s24, %s25
    %p39 = scmp.eq.s32.totalorder %s17, 1
    %p40 = por %p38, %p39
    %p42 = scmp.ne.s32.totalorder %s25, %s41
    %p43 = scmp.eq.s32.totalorder %s17, 0
    %p44 = por %p42, %p43
    %s46 = sadd.s32 %s45, 1
    %p49 = scmp.eq.s32.totalorder %s11, 1
    %p50 = scmp.ne.s32.totalorder %s45, %s47
    %p51 = scmp.eq.s32.totalorder %s11, 0
    %p52 = por %p50, %p51
    %p53 = scmp.ne.s32.totalorder %s45, %s47
    %p54 = scmp.eq.s32.totalorder %s16, 1
    %p55 = por %p53, %p54
    %p56 = scmp.ne.s32.totalorder %s47, %s48
    %p57 = scmp.eq.s32.totalorder %s16, 0
    %p58 = por %p56, %p57
    %p59 = scmp.ne.s32.totalorder %s47, %s48
    %p60 = scmp.eq.s32.totalorder %s17, 1
    %p61 = por %p59, %p60
    %p63 = scmp.ne.s32.totalorder %s48, %s62
    %p64 = scmp.eq.s32.totalorder %s17, 0
    %p65 = por %p63, %p64
    %s67 = sadd.s32 %s66, 1
    %p70 = scmp.eq.s32.totalorder %s11, 1
    %p71 = scmp.ne.s32.totalorder %s66, %s68
    %p72 = scmp.eq.s32.totalorder %s11, 0
    %p73 = por %p71, %p72
    %p74 = scmp.ne.s32.totalorder %s66, %s68
    %p75 = scmp.eq.s32.totalorder %s16, 1
    %p76 = por %p74, %p75
    %p77 = scmp.ne.s32.totalorder %s68, %s69
    %p78 = scmp.eq.s32.totalorder %s16, 0
    %p79 = por %p77, %p78
    %p80 = scmp.ne.s32.totalorder %s68, %s69
    %p81 = scmp.eq.s32.totalorder %s17, 1
    %p82 = por %p80, %p81
    %p84 = scmp.ne.s32.totalorder %s69, %s83
    %p85 = scmp.eq.s32.totalorder %s17, 0
    %p86 = por %p84, %p85
    %s87 = ssub.s32 %s11, %s18
    %p88 = scmp.eq.s32.totalorder %s87, 0
    %s90 = sadd.s32 %s89, 1
    %s91 = scalar_select %p88, %s89, %s90
    %p94 = pneg %p88
    %p95 = scmp.eq.s32.totalorder %s11, 1
    %p96 = por %p94, %p95
    %p97 = scmp.ne.s32.totalorder %s89, %s92
    %p98 = scmp.eq.s32.totalorder %s11, 0
    %p99 = por %p97, %p98
    %p100 = scmp.ne.s32.totalorder %s89, %s92
    %p101 = scmp.eq.s32.totalorder %s16, 1
    %p102 = por %p100, %p101
    %p103 = scmp.ne.s32.totalorder %s92, %s93
    %p104 = scmp.eq.s32.totalorder %s16, 0
    %p105 = por %p103, %p104
    %p106 = scmp.ne.s32.totalorder %s92, %s93
    %p107 = scmp.eq.s32.totalorder %s17, 1
    %p108 = por %p106, %p107
    %p110 = scmp.ne.s32.totalorder %s93, %s109
    %p111 = scmp.eq.s32.totalorder %s17, 0
    %p112 = por %p110, %p111
    %s113 = ssub.s32 %s11, %s18
    %p114 = scmp.eq.s32.totalorder %s113, 0
    %s116 = sadd.s32 %s115, 1
    %s117 = scalar_select %p114, %s115, %s116
    %p120 = pneg %p114
    %p121 = scmp.eq.s32.totalorder %s11, 1
    %p122 = por %p120, %p121
    %p123 = scmp.ne.s32.totalorder %s115, %s118
    %p124 = scmp.eq.s32.totalorder %s11, 0
    %p125 = por %p123, %p124
    %p126 = scmp.ne.s32.totalorder %s115, %s118
    %p127 = scmp.eq.s32.totalorder %s16, 1
    %p128 = por %p126, %p127
    %p129 = scmp.ne.s32.totalorder %s118, %s119
    %p130 = scmp.eq.s32.totalorder %s16, 0
    %p131 = por %p129, %p130
    %p132 = scmp.ne.s32.totalorder %s118, %s119
    %p133 = scmp.eq.s32.totalorder %s17, 1
    %p134 = por %p132, %p133
    %p136 = scmp.ne.s32.totalorder %s119, %s135
    %p137 = scmp.eq.s32.totalorder %s17, 0
    %p138 = por %p136, %p137
    %p139 = scmp.le.s32.totalorder 1, %s11
    %p140 = scmp.lt.s32.totalorder %s11, 3
    %p141 = pnand %p139, %p140
    %p142 = pneg %p141
    // Predicated region
    $region9: #{resnet_block.2} parent=5 // pred_check
      _
    $region10: #{resnet_block.2} parent=5 // pred_check_branch
      %144 = sbr.rel (%p141) target = $region12
    $region11: #{resnet_block.2} parent=5 // pred_region
      %s145 = ssub.s32 %s11, 1
      // Predicated region
      $region13: #{resnet_block.2} parent=11 // pred_check
        %p146 = pneg %p58
      $region14: #{resnet_block.2} parent=11 // pred_check_branch
        %148 = sbr.rel (%p146) target = $region16
      $region15: #{resnet_block.2} parent=11 // pred_region
        _
      $region16: #{resnet_block.2} parent=11 // pred_fallthru
        _
      // Predicated region
      $region17: #{resnet_block.2} parent=11 // pred_check
        %p149 = pneg %p79
      $region18: #{resnet_block.2} parent=11 // pred_check_branch
        %151 = sbr.rel (%p149) target = $region20
      $region19: #{resnet_block.2} parent=11 // pred_region
        _
      $region20: #{resnet_block.2} parent=11 // pred_fallthru
        _
    $region12: #{resnet_block.2} parent=5 // pred_fallthru
      _
    %p152 = scmp.lt.s32.totalorder %s11, 2
    // Predicated region
    $region21: #{resnet_block.2} parent=5 // pred_check
      %p153 = pneg %p152
    $region22: #{resnet_block.2} parent=5 // pred_check_branch
      %155 = sbr.rel (%p153) target = $region24
    $region23: #{resnet_block.2} parent=5 // pred_region
      // Predicated region
      $region25: #{resnet_block.2} parent=23 // pred_check
        %p156 = pneg %p31
      $region26: #{resnet_block.2} parent=23 // pred_check_branch
        %158 = sbr.rel (%p156) target = $region28
      $region27: #{resnet_block.2} parent=23 // pred_region
        %p159 = scmp.lt.s32.totalorder %s11, 1
        %s160 = scalar_select %p159, %s11, 1
        %s161 = smul.addr %s160, 8
        %s162 = smul.addr %s161, 4
        %s163 = scalar_lea.vmem %s0, %s162
      $region28: #{resnet_block.2} parent=23 // pred_fallthru
        _
    $region24: #{resnet_block.2} parent=5 // pred_fallthru
      _
    %p164 = scmp.le.s32.totalorder 1, %s11
    %p165 = scmp.lt.s32.totalorder %s11, 3
    %p166 = pnand %p164, %p165
    %p167 = pneg %p166
    // Predicated region
    $region29: #{resnet_block.2} parent=5 // pred_check
      _
    $region30: #{resnet_block.2} parent=5 // pred_check_branch
      %169 = sbr.rel (%p166) target = $region32
    $region31: #{resnet_block.2} parent=5 // pred_region
      %s170 = ssub.s32 %s11, 1
      %p171 = scmp.lt.s32.totalorder %s16, 1
      %s172 = scalar_select %p171, %s16, 1
      %s173 = smul.addr %s172, 8
      %s174 = smul.addr %s173, 4
      %s175 = scalar_lea.vmem %s0, %s174
      %p176 = pneg %p37
      %p177 = pneg %p34
      %p178 = pneg %p58
      %p179 = pneg %p55
      %p180 = pneg %p79
      %p181 = pneg %p76
      %p182 = pneg %p105
      %p183 = pneg %p102
      %p184 = scmp.lt.s32.totalorder %s16, 1
      %s185 = scalar_select %p184, %s16, 1
      %s186 = smul.addr %s185, 2
      %s187 = smul.addr %s186, 4
      %s188 = scalar_lea.vmem %s3, %s187
      %p189 = pneg %p131
      %p190 = pneg %p128
      %p191 = scmp.lt.s32.totalorder %s16, 1
      %s192 = scalar_select %p191, %s16, 1
      %s193 = smul.addr %s192, 4
      %s194 = scalar_lea.vmem %s4, %s193
      %p195 = scmp.lt.s32.totalorder %s16, 1
      %s196 = scalar_select %p195, %s16, 1
      %s197 = smul.addr %s196, 8
      %s198 = smul.addr %s197, 4
      %s199 = scalar_lea.vmem %s0, %s198
      %p200 = scmp.lt.s32.totalorder %s16, 1
      %s201 = scalar_select %p200, %s16, 1
      %s202 = smul.addr %s201, 2
      %s203 = smul.addr %s202, 4
      %s204 = scalar_lea.vmem %s3, %s203
      %p205 = scmp.lt.s32.totalorder %s16, 1
      %s206 = scalar_select %p205, %s16, 1
      %s207 = smul.addr %s206, 4
      %s208 = scalar_lea.vmem %s4, %s207
      %vm210 = vcmask 139264
      %vm211 = vsmask.f32 256
      %vm212 = vmand %vm210, %vm211
      %v213 = vld [vmem:[#allocation2] sm:$0x1]
      %v214 = vsel %vm212, 0, %v213
      %215 = vst [vmem:[#allocation2] sm:$0x1] %v214
      %v216 = vld [vmem:[#allocation2 + $0xc] sm:$0x1]
      %v217 = vsel %vm212, 0, %v216
      %218 = vst [vmem:[#allocation2 + $0xc] sm:$0x1] %v217
      %v219 = vld [vmem:[#allocation2 + $0x18] sm:$0x1]
      %v220 = vsel %vm212, 0, %v219
      %221 = vst [vmem:[#allocation2 + $0x18] sm:$0x1] %v220
      %v222 = vld [vmem:[#allocation2 + $0x24] sm:$0x1]
      %v223 = vsel %vm212, 0, %v222
      %224 = vst [vmem:[#allocation2 + $0x24] sm:$0x1] %v223
      %vm225 = vsmask.f32 7938
      %vm226 = vmand %vm210, %vm225
      %v227 = vld [vmem:[#allocation2 + $0x8] sm:$0x1]
      %v228 = vsel %vm226, 0, %v227
      %229 = vst [vmem:[#allocation2 + $0x8] sm:$0x1] %v228
      %v230 = vld [vmem:[#allocation2 + $0x14] sm:$0x1]
      %v231 = vsel %vm226, 0, %v230
      %232 = vst [vmem:[#allocation2 + $0x14] sm:$0x1] %v231
      %v233 = vld [vmem:[#allocation2 + $0x20] sm:$0x1]
      %v234 = vsel %vm226, 0, %v233
      %235 = vst [vmem:[#allocation2 + $0x20] sm:$0x1] %v234
      %v236 = vld [vmem:[#allocation2 + $0x2c] sm:$0x1]
      %v237 = vsel %vm226, 0, %v236
      %238 = vst [vmem:[#allocation2 + $0x2c] sm:$0x1] %v237
      %vm239 = vcmask 3072
      %vm240 = vmand %vm239, %vm225
      %v241 = vld [vmem:[#allocation2] sm:$0xf]
      %v242 = vsel %vm240, 0, %v241
      %243 = vst [vmem:[#allocation2] sm:$0xf] %v242
      %vm244 = vcmask 3072
      %245 = vst.msk [vmem:[#allocation2 + $0x4] sm:$0xf] %vm244, 0
      %vm246 = vcmask 0
      %vm247 = vmand %vm246, %vm211
      %v248 = vld [vmem:[#allocation2 + $0x8] sm:$0x1]
      %v249 = vsel %vm247, 0, %v248
      %250 = vst [vmem:[#allocation2 + $0x8] sm:$0x1] %v249
      %v251 = vld [vmem:[#allocation2 + $0xc] sm:$0xf]
      %v252 = vsel %vm240, 0, %v251
      %253 = vst [vmem:[#allocation2 + $0xc] sm:$0xf] %v252
      %254 = vst.msk [vmem:[#allocation2 + $0x10] sm:$0xf] %vm244, 0
      %v255 = vld [vmem:[#allocation2 + $0x14] sm:$0x1]
      %v256 = vsel %vm247, 0, %v255
      %257 = vst [vmem:[#allocation2 + $0x14] sm:$0x1] %v256
      %v258 = vld [vmem:[#allocation2 + $0x18] sm:$0xf]
      %v259 = vsel %vm240, 0, %v258
      %260 = vst [vmem:[#allocation2 + $0x18] sm:$0xf] %v259
      %261 = vst.msk [vmem:[#allocation2 + $0x1c] sm:$0xf] %vm244, 0
      %v262 = vld [vmem:[#allocation2 + $0x20] sm:$0x1]
      %v263 = vsel %vm247, 0, %v262
      %264 = vst [vmem:[#allocation2 + $0x20] sm:$0x1] %v263
      %v265 = vld [vmem:[#allocation2 + $0x24] sm:$0xf]
      %v266 = vsel %vm240, 0, %v265
      %267 = vst [vmem:[#allocation2 + $0x24] sm:$0xf] %v266
      %268 = vst.msk [vmem:[#allocation2 + $0x28] sm:$0xf] %vm244, 0
      %v269 = vld [vmem:[#allocation2 + $0x2c] sm:$0x1]
      %v270 = vsel %vm247, 0, %v269
      %271 = vst [vmem:[#allocation2 + $0x2c] sm:$0x1] %v270
      %vm272 = vcmask 142472
      %vm273 = vmand %vm272, %vm225
      %v274 = vld [vmem:[#allocation2] sm:$0xf]
      %v275 = vsel %vm273, 0, %v274
      %276 = vst [vmem:[#allocation2] sm:$0xf] %v275
      %vm277 = vcmask 142472
      %278 = vst.msk [vmem:[#allocation2 + $0x4] sm:$0xf] %vm277, 0
      %vm279 = vcmask 139400
      %vm280 = vmand %vm279, %vm211
      %v281 = vld [vmem:[#allocation2 + $0x8] sm:$0x1]
      %v282 = vsel %vm280, 0, %v281
      %283 = vst [vmem:[#allocation2 + $0x8] sm:$0x1] %v282
      %v284 = vld [vmem:[#allocation2 + $0xc] sm:$0xf]
      %v285 = vsel %vm273, 0, %v284
      %286 = vst [vmem:[#allocation2 + $0xc] sm:$0xf] %v285
      %287 = vst.msk [vmem:[#allocation2 + $0x10] sm:$0xf] %vm277, 0
      %v288 = vld [vmem:[#allocation2 + $0x14] sm:$0x1]
      %v289 = vsel %vm280, 0, %v288
      %290 = vst [vmem:[#allocation2 + $0x14] sm:$0x1] %v289
      %v291 = vld [vmem:[#allocation2 + $0x18] sm:$0xf]
      %v292 = vsel %vm273, 0, %v291
      %293 = vst [vmem:[#allocation2 + $0x18] sm:$0xf] %v292
      %294 = vst.msk [vmem:[#allocation2 + $0x1c] sm:$0xf] %vm277, 0
      %v295 = vld [vmem:[#allocation2 + $0x20] sm:$0x1]
      %v296 = vsel %vm280, 0, %v295
      %297 = vst [vmem:[#allocation2 + $0x20] sm:$0x1] %v296
      %v298 = vld [vmem:[#allocation2 + $0x24] sm:$0xf]
      %v299 = vsel %vm273, 0, %v298
      %300 = vst [vmem:[#allocation2 + $0x24] sm:$0xf] %v299
      %301 = vst.msk [vmem:[#allocation2 + $0x28] sm:$0xf] %vm277, 0
      %v302 = vld [vmem:[#allocation2 + $0x2c] sm:$0x1]
      %v303 = vsel %vm280, 0, %v302
      %304 = vst [vmem:[#allocation2 + $0x2c] sm:$0x1] %v303
      %v305 = vld [vmem:[%s199] sm:$0xf]
      %v306 = vld [vmem:[%s199 + $0x4] sm:$0xf]
      %v307 = vld [vmem:[%s199 + $0x8] sm:$0xf]
      %v308 = vld [vmem:[%s199 + $0xc] sm:$0xf]
      %v309 = vld [vmem:[%s199 + $0x10] sm:$0xf]
      %v310 = vld [vmem:[%s199 + $0x14] sm:$0xf]
      %v311 = vld [vmem:[%s199 + $0x18] sm:$0xf]
      %v312 = vld [vmem:[%s199 + $0x1c] sm:$0xf]
      %vm313 = vsmask.f32 4368
      %vm314 = vmor %vm211, %vm313
      %v316 = vshrl.u32 %v305, 16
      %v318 = vrot.slane %v316, 7
      %v319 = vshll.u32 %v305, 16
      %v321 = vor.u32 %v318, %v319
      %v322 = vrot.slane %v318, 4
      %v324 = vshrl.u32 %v306, 16
      %v326 = vrot.slane %v324, 7
      %v327 = vshll.u32 %v306, 16
      %v329 = vor.u32 %v326, %v327
      %v330 = vsel %vm314, %v322, %v329
      %v331 = vrot.slane %v326, 4
      %v333 = vshrl.u32 %v307, 16
      %v335 = vrot.slane %v333, 7
      %v336 = vshll.u32 %v307, 16
      %v338 = vor.u32 %v335, %v336
      %v339 = vrot.slane %v335, 4
      %v341 = vshrl.u32 %v308, 16
      %v343 = vrot.slane %v341, 7
      %v344 = vshll.u32 %v308, 16
      %v346 = vor.u32 %v343, %v344
      %v347 = vsel %vm314, %v339, %v346
      %v348 = vrot.slane %v343, 4
      %v350 = vshrl.u32 %v309, 16
      %v352 = vrot.slane %v350, 7
      %v353 = vshll.u32 %v309, 16
      %v355 = vor.u32 %v352, %v353
      %v356 = vrot.slane %v352, 4
      %v358 = vshrl.u32 %v310, 16
      %v360 = vrot.slane %v358, 7
      %v361 = vshll.u32 %v310, 16
      %v363 = vor.u32 %v360, %v361
      %v364 = vsel %vm314, %v356, %v363
      %v365 = vrot.slane %v360, 4
      %v367 = vshrl.u32 %v311, 16
      %v369 = vrot.slane %v367, 7
      %v370 = vshll.u32 %v311, 16
      %v372 = vor.u32 %v369, %v370
      %v373 = vrot.slane %v369, 4
      %v375 = vshrl.u32 %v312, 16
      %v377 = vrot.slane %v375, 7
      %v378 = vshll.u32 %v312, 16
      %v380 = vor.u32 %v377, %v378
      %v381 = vsel %vm314, %v373, %v380
      %v382 = vrot.slane %v377, 4
      %383 = vrot.lane.b32.xlu0 %v321, 1
      %v384 = vpop.permute.xlu0 %383
      %385 = vrot.lane.b32.xlu0 %v330, 1
      %v386 = vpop.permute.xlu0 %385
      %387 = vrot.lane.b32.xlu0 %v331, 1
      %v388 = vpop.permute.xlu0 %387
      %389 = vrot.lane.b32.xlu0 %v338, 1
      %v390 = vpop.permute.xlu0 %389
      %391 = vrot.lane.b32.xlu0 %v347, 1
      %v392 = vpop.permute.xlu0 %391
      %393 = vrot.lane.b32.xlu0 %v348, 1
      %v394 = vpop.permute.xlu0 %393
      %395 = vrot.lane.b32.xlu0 %v355, 1
      %v396 = vpop.permute.xlu0 %395
      %397 = vrot.lane.b32.xlu0 %v364, 1
      %v398 = vpop.permute.xlu0 %397
      %399 = vrot.lane.b32.xlu0 %v365, 1
      %v400 = vpop.permute.xlu0 %399
      %401 = vrot.lane.b32.xlu0 %v372, 1
      %v402 = vpop.permute.xlu0 %401
      %403 = vrot.lane.b32.xlu0 %v381, 1
      %v404 = vpop.permute.xlu0 %403
      %405 = vrot.lane.b32.xlu0 %v382, 1
      %v406 = vpop.permute.xlu0 %405
      %vm419 = vcmask 134152
      %vm420 = vmand %vm419, %vm225
      %v421 = vld [vmem:[#allocation2] sm:$0xf]
      %v422 = vsel %vm420, %v384, %v421
      %423 = vst [vmem:[#allocation2] sm:$0xf] %v422
      %vm424 = vcmask 134152
      %425 = vst.msk [vmem:[#allocation2 + $0x4] sm:$0xf] %vm424, %v386
      %vm426 = vcmask 131080
      %vm427 = vmand %vm426, %vm211
      %v428 = vld [vmem:[#allocation2 + $0x8] sm:$0x1]
      %v429 = vsel %vm427, %v388, %v428
      %430 = vst [vmem:[#allocation2 + $0x8] sm:$0x1] %v429
      %v431 = vld [vmem:[#allocation2 + $0xc] sm:$0xf]
      %v432 = vsel %vm420, %v390, %v431
      %433 = vst [vmem:[#allocation2 + $0xc] sm:$0xf] %v432
      %434 = vst.msk [vmem:[#allocation2 + $0x10] sm:$0xf] %vm424, %v392
      %v435 = vld [vmem:[#allocation2 + $0x14] sm:$0x1]
      %v436 = vsel %vm427, %v394, %v435
      %437 = vst [vmem:[#allocation2 + $0x14] sm:$0x1] %v436
      %v438 = vld [vmem:[#allocation2 + $0x18] sm:$0xf]
      %v439 = vsel %vm420, %v396, %v438
      %440 = vst [vmem:[#allocation2 + $0x18] sm:$0xf] %v439
      %441 = vst.msk [vmem:[#allocation2 + $0x1c] sm:$0xf] %vm424, %v398
      %v442 = vld [vmem:[#allocation2 + $0x20] sm:$0x1]
      %v443 = vsel %vm427, %v400, %v442
      %444 = vst [vmem:[#allocation2 + $0x20] sm:$0x1] %v443
      %v445 = vld [vmem:[#allocation2 + $0x24] sm:$0xf]
      %v446 = vsel %vm420, %v402, %v445
      %447 = vst [vmem:[#allocation2 + $0x24] sm:$0xf] %v446
      %448 = vst.msk [vmem:[#allocation2 + $0x28] sm:$0xf] %vm424, %v404
      %v449 = vld [vmem:[#allocation2 + $0x2c] sm:$0x1]
      %v450 = vsel %vm427, %v406, %v449
      %451 = vst [vmem:[#allocation2 + $0x2c] sm:$0x1] %v450
      %v452 = vld [vmem:[#allocation2] sm:$0xf]
      %v453 = vld [vmem:[#allocation2 + $0x4] sm:$0xf]
      %v454 = vld [vmem:[#allocation2 + $0xc] sm:$0xf]
      %v455 = vld [vmem:[#allocation2 + $0x10] sm:$0xf]
      %v456 = vld [vmem:[#allocation2 + $0x18] sm:$0xf]
      %v457 = vld [vmem:[#allocation2 + $0x1c] sm:$0xf]
      %v458 = vld [vmem:[#allocation2 + $0x24] sm:$0xf]
      %v459 = vld [vmem:[#allocation2 + $0x28] sm:$0xf]
      %v462 = vpack.i.b16 %v454, %v452
      %v463 = vshrl.u32 %v452, 16
      %v464 = vshrl.u32 %v454, 16
      %v465 = vpack.i.b16 %v464, %v463
      %v468 = vpack.i.b16 %v458, %v456
      %v469 = vshrl.u32 %v456, 16
      %v470 = vshrl.u32 %v458, 16
      %v471 = vpack.i.b16 %v470, %v469
      %v474 = vpack.i.b16 %v455, %v453
      %v475 = vshrl.u32 %v453, 16
      %v476 = vshrl.u32 %v455, 16
      %v477 = vpack.i.b16 %v476, %v475
      %v480 = vpack.i.b16 %v459, %v457
      %v481 = vshrl.u32 %v457, 16
      %v482 = vshrl.u32 %v459, 16
      %v483 = vpack.i.b16 %v482, %v481
      %v486 = vunpack.c.l.s4 1983009808
      %v487 = vunpack.c.0.s8 %v486
      %v488 = vperm.slane %v462, %v487
      %v491 = vunpack.c.l.s4 1983009808
      %v492 = vunpack.c.0.s8 %v491
      %v493 = vperm.slane %v468, %v492
      %v494 = vrot.slane %v493, 4
      %vm495 = vcmask 1047556
      %v496 = vsel %vm495, %v494, %v488
      %v497 = vrot.slane %v488, 4
      %v498 = vsel %vm495, %v493, %v497
      %v500 = vunpack.c.l.s4 1934713408
      %v501 = vunpack.c.0.s8 %v500
      %v502 = vperm.slane %v496, %v501
      %v504 = vunpack.c.l.s4 1934713408
      %v505 = vunpack.c.0.s8 %v504
      %v506 = vperm.slane %v498, %v505
      %v507 = vrot.slane %v502, 4
      %v508 = vsel %vm495, 0, %v507
      %v509 = vrot.slane %v506, 4
      %v510 = vsel %vm495, 0, %v509
      %v513 = vunpack.c.l.s4 1983009808
      %v514 = vunpack.c.0.s8 %v513
      %v515 = vperm.slane %v465, %v514
      %v518 = vunpack.c.l.s4 1983009808
      %v519 = vunpack.c.0.s8 %v518
      %v520 = vperm.slane %v471, %v519
      %v521 = vrot.slane %v520, 4
      %v522 = vsel %vm495, %v521, %v515
      %v523 = vrot.slane %v515, 4
      %v524 = vsel %vm495, %v520, %v523
      %v526 = vunpack.c.l.s4 1934713408
      %v527 = vunpack.c.0.s8 %v526
      %v528 = vperm.slane %v522, %v527
      %v530 = vunpack.c.l.s4 1934713408
      %v531 = vunpack.c.0.s8 %v530
      %v532 = vperm.slane %v524, %v531
      %v533 = vrot.slane %v528, 4
      %v534 = vsel %vm495, 0, %v533
      %v535 = vrot.slane %v532, 4
      %v536 = vsel %vm495, 0, %v535
      %v539 = vunpack.c.l.s4 1983009808
      %v540 = vunpack.c.0.s8 %v539
      %v541 = vperm.slane %v474, %v540
      %v544 = vunpack.c.l.s4 1983009808
      %v545 = vunpack.c.0.s8 %v544
      %v546 = vperm.slane %v480, %v545
      %v547 = vrot.slane %v546, 4
      %v548 = vsel %vm495, %v547, %v541
      %v549 = vrot.slane %v541, 4
      %v550 = vsel %vm495, %v546, %v549
      %v552 = vunpack.c.l.s4 1934713408
      %v553 = vunpack.c.0.s8 %v552
      %v554 = vperm.slane %v548, %v553
      %v556 = vunpack.c.l.s4 1934713408
      %v557 = vunpack.c.0.s8 %v556
      %v558 = vperm.slane %v550, %v557
      %v559 = vrot.slane %v554, 4
      %v560 = vsel %vm495, 0, %v559
      %v561 = vrot.slane %v558, 4
      %v562 = vsel %vm495, 0, %v561
      %v565 = vunpack.c.l.s4 1983009808
      %v566 = vunpack.c.0.s8 %v565
      %v567 = vperm.slane %v477, %v566
      %v570 = vunpack.c.l.s4 1983009808
      %v571 = vunpack.c.0.s8 %v570
      %v572 = vperm.slane %v483, %v571
      %v573 = vrot.slane %v572, 4
      %v574 = vsel %vm495, %v573, %v567
      %v575 = vrot.slane %v567, 4
      %v576 = vsel %vm495, %v572, %v575
      %v578 = vunpack.c.l.s4 1934713408
      %v579 = vunpack.c.0.s8 %v578
      %v580 = vperm.slane %v574, %v579
      %v582 = vunpack.c.l.s4 1934713408
      %v583 = vunpack.c.0.s8 %v582
      %v584 = vperm.slane %v576, %v583
      %v585 = vrot.slane %v580, 4
      %v586 = vsel %vm495, 0, %v585
      %v587 = vrot.slane %v584, 4
      %v588 = vsel %vm495, 0, %v587
      %v590 = vunpack.c.l.b16 %v528
      %v591 = vpack.c.b16 %v590, %v590
      %592 = vrot.lane.b32.xlu0 %v591, 16
      %v593 = vpop.permute.xlu0 %592
      %v595 = vunpack.c.l.b16 %v508
      %v596 = vpack.c.b16 %v595, %v595
      %597 = vrot.lane.b32.xlu0 %v596, 32
      %v598 = vpop.permute.xlu0 %597
      %v600 = vunpack.c.l.b16 %v534
      %v601 = vpack.c.b16 %v600, %v600
      %602 = vrot.lane.b32.xlu0 %v601, 48
      %v603 = vpop.permute.xlu0 %602
      %v605 = vunpack.c.l.b16 %v506
      %v606 = vpack.c.b16 %v605, %v605
      %607 = vrot.lane.b32.xlu0 %v606, 64
      %v608 = vpop.permute.xlu0 %607
      %v610 = vunpack.c.l.b16 %v532
      %v611 = vpack.c.b16 %v610, %v610
      %612 = vrot.lane.b32.xlu0 %v611, 80
      %v613 = vpop.permute.xlu0 %612
      %v615 = vunpack.c.l.b16 %v510
      %v616 = vpack.c.b16 %v615, %v615
      %617 = vrot.lane.b32.xlu0 %v616, 96
      %v618 = vpop.permute.xlu0 %617
      %v620 = vunpack.c.l.b16 %v536
      %v621 = vpack.c.b16 %v620, %v620
      %622 = vrot.lane.b32.xlu0 %v621, 112
      %v623 = vpop.permute.xlu0 %622
      %v625 = vunpack.c.l.b16 %v580
      %v626 = vpack.c.b16 %v625, %v625
      %627 = vrot.lane.b32.xlu0 %v626, 16
      %v628 = vpop.permute.xlu0 %627
      %v630 = vunpack.c.l.b16 %v560
      %v631 = vpack.c.b16 %v630, %v630
      %632 = vrot.lane.b32.xlu0 %v631, 32
      %v633 = vpop.permute.xlu0 %632
      %v635 = vunpack.c.l.b16 %v586
      %v636 = vpack.c.b16 %v635, %v635
      %637 = vrot.lane.b32.xlu0 %v636, 48
      %v638 = vpop.permute.xlu0 %637
      %v640 = vunpack.c.l.b16 %v558
      %v641 = vpack.c.b16 %v640, %v640
      %642 = vrot.lane.b32.xlu0 %v641, 64
      %v643 = vpop.permute.xlu0 %642
      %v645 = vunpack.c.l.b16 %v584
      %v646 = vpack.c.b16 %v645, %v645
      %647 = vrot.lane.b32.xlu0 %v646, 80
      %v648 = vpop.permute.xlu0 %647
      %v650 = vunpack.c.l.b16 %v562
      %v651 = vpack.c.b16 %v650, %v650
      %652 = vrot.lane.b32.xlu0 %v651, 96
      %v653 = vpop.permute.xlu0 %652
      %v655 = vunpack.c.l.b16 %v588
      %v656 = vpack.c.b16 %v655, %v655
      %657 = vrot.lane.b32.xlu0 %v656, 112
      %v658 = vpop.permute.xlu0 %657
      %vm659 = vcmask 130048
      %v662 = vsel %vm659, %v502, %v593
      %vm663 = vcmask 261120
      %v665 = vsel %vm663, %v662, %v598
      %vm666 = vcmask 392192
      %v668 = vsel %vm666, %v665, %v603
      %vm669 = vcmask 523264
      %v671 = vsel %vm669, %v668, %v608
      %vm672 = vcmask 654336
      %v674 = vsel %vm672, %v671, %v613
      %vm675 = vcmask 785408
      %v677 = vsel %vm675, %v674, %v618
      %vm678 = vcmask 916480
      %v680 = vsel %vm678, %v677, %v623
      %v683 = vsel %vm659, %v554, %v628
      %v685 = vsel %vm663, %v683, %v633
      %v687 = vsel %vm666, %v685, %v638
      %v689 = vsel %vm669, %v687, %v643
      %v691 = vsel %vm672, %v689, %v648
      %v693 = vsel %vm675, %v691, %v653
      %v695 = vsel %vm678, %v693, %v658
      %v698 = vunpack.c.l.b16 %v680
      %v699 = vunpack.c.l.b16 %v695
      %v700 = vpack.c.b16 %v699, %v698
      %702 = vst [vmem:[#allocation3] sm:$0x33] %v700
      %v703 = vld [vmem:[#allocation2] sm:$0xf]
      %v704 = vld [vmem:[#allocation2 + $0x4] sm:$0xf]
      %v705 = vld [vmem:[#allocation2 + $0xc] sm:$0xf]
      %v706 = vld [vmem:[#allocation2 + $0x10] sm:$0xf]
      %v707 = vld [vmem:[#allocation2 + $0x18] sm:$0xf]
      %v708 = vld [vmem:[#allocation2 + $0x1c] sm:$0xf]
      %v709 = vld [vmem:[#allocation2 + $0x24] sm:$0xf]
      %v710 = vld [vmem:[#allocation2 + $0x28] sm:$0xf]
      %719 = vrot.lane.b32.xlu0 %v703, 127
      %v720 = vpop.permute.xlu0 %719
      %721 = vrot.lane.b32.xlu0 %v704, 127
      %v722 = vpop.permute.xlu0 %721
      %723 = vrot.lane.b32.xlu0 %v705, 127
      %v724 = vpop.permute.xlu0 %723
      %725 = vrot.lane.b32.xlu0 %v706, 127
      %v726 = vpop.permute.xlu0 %725
      %727 = vrot.lane.b32.xlu0 %v707, 127
      %v728 = vpop.permute.xlu0 %727
      %729 = vrot.lane.b32.xlu0 %v708, 127
      %v730 = vpop.permute.xlu0 %729
      %731 = vrot.lane.b32.xlu0 %v709, 127
      %v732 = vpop.permute.xlu0 %731
      %733 = vrot.lane.b32.xlu0 %v710, 127
      %v734 = vpop.permute.xlu0 %733
      %v737 = vpack.i.b16 %v724, %v720
      %v738 = vshrl.u32 %v720, 16
      %v739 = vshrl.u32 %v724, 16
      %v740 = vpack.i.b16 %v739, %v738
      %v743 = vpack.i.b16 %v732, %v728
      %v744 = vshrl.u32 %v728, 16
      %v745 = vshrl.u32 %v732, 16
      %v746 = vpack.i.b16 %v745, %v744
      %v749 = vpack.i.b16 %v726, %v722
      %v750 = vshrl.u32 %v722, 16
      %v751 = vshrl.u32 %v726, 16
      %v752 = vpack.i.b16 %v751, %v750
      %v755 = vpack.i.b16 %v734, %v730
      %v756 = vshrl.u32 %v730, 16
      %v757 = vshrl.u32 %v734, 16
      %v758 = vpack.i.b16 %v757, %v756
      %v761 = vunpack.c.l.s4 1983009808
      %v762 = vunpack.c.0.s8 %v761
      %v763 = vperm.slane %v737, %v762
      %v766 = vunpack.c.l.s4 1983009808
      %v767 = vunpack.c.0.s8 %v766
      %v768 = vperm.slane %v743, %v767
      %v769 = vrot.slane %v768, 4
      %v770 = vsel %vm495, %v769, %v763
      %v771 = vrot.slane %v763, 4
      %v772 = vsel %vm495, %v768, %v771
      %v774 = vunpack.c.l.s4 1934713408
      %v775 = vunpack.c.0.s8 %v774
      %v776 = vperm.slane %v770, %v775
      %v778 = vunpack.c.l.s4 1934713408
      %v779 = vunpack.c.0.s8 %v778
      %v780 = vperm.slane %v772, %v779
      %v781 = vrot.slane %v776, 4
      %v782 = vsel %vm495, 0, %v781
      %v783 = vrot.slane %v780, 4
      %v784 = vsel %vm495, 0, %v783
      %v787 = vunpack.c.l.s4 1983009808
      %v788 = vunpack.c.0.s8 %v787
      %v789 = vperm.slane %v740, %v788
      %v792 = vunpack.c.l.s4 1983009808
      %v793 = vunpack.c.0.s8 %v792
      %v794 = vperm.slane %v746, %v793
      %v795 = vrot.slane %v794, 4
      %v796 = vsel %vm495, %v795, %v789
      %v797 = vrot.slane %v789, 4
      %v798 = vsel %vm495, %v794, %v797
      %v800 = vunpack.c.l.s4 1934713408
      %v801 = vunpack.c.0.s8 %v800
      %v802 = vperm.slane %v796, %v801
      %v804 = vunpack.c.l.s4 1934713408
      %v805 = vunpack.c.0.s8 %v804
      %v806 = vperm.slane %v798, %v805
      %v807 = vrot.slane %v802, 4
      %v808 = vsel %vm495, 0, %v807
      %v809 = vrot.slane %v806, 4
      %v810 = vsel %vm495, 0, %v809
      %v813 = vunpack.c.l.s4 1983009808
      %v814 = vunpack.c.0.s8 %v813
      %v815 = vperm.slane %v749, %v814
      %v818 = vunpack.c.l.s4 1983009808
      %v819 = vunpack.c.0.s8 %v818
      %v820 = vperm.slane %v755, %v819
      %v821 = vrot.slane %v820, 4
      %v822 = vsel %vm495, %v821, %v815
      %v823 = vrot.slane %v815, 4
      %v824 = vsel %vm495, %v820, %v823
      %v826 = vunpack.c.l.s4 1934713408
      %v827 = vunpack.c.0.s8 %v826
      %v828 = vperm.slane %v822, %v827
      %v830 = vunpack.c.l.s4 1934713408
      %v831 = vunpack.c.0.s8 %v830
      %v832 = vperm.slane %v824, %v831
      %v833 = vrot.slane %v828, 4
      %v834 = vsel %vm495, 0, %v833
      %v835 = vrot.slane %v832, 4
      %v836 = vsel %vm495, 0, %v835
      %v839 = vunpack.c.l.s4 1983009808
      %v840 = vunpack.c.0.s8 %v839
      %v841 = vperm.slane %v752, %v840
      %v844 = vunpack.c.l.s4 1983009808
      %v845 = vunpack.c.0.s8 %v844
      %v846 = vperm.slane %v758, %v845
      %v847 = vrot.slane %v846, 4
      %v848 = vsel %vm495, %v847, %v841
      %v849 = vrot.slane %v841, 4
      %v850 = vsel %vm495, %v846, %v849
      %v852 = vunpack.c.l.s4 1934713408
      %v853 = vunpack.c.0.s8 %v852
      %v854 = vperm.slane %v848, %v853
      %v856 = vunpack.c.l.s4 1934713408
      %v857 = vunpack.c.0.s8 %v856
      %v858 = vperm.slane %v850, %v857
      %v859 = vrot.slane %v854, 4
      %v860 = vsel %vm495, 0, %v859
      %v861 = vrot.slane %v858, 4
      %v862 = vsel %vm495, 0, %v861
      %v864 = vunpack.c.l.b16 %v802
      %v865 = vpack.c.b16 %v864, %v864
      %866 = vrot.lane.b32.xlu0 %v865, 16
      %v867 = vpop.permute.xlu0 %866
      %v869 = vunpack.c.l.b16 %v782
      %v870 = vpack.c.b16 %v869, %v869
      %871 = vrot.lane.b32.xlu0 %v870, 32
      %v872 = vpop.permute.xlu0 %871
      %v874 = vunpack.c.l.b16 %v808
      %v875 = vpack.c.b16 %v874, %v874
      %876 = vrot.lane.b32.xlu0 %v875, 48
      %v877 = vpop.permute.xlu0 %876
      %v879 = vunpack.c.l.b16 %v780
      %v880 = vpack.c.b16 %v879, %v879
      %881 = vrot.lane.b32.xlu0 %v880, 64
      %v882 = vpop.permute.xlu0 %881
      %v884 = vunpack.c.l.b16 %v806
      %v885 = vpack.c.b16 %v884, %v884
      %886 = vrot.lane.b32.xlu0 %v885, 80
      %v887 = vpop.permute.xlu0 %886
      %v889 = vunpack.c.l.b16 %v784
      %v890 = vpack.c.b16 %v889, %v889
      %891 = vrot.lane.b32.xlu0 %v890, 96
      %v892 = vpop.permute.xlu0 %891
      %v894 = vunpack.c.l.b16 %v810
      %v895 = vpack.c.b16 %v894, %v894
      %896 = vrot.lane.b32.xlu0 %v895, 112
      %v897 = vpop.permute.xlu0 %896
      %v899 = vunpack.c.l.b16 %v854
      %v900 = vpack.c.b16 %v899, %v899
      %901 = vrot.lane.b32.xlu0 %v900, 16
      %v902 = vpop.permute.xlu0 %901
      %v904 = vunpack.c.l.b16 %v834
      %v905 = vpack.c.b16 %v904, %v904
      %906 = vrot.lane.b32.xlu0 %v905, 32
      %v907 = vpop.permute.xlu0 %906
      %v909 = vunpack.c.l.b16 %v860
      %v910 = vpack.c.b16 %v909, %v909
      %911 = vrot.lane.b32.xlu0 %v910, 48
      %v912 = vpop.permute.xlu0 %911
      %v914 = vunpack.c.l.b16 %v832
      %v915 = vpack.c.b16 %v914, %v914
      %916 = vrot.lane.b32.xlu0 %v915, 64
      %v917 = vpop.permute.xlu0 %916
      %v919 = vunpack.c.l.b16 %v858
      %v920 = vpack.c.b16 %v919, %v919
      %921 = vrot.lane.b32.xlu0 %v920, 80
      %v922 = vpop.permute.xlu0 %921
      %v924 = vunpack.c.l.b16 %v836
      %v925 = vpack.c.b16 %v924, %v924
      %926 = vrot.lane.b32.xlu0 %v925, 96
      %v927 = vpop.permute.xlu0 %926
      %v929 = vunpack.c.l.b16 %v862
      %v930 = vpack.c.b16 %v929, %v929
      %931 = vrot.lane.b32.xlu0 %v930, 112
      %v932 = vpop.permute.xlu0 %931
      %v935 = vsel %vm659, %v776, %v867
      %v937 = vsel %vm663, %v935, %v872
      %v939 = vsel %vm666, %v937, %v877
      %v941 = vsel %vm669, %v939, %v882
      %v943 = vsel %vm672, %v941, %v887
      %v945 = vsel %vm675, %v943, %v892
      %v947 = vsel %vm678, %v945, %v897
      %v950 = vsel %vm659, %v828, %v902
      %v952 = vsel %vm663, %v950, %v907
      %v954 = vsel %vm666, %v952, %v912
      %v956 = vsel %vm669, %v954, %v917
      %v958 = vsel %vm672, %v956, %v922
      %v960 = vsel %vm675, %v958, %v927
      %v962 = vsel %vm678, %v960, %v932
      %v965 = vunpack.c.l.b16 %v947
      %v966 = vunpack.c.l.b16 %v962
      %v967 = vpack.c.b16 %v966, %v965
      %v968 = vrot.slane %v967, 6
      %970 = vst [vmem:[#allocation3] sm:$0xcc] %v968
      %v971 = vld [vmem:[#allocation2] sm:$0xf]
      %v972 = vld [vmem:[#allocation2 + $0x4] sm:$0xf]
      %v973 = vld [vmem:[#allocation2 + $0xc] sm:$0xf]
      %v974 = vld [vmem:[#allocation2 + $0x10] sm:$0xf]
      %v975 = vld [vmem:[#allocation2 + $0x18] sm:$0xf]
      %v976 = vld [vmem:[#allocation2 + $0x1c] sm:$0xf]
      %v977 = vld [vmem:[#allocation2 + $0x24] sm:$0xf]
      %v978 = vld [vmem:[#allocation2 + $0x28] sm:$0xf]
      %987 = vrot.lane.b32.xlu0 %v971, 126
      %v988 = vpop.permute.xlu0 %987
      %989 = vrot.lane.b32.xlu0 %v972, 126
      %v990 = vpop.permute.xlu0 %989
      %991 = vrot.lane.b32.xlu0 %v973, 126
      %v992 = vpop.permute.xlu0 %991
      %993 = vrot.lane.b32.xlu0 %v974, 126
      %v994 = vpop.permute.xlu0 %993
      %995 = vrot.lane.b32.xlu0 %v975, 126
      %v996 = vpop.permute.xlu0 %995
      %997 = vrot.lane.b32.xlu0 %v976, 126
      %v998 = vpop.permute.xlu0 %997
      %999 = vrot.lane.b32.xlu0 %v977, 126
      %v1000 = vpop.permute.xlu0 %999
      %1001 = vrot.lane.b32.xlu0 %v978, 126
      %v1002 = vpop.permute.xlu0 %1001
      %v1005 = vpack.i.b16 %v992, %v988
      %v1006 = vshrl.u32 %v988, 16
      %v1007 = vshrl.u32 %v992, 16
      %v1008 = vpack.i.b16 %v1007, %v1006
      %v1011 = vpack.i.b16 %v1000, %v996
      %v1012 = vshrl.u32 %v996, 16
      %v1013 = vshrl.u32 %v1000, 16
      %v1014 = vpack.i.b16 %v1013, %v1012
      %v1017 = vpack.i.b16 %v994, %v990
      %v1018 = vshrl.u32 %v990, 16
      %v1019 = vshrl.u32 %v994, 16
      %v1020 = vpack.i.b16 %v1019, %v1018
      %v1023 = vpack.i.b16 %v1002, %v998
      %v1024 = vshrl.u32 %v998, 16
      %v1025 = vshrl.u32 %v1002, 16
      %v1026 = vpack.i.b16 %v1025, %v1024
      %v1029 = vunpack.c.l.s4 1983009808
      %v1030 = vunpack.c.0.s8 %v1029
      %v1031 = vperm.slane %v1005, %v1030
      %v1034 = vunpack.c.l.s4 1983009808
      %v1035 = vunpack.c.0.s8 %v1034
      %v1036 = vperm.slane %v1011, %v1035
      %v1037 = vrot.slane %v1036, 4
      %v1038 = vsel %vm495, %v1037, %v1031
      %v1039 = vrot.slane %v1031, 4
      %v1040 = vsel %vm495, %v1036, %v1039
      %v1042 = vunpack.c.l.s4 1934713408
      %v1043 = vunpack.c.0.s8 %v1042
      %v1044 = vperm.slane %v1038, %v1043
      %v1046 = vunpack.c.l.s4 1934713408
      %v1047 = vunpack.c.0.s8 %v1046
      %v1048 = vperm.slane %v1040, %v1047
      %v1049 = vrot.slane %v1044, 4
      %v1050 = vsel %vm495, 0, %v1049
      %v1051 = vrot.slane %v1048, 4
      %v1052 = vsel %vm495, 0, %v1051
      %v1055 = vunpack.c.l.s4 1983009808
      %v1056 = vunpack.c.0.s8 %v1055
      %v1057 = vperm.slane %v1008, %v1056
      %v1060 = vunpack.c.l.s4 1983009808
      %v1061 = vunpack.c.0.s8 %v1060
      %v1062 = vperm.slane %v1014, %v1061
      %v1063 = vrot.slane %v1062, 4
      %v1064 = vsel %vm495, %v1063, %v1057
      %v1065 = vrot.slane %v1057, 4
      %v1066 = vsel %vm495, %v1062, %v1065
      %v1068 = vunpack.c.l.s4 1934713408
      %v1069 = vunpack.c.0.s8 %v1068
      %v1070 = vperm.slane %v1064, %v1069
      %v1072 = vunpack.c.l.s4 1934713408
      %v1073 = vunpack.c.0.s8 %v1072
      %v1074 = vperm.slane %v1066, %v1073
      %v1075 = vrot.slane %v1070, 4
      %v1076 = vsel %vm495, 0, %v1075
      %v1077 = vrot.slane %v1074, 4
      %v1078 = vsel %vm495, 0, %v1077
      %v1081 = vunpack.c.l.s4 1983009808
      %v1082 = vunpack.c.0.s8 %v1081
      %v1083 = vperm.slane %v1017, %v1082
      %v1086 = vunpack.c.l.s4 1983009808
      %v1087 = vunpack.c.0.s8 %v1086
      %v1088 = vperm.slane %v1023, %v1087
      %v1089 = vrot.slane %v1088, 4
      %v1090 = vsel %vm495, %v1089, %v1083
      %v1091 = vrot.slane %v1083, 4
      %v1092 = vsel %vm495, %v1088, %v1091
      %v1094 = vunpack.c.l.s4 1934713408
      %v1095 = vunpack.c.0.s8 %v1094
      %v1096 = vperm.slane %v1090, %v1095
      %v1098 = vunpack.c.l.s4 1934713408
      %v1099 = vunpack.c.0.s8 %v1098
      %v1100 = vperm.slane %v1092, %v1099
      %v1101 = vrot.slane %v1096, 4
      %v1102 = vsel %vm495, 0, %v1101
      %v1103 = vrot.slane %v1100, 4
      %v1104 = vsel %vm495, 0, %v1103
      %v1107 = vunpack.c.l.s4 1983009808
      %v1108 = vunpack.c.0.s8 %v1107
      %v1109 = vperm.slane %v1020, %v1108
      %v1112 = vunpack.c.l.s4 1983009808
      %v1113 = vunpack.c.0.s8 %v1112
      %v1114 = vperm.slane %v1026, %v1113
      %v1115 = vrot.slane %v1114, 4
      %v1116 = vsel %vm495, %v1115, %v1109
      %v1117 = vrot.slane %v1109, 4
      %v1118 = vsel %vm495, %v1114, %v1117
      %v1120 = vunpack.c.l.s4 1934713408
      %v1121 = vunpack.c.0.s8 %v1120
      %v1122 = vperm.slane %v1116, %v1121
      %v1124 = vunpack.c.l.s4 1934713408
      %v1125 = vunpack.c.0.s8 %v1124
      %v1126 = vperm.slane %v1118, %v1125
      %v1127 = vrot.slane %v1122, 4
      %v1128 = vsel %vm495, 0, %v1127
      %v1129 = vrot.slane %v1126, 4
      %v1130 = vsel %vm495, 0, %v1129
      %v1132 = vunpack.c.l.b16 %v1070
      %v1133 = vpack.c.b16 %v1132, %v1132
      %1134 = vrot.lane.b32.xlu0 %v1133, 16
      %v1135 = vpop.permute.xlu0 %1134
      %v1137 = vunpack.c.l.b16 %v1050
      %v1138 = vpack.c.b16 %v1137, %v1137
      %1139 = vrot.lane.b32.xlu0 %v1138, 32
      %v1140 = vpop.permute.xlu0 %1139
      %v1142 = vunpack.c.l.b16 %v1076
      %v1143 = vpack.c.b16 %v1142, %v1142
      %1144 = vrot.lane.b32.xlu0 %v1143, 48
      %v1145 = vpop.permute.xlu0 %1144
      %v1147 = vunpack.c.l.b16 %v1048
      %v1148 = vpack.c.b16 %v1147, %v1147
      %1149 = vrot.lane.b32.xlu0 %v1148, 64
      %v1150 = vpop.permute.xlu0 %1149
      %v1152 = vunpack.c.l.b16 %v1074
      %v1153 = vpack.c.b16 %v1152, %v1152
      %1154 = vrot.lane.b32.xlu0 %v1153, 80
      %v1155 = vpop.permute.xlu0 %1154
      %v1157 = vunpack.c.l.b16 %v1052
      %v1158 = vpack.c.b16 %v1157, %v1157
      %1159 = vrot.lane.b32.xlu0 %v1158, 96
      %v1160 = vpop.permute.xlu0 %1159
      %v1162 = vunpack.c.l.b16 %v1078
      %v1163 = vpack.c.b16 %v1162, %v1162
      %1164 = vrot.lane.b32.xlu0 %v1163, 112
      %v1165 = vpop.permute.xlu0 %1164
      %v1167 = vunpack.c.l.b16 %v1122
      %v1168 = vpack.c.b16 %v1167, %v1167
      %1169 = vrot.lane.b32.xlu0 %v1168, 16
      %v1170 = vpop.permute.xlu0 %1169
      %v1172 = vunpack.c.l.b16 %v1102
      %v1173 = vpack.c.b16 %v1172, %v1172
      %1174 = vrot.lane.b32.xlu0 %v1173, 32
      %v1175 = vpop.permute.xlu0 %1174
      %v1177 = vunpack.c.l.b16 %v1128
      %v1178 = vpack.c.b16 %v1177, %v1177
      %1179 = vrot.lane.b32.xlu0 %v1178, 48
      %v1180 = vpop.permute.xlu0 %1179
      %v1182 = vunpack.c.l.b16 %v1100
      %v1183 = vpack.c.b16 %v1182, %v1182
      %1184 = vrot.lane.b32.xlu0 %v1183, 64
      %v1185 = vpop.permute.xlu0 %1184
      %v1187 = vunpack.c.l.b16 %v1126
      %v1188 = vpack.c.b16 %v1187, %v1187
      %1189 = vrot.lane.b32.xlu0 %v1188, 80
      %v1190 = vpop.permute.xlu0 %1189
      %v1192 = vunpack.c.l.b16 %v1104
      %v1193 = vpack.c.b16 %v1192, %v1192
      %1194 = vrot.lane.b32.xlu0 %v1193, 96
      %v1195 = vpop.permute.xlu0 %1194
      %v1197 = vunpack.c.l.b16 %v1130
      %v1198 = vpack.c.b16 %v1197, %v1197
      %1199 = vrot.lane.b32.xlu0 %v1198, 112
      %v1200 = vpop.permute.xlu0 %1199
      %v1203 = vsel %vm659, %v1044, %v1135
      %v1205 = vsel %vm663, %v1203, %v1140
      %v1207 = vsel %vm666, %v1205, %v1145
      %v1209 = vsel %vm669, %v1207, %v1150
      %v1211 = vsel %vm672, %v1209, %v1155
      %v1213 = vsel %vm675, %v1211, %v1160
      %v1215 = vsel %vm678, %v1213, %v1165
      %v1218 = vsel %vm659, %v1096, %v1170
      %v1220 = vsel %vm663, %v1218, %v1175
      %v1222 = vsel %vm666, %v1220, %v1180
      %v1224 = vsel %vm669, %v1222, %v1185
      %v1226 = vsel %vm672, %v1224, %v1190
      %v1228 = vsel %vm675, %v1226, %v1195
      %v1230 = vsel %vm678, %v1228, %v1200
      %v1233 = vunpack.c.l.b16 %v1215
      %v1234 = vunpack.c.l.b16 %v1230
      %v1235 = vpack.c.b16 %v1234, %v1233
      %1237 = vst [vmem:[#allocation3 + $0x8] sm:$0x33] %v1235
      %v1238 = vld [vmem:[#allocation2] sm:$0xf]
      %v1239 = vld [vmem:[#allocation2 + $0x4] sm:$0xf]
      %v1240 = vld [vmem:[#allocation2 + $0x8] sm:$0x1]
      %v1241 = vld [vmem:[#allocation2 + $0xc] sm:$0xf]
      %v1242 = vld [vmem:[#allocation2 + $0x10] sm:$0xf]
      %v1243 = vld [vmem:[#allocation2 + $0x14] sm:$0x1]
      %v1244 = vld [vmem:[#allocation2 + $0x18] sm:$0xf]
      %v1245 = vld [vmem:[#allocation2 + $0x1c] sm:$0xf]
      %v1246 = vld [vmem:[#allocation2 + $0x20] sm:$0x1]
      %v1247 = vld [vmem:[#allocation2 + $0x24] sm:$0xf]
      %v1248 = vld [vmem:[#allocation2 + $0x28] sm:$0xf]
      %v1249 = vld [vmem:[#allocation2 + $0x2c] sm:$0x1]
      %vm1250 = vsmask.f32 3328
      %vm1251 = vsmask.f32 7440
      %vm1252 = vmor %vm1250, %vm1251
      %v1254 = vshrl.u32 %v1238, 16
      %v1256 = vrot.slane %v1254, 4
      %v1257 = vshll.u32 %v1238, 16
      %v1259 = vrot.slane %v1257, 5
      %v1260 = vor.u32 %v1256, %v1259
      %v1261 = vrot.slane %v1260, 4
      %v1263 = vshll.u32 %v1239, 16
      %v1265 = vrot.slane %v1263, 5
      %v1266 = vsel %vm1252, %v1261, %v1265
      %v1267 = vshrl.u32 %v1239, 16
      %v1269 = vrot.slane %v1267, 4
      %v1270 = vor.u32 %v1269, %v1265
      %v1271 = vrot.slane %v1270, 4
      %v1273 = vshll.u32 %v1240, 16
      %v1275 = vrot.slane %v1273, 5
      %v1276 = vsel %vm1252, %v1271, %v1275
      %v1278 = vshrl.u32 %v1241, 16
      %v1280 = vrot.slane %v1278, 4
      %v1281 = vshll.u32 %v1241, 16
      %v1283 = vrot.slane %v1281, 5
      %v1284 = vor.u32 %v1280, %v1283
      %v1285 = vrot.slane %v1284, 4
      %v1287 = vshll.u32 %v1242, 16
      %v1289 = vrot.slane %v1287, 5
      %v1290 = vsel %vm1252, %v1285, %v1289
      %v1291 = vshrl.u32 %v1242, 16
      %v1293 = vrot.slane %v1291, 4
      %v1294 = vor.u32 %v1293, %v1289
      %v1295 = vrot.slane %v1294, 4
      %v1297 = vshll.u32 %v1243, 16
      %v1299 = vrot.slane %v1297, 5
      %v1300 = vsel %vm1252, %v1295, %v1299
      %v1302 = vshrl.u32 %v1244, 16
      %v1304 = vrot.slane %v1302, 4
      %v1305 = vshll.u32 %v1244, 16
      %v1307 = vrot.slane %v1305, 5
      %v1308 = vor.u32 %v1304, %v1307
      %v1309 = vrot.slane %v1308, 4
      %v1311 = vshll.u32 %v1245, 16
      %v1313 = vrot.slane %v1311, 5
      %v1314 = vsel %vm1252, %v1309, %v1313
      %v1315 = vshrl.u32 %v1245, 16
      %v1317 = vrot.slane %v1315, 4
      %v1318 = vor.u32 %v1317, %v1313
      %v1319 = vrot.slane %v1318, 4
      %v1321 = vshll.u32 %v1246, 16
      %v1323 = vrot.slane %v1321, 5
      %v1324 = vsel %vm1252, %v1319, %v1323
      %v1326 = vshrl.u32 %v1247, 16
      %v1328 = vrot.slane %v1326, 4
      %v1329 = vshll.u32 %v1247, 16
      %v1331 = vrot.slane %v1329, 5
      %v1332 = vor.u32 %v1328, %v1331
      %v1333 = vrot.slane %v1332, 4
      %v1335 = vshll.u32 %v1248, 16
      %v1337 = vrot.slane %v1335, 5
      %v1338 = vsel %vm1252, %v1333, %v1337
      %v1339 = vshrl.u32 %v1248, 16
      %v1341 = vrot.slane %v1339, 4
      %v1342 = vor.u32 %v1341, %v1337
      %v1343 = vrot.slane %v1342, 4
      %v1345 = vshll.u32 %v1249, 16
      %v1347 = vrot.slane %v1345, 5
      %v1348 = vsel %vm1252, %v1343, %v1347
      %v1351 = vpack.i.b16 %v1290, %v1266
      %v1352 = vshrl.u32 %v1266, 16
      %v1353 = vshrl.u32 %v1290, 16
      %v1354 = vpack.i.b16 %v1353, %v1352
      %v1357 = vpack.i.b16 %v1338, %v1314
      %v1358 = vshrl.u32 %v1314, 16
      %v1359 = vshrl.u32 %v1338, 16
      %v1360 = vpack.i.b16 %v1359, %v1358
      %v1363 = vpack.i.b16 %v1300, %v1276
      %v1364 = vshrl.u32 %v1276, 16
      %v1365 = vshrl.u32 %v1300, 16
      %v1366 = vpack.i.b16 %v1365, %v1364
      %v1369 = vpack.i.b16 %v1348, %v1324
      %v1370 = vshrl.u32 %v1324, 16
      %v1371 = vshrl.u32 %v1348, 16
      %v1372 = vpack.i.b16 %v1371, %v1370
      %v1375 = vunpack.c.l.s4 1983009808
      %v1376 = vunpack.c.0.s8 %v1375
      %v1377 = vperm.slane %v1351, %v1376
      %v1380 = vunpack.c.l.s4 1983009808
      %v1381 = vunpack.c.0.s8 %v1380
      %v1382 = vperm.slane %v1357, %v1381
      %v1383 = vrot.slane %v1382, 4
      %v1384 = vsel %vm495, %v1383, %v1377
      %v1385 = vrot.slane %v1377, 4
      %v1386 = vsel %vm495, %v1382, %v1385
      %v1388 = vunpack.c.l.s4 1934713408
      %v1389 = vunpack.c.0.s8 %v1388
      %v1390 = vperm.slane %v1384, %v1389
      %v1392 = vunpack.c.l.s4 1934713408
      %v1393 = vunpack.c.0.s8 %v1392
      %v1394 = vperm.slane %v1386, %v1393
      %v1395 = vrot.slane %v1390, 4
      %v1396 = vsel %vm495, 0, %v1395
      %v1397 = vrot.slane %v1394, 4
      %v1398 = vsel %vm495, 0, %v1397
      %v1401 = vunpack.c.l.s4 1983009808
      %v1402 = vunpack.c.0.s8 %v1401
      %v1403 = vperm.slane %v1354, %v1402
      %v1406 = vunpack.c.l.s4 1983009808
      %v1407 = vunpack.c.0.s8 %v1406
      %v1408 = vperm.slane %v1360, %v1407
      %v1409 = vrot.slane %v1408, 4
      %v1410 = vsel %vm495, %v1409, %v1403
      %v1411 = vrot.slane %v1403, 4
      %v1412 = vsel %vm495, %v1408, %v1411
      %v1414 = vunpack.c.l.s4 1934713408
      %v1415 = vunpack.c.0.s8 %v1414
      %v1416 = vperm.slane %v1410, %v1415
      %v1418 = vunpack.c.l.s4 1934713408
      %v1419 = vunpack.c.0.s8 %v1418
      %v1420 = vperm.slane %v1412, %v1419
      %v1421 = vrot.slane %v1416, 4
      %v1422 = vsel %vm495, 0, %v1421
      %v1423 = vrot.slane %v1420, 4
      %v1424 = vsel %vm495, 0, %v1423
      %v1427 = vunpack.c.l.s4 1983009808
      %v1428 = vunpack.c.0.s8 %v1427
      %v1429 = vperm.slane %v1363, %v1428
      %v1432 = vunpack.c.l.s4 1983009808
      %v1433 = vunpack.c.0.s8 %v1432
      %v1434 = vperm.slane %v1369, %v1433
      %v1435 = vrot.slane %v1434, 4
      %v1436 = vsel %vm495, %v1435, %v1429
      %v1437 = vrot.slane %v1429, 4
      %v1438 = vsel %vm495, %v1434, %v1437
      %v1440 = vunpack.c.l.s4 1934713408
      %v1441 = vunpack.c.0.s8 %v1440
      %v1442 = vperm.slane %v1436, %v1441
      %v1444 = vunpack.c.l.s4 1934713408
      %v1445 = vunpack.c.0.s8 %v1444
      %v1446 = vperm.slane %v1438, %v1445
      %v1447 = vrot.slane %v1442, 4
      %v1448 = vsel %vm495, 0, %v1447
      %v1449 = vrot.slane %v1446, 4
      %v1450 = vsel %vm495, 0, %v1449
      %v1453 = vunpack.c.l.s4 1983009808
      %v1454 = vunpack.c.0.s8 %v1453
      %v1455 = vperm.slane %v1366, %v1454
      %v1458 = vunpack.c.l.s4 1983009808
      %v1459 = vunpack.c.0.s8 %v1458
      %v1460 = vperm.slane %v1372, %v1459
      %v1461 = vrot.slane %v1460, 4
      %v1462 = vsel %vm495, %v1461, %v1455
      %v1463 = vrot.slane %v1455, 4
      %v1464 = vsel %vm495, %v1460, %v1463
      %v1466 = vunpack.c.l.s4 1934713408
      %v1467 = vunpack.c.0.s8 %v1466
      %v1468 = vperm.slane %v1462, %v1467
      %v1470 = vunpack.c.l.s4 1934713408
      %v1471 = vunpack.c.0.s8 %v1470
      %v1472 = vperm.slane %v1464, %v1471
      %v1473 = vrot.slane %v1468, 4
      %v1474 = vsel %vm495, 0, %v1473
      %v1475 = vrot.slane %v1472, 4
      %v1476 = vsel %vm495, 0, %v1475
      %v1478 = vunpack.c.l.b16 %v1416
      %v1479 = vpack.c.b16 %v1478, %v1478
      %1480 = vrot.lane.b32.xlu0 %v1479, 16
      %v1481 = vpop.permute.xlu0 %1480
      %v1483 = vunpack.c.l.b16 %v1396
      %v1484 = vpack.c.b16 %v1483, %v1483
      %1485 = vrot.lane.b32.xlu0 %v1484, 32
      %v1486 = vpop.permute.xlu0 %1485
      %v1488 = vunpack.c.l.b16 %v1422
      %v1489 = vpack.c.b16 %v1488, %v1488
      %1490 = vrot.lane.b32.xlu0 %v1489, 48
      %v1491 = vpop.permute.xlu0 %1490
      %v1493 = vunpack.c.l.b16 %v1394
      %v1494 = vpack.c.b16 %v1493, %v1493
      %1495 = vrot.lane.b32.xlu0 %v1494, 64
      %v1496 = vpop.permute.xlu0 %1495
      %v1498 = vunpack.c.l.b16 %v1420
      %v1499 = vpack.c.b16 %v1498, %v1498
      %1500 = vrot.lane.b32.xlu0 %v1499, 80
      %v1501 = vpop.permute.xlu0 %1500
      %v1503 = vunpack.c.l.b16 %v1398
      %v1504 = vpack.c.b16 %v1503, %v1503
      %1505 = vrot.lane.b32.xlu0 %v1504, 96
      %v1506 = vpop.permute.xlu0 %1505
      %v1508 = vunpack.c.l.b16 %v1424
      %v1509 = vpack.c.b16 %v1508, %v1508
      %1510 = vrot.lane.b32.xlu0 %v1509, 112
      %v1511 = vpop.permute.xlu0 %1510
      %v1513 = vunpack.c.l.b16 %v1468
      %v1514 = vpack.c.b16 %v1513, %v1513
      %1515 = vrot.lane.b32.xlu0 %v1514, 16
      %v1516 = vpop.permute.xlu0 %1515
      %v1518 = vunpack.c.l.b16 %v1448
      %v1519 = vpack.c.b16 %v1518, %v1518
      %1520 = vrot.lane.b32.xlu0 %v1519, 32
      %v1521 = vpop.permute.xlu0 %1520
      %v1523 = vunpack.c.l.b16 %v1474
      %v1524 = vpack.c.b16 %v1523, %v1523
      %1525 = vrot.lane.b32.xlu0 %v1524, 48
      %v1526 = vpop.permute.xlu0 %1525
      %v1528 = vunpack.c.l.b16 %v1446
      %v1529 = vpack.c.b16 %v1528, %v1528
      %1530 = vrot.lane.b32.xlu0 %v1529, 64
      %v1531 = vpop.permute.xlu0 %1530
      %v1533 = vunpack.c.l.b16 %v1472
      %v1534 = vpack.c.b16 %v1533, %v1533
      %1535 = vrot.lane.b32.xlu0 %v1534, 80
      %v1536 = vpop.permute.xlu0 %1535
      %v1538 = vunpack.c.l.b16 %v1450
      %v1539 = vpack.c.b16 %v1538, %v1538
      %1540 = vrot.lane.b32.xlu0 %v1539, 96
      %v1541 = vpop.permute.xlu0 %1540
      %v1543 = vunpack.c.l.b16 %v1476
      %v1544 = vpack.c.b16 %v1543, %v1543
      %1545 = vrot.lane.b32.xlu0 %v1544, 112
      %v1546 = vpop.permute.xlu0 %1545
      %v1549 = vsel %vm659, %v1390, %v1481
      %v1551 = vsel %vm663, %v1549, %v1486
      %v1553 = vsel %vm666, %v1551, %v1491
      %v1555 = vsel %vm669, %v1553, %v1496
      %v1557 = vsel %vm672, %v1555, %v1501
      %v1559 = vsel %vm675, %v1557, %v1506
      %v1561 = vsel %vm678, %v1559, %v1511
      %v1564 = vsel %vm659, %v1442, %v1516
      %v1566 = vsel %vm663, %v1564, %v1521
      %v1568 = vsel %vm666, %v1566, %v1526
      %v1570 = vsel %vm669, %v1568, %v1531
      %v1572 = vsel %vm672, %v1570, %v1536
      %v1574 = vsel %vm675, %v1572, %v1541
      %v1576 = vsel %vm678, %v1574, %v1546
      %v1579 = vunpack.c.l.b16 %v1561
      %v1580 = vunpack.c.l.b16 %v1576
      %v1581 = vpack.c.b16 %v1580, %v1579
      %v1582 = vrot.slane %v1581, 6
      %1584 = vst [vmem:[#allocation3 + $0x8] sm:$0xcc] %v1582
      %v1585 = vld [vmem:[#allocation2] sm:$0xf]
      %v1586 = vld [vmem:[#allocation2 + $0x4] sm:$0xf]
      %v1587 = vld [vmem:[#allocation2 + $0x8] sm:$0x1]
      %v1588 = vld [vmem:[#allocation2 + $0xc] sm:$0xf]
      %v1589 = vld [vmem:[#allocation2 + $0x10] sm:$0xf]
      %v1590 = vld [vmem:[#allocation2 + $0x14] sm:$0x1]
      %v1591 = vld [vmem:[#allocation2 + $0x18] sm:$0xf]
      %v1592 = vld [vmem:[#allocation2 + $0x1c] sm:$0xf]
      %v1593 = vld [vmem:[#allocation2 + $0x20] sm:$0x1]
      %v1594 = vld [vmem:[#allocation2 + $0x24] sm:$0xf]
      %v1595 = vld [vmem:[#allocation2 + $0x28] sm:$0xf]
      %v1596 = vld [vmem:[#allocation2 + $0x2c] sm:$0x1]
      %v1598 = vshrl.u32 %v1585, 16
      %v1600 = vrot.slane %v1598, 4
      %v1601 = vshll.u32 %v1585, 16
      %v1603 = vrot.slane %v1601, 5
      %v1604 = vor.u32 %v1600, %v1603
      %v1605 = vrot.slane %v1604, 4
      %v1607 = vshll.u32 %v1586, 16
      %v1609 = vrot.slane %v1607, 5
      %v1610 = vsel %vm1252, %v1605, %v1609
      %v1611 = vshrl.u32 %v1586, 16
      %v1613 = vrot.slane %v1611, 4
      %v1614 = vor.u32 %v1613, %v1609
      %v1615 = vrot.slane %v1614, 4
      %v1617 = vshll.u32 %v1587, 16
      %v1619 = vrot.slane %v1617, 5
      %v1620 = vsel %vm1252, %v1615, %v1619
      %v1622 = vshrl.u32 %v1588, 16
      %v1624 = vrot.slane %v1622, 4
      %v1625 = vshll.u32 %v1588, 16
      %v1627 = vrot.slane %v1625, 5
      %v1628 = vor.u32 %v1624, %v1627
      %v1629 = vrot.slane %v1628, 4
      %v1631 = vshll.u32 %v1589, 16
      %v1633 = vrot.slane %v1631, 5
      %v1634 = vsel %vm1252, %v1629, %v1633
      %v1635 = vshrl.u32 %v1589, 16
      %v1637 = vrot.slane %v1635, 4
      %v1638 = vor.u32 %v1637, %v1633
      %v1639 = vrot.slane %v1638, 4
      %v1641 = vshll.u32 %v1590, 16
      %v1643 = vrot.slane %v1641, 5
      %v1644 = vsel %vm1252, %v1639, %v1643
      %v1646 = vshrl.u32 %v1591, 16
      %v1648 = vrot.slane %v1646, 4
      %v1649 = vshll.u32 %v1591, 16
      %v1651 = vrot.slane %v1649, 5
      %v1652 = vor.u32 %v1648, %v1651
      %v1653 = vrot.slane %v1652, 4
      %v1655 = vshll.u32 %v1592, 16
      %v1657 = vrot.slane %v1655, 5
      %v1658 = vsel %vm1252, %v1653, %v1657
      %v1659 = vshrl.u32 %v1592, 16
      %v1661 = vrot.slane %v1659, 4
      %v1662 = vor.u32 %v1661, %v1657
      %v1663 = vrot.slane %v1662, 4
      %v1665 = vshll.u32 %v1593, 16
      %v1667 = vrot.slane %v1665, 5
      %v1668 = vsel %vm1252, %v1663, %v1667
      %v1670 = vshrl.u32 %v1594, 16
      %v1672 = vrot.slane %v1670, 4
      %v1673 = vshll.u32 %v1594, 16
      %v1675 = vrot.slane %v1673, 5
      %v1676 = vor.u32 %v1672, %v1675
      %v1677 = vrot.slane %v1676, 4
      %v1679 = vshll.u32 %v1595, 16
      %v1681 = vrot.slane %v1679, 5
      %v1682 = vsel %vm1252, %v1677, %v1681
      %v1683 = vshrl.u32 %v1595, 16
      %v1685 = vrot.slane %v1683, 4
      %v1686 = vor.u32 %v1685, %v1681
      %v1687 = vrot.slane %v1686, 4
      %v1689 = vshll.u32 %v1596, 16
      %v1691 = vrot.slane %v1689, 5
      %v1692 = vsel %vm1252, %v1687, %v1691
      %1693 = vrot.lane.b32.xlu0 %v1610, 127
      %v1694 = vpop.permute.xlu0 %1693
      %1695 = vrot.lane.b32.xlu0 %v1620, 127
      %v1696 = vpop.permute.xlu0 %1695
      %1697 = vrot.lane.b32.xlu0 %v1634, 127
      %v1698 = vpop.permute.xlu0 %1697
      %1699 = vrot.lane.b32.xlu0 %v1644, 127
      %v1700 = vpop.permute.xlu0 %1699
      %1701 = vrot.lane.b32.xlu0 %v1658, 127
      %v1702 = vpop.permute.xlu0 %1701
      %1703 = vrot.lane.b32.xlu0 %v1668, 127
      %v1704 = vpop.permute.xlu0 %1703
      %1705 = vrot.lane.b32.xlu0 %v1682, 127
      %v1706 = vpop.permute.xlu0 %1705
      %1707 = vrot.lane.b32.xlu0 %v1692, 127
      %v1708 = vpop.permute.xlu0 %1707
      %v1711 = vpack.i.b16 %v1698, %v1694
      %v1712 = vshrl.u32 %v1694, 16
      %v1713 = vshrl.u32 %v1698, 16
      %v1714 = vpack.i.b16 %v1713, %v1712
      %v1717 = vpack.i.b16 %v1706, %v1702
      %v1718 = vshrl.u32 %v1702, 16
      %v1719 = vshrl.u32 %v1706, 16
      %v1720 = vpack.i.b16 %v1719, %v1718
      %v1723 = vpack.i.b16 %v1700, %v1696
      %v1724 = vshrl.u32 %v1696, 16
      %v1725 = vshrl.u32 %v1700, 16
      %v1726 = vpack.i.b16 %v1725, %v1724
      %v1729 = vpack.i.b16 %v1708, %v1704
      %v1730 = vshrl.u32 %v1704, 16
      %v1731 = vshrl.u32 %v1708, 16
      %v1732 = vpack.i.b16 %v1731, %v1730
      %v1735 = vunpack.c.l.s4 1983009808
      %v1736 = vunpack.c.0.s8 %v1735
      %v1737 = vperm.slane %v1711, %v1736
      %v1740 = vunpack.c.l.s4 1983009808
      %v1741 = vunpack.c.0.s8 %v1740
      %v1742 = vperm.slane %v1717, %v1741
      %v1743 = vrot.slane %v1742, 4
      %v1744 = vsel %vm495, %v1743, %v1737
      %v1745 = vrot.slane %v1737, 4
      %v1746 = vsel %vm495, %v1742, %v1745
      %v1748 = vunpack.c.l.s4 1934713408
      %v1749 = vunpack.c.0.s8 %v1748
      %v1750 = vperm.slane %v1744, %v1749
      %v1752 = vunpack.c.l.s4 1934713408
      %v1753 = vunpack.c.0.s8 %v1752
      %v1754 = vperm.slane %v1746, %v1753
      %v1755 = vrot.slane %v1750, 4
      %v1756 = vsel %vm495, 0, %v1755
      %v1757 = vrot.slane %v1754, 4
      %v1758 = vsel %vm495, 0, %v1757
      %v1761 = vunpack.c.l.s4 1983009808
      %v1762 = vunpack.c.0.s8 %v1761
      %v1763 = vperm.slane %v1714, %v1762
      %v1766 = vunpack.c.l.s4 1983009808
      %v1767 = vunpack.c.0.s8 %v1766
      %v1768 = vperm.slane %v1720, %v1767
      %v1769 = vrot.slane %v1768, 4
      %v1770 = vsel %vm495, %v1769, %v1763
      %v1771 = vrot.slane %v1763, 4
      %v1772 = vsel %vm495, %v1768, %v1771
      %v1774 = vunpack.c.l.s4 1934713408
      %v1775 = vunpack.c.0.s8 %v1774
      %v1776 = vperm.slane %v1770, %v1775
      %v1778 = vunpack.c.l.s4 1934713408
      %v1779 = vunpack.c.0.s8 %v1778
      %v1780 = vperm.slane %v1772, %v1779
      %v1781 = vrot.slane %v1776, 4
      %v1782 = vsel %vm495, 0, %v1781
      %v1783 = vrot.slane %v1780, 4
      %v1784 = vsel %vm495, 0, %v1783
      %v1787 = vunpack.c.l.s4 1983009808
      %v1788 = vunpack.c.0.s8 %v1787
      %v1789 = vperm.slane %v1723, %v1788
      %v1792 = vunpack.c.l.s4 1983009808
      %v1793 = vunpack.c.0.s8 %v1792
      %v1794 = vperm.slane %v1729, %v1793
      %v1795 = vrot.slane %v1794, 4
      %v1796 = vsel %vm495, %v1795, %v1789
      %v1797 = vrot.slane %v1789, 4
      %v1798 = vsel %vm495, %v1794, %v1797
      %v1800 = vunpack.c.l.s4 1934713408
      %v1801 = vunpack.c.0.s8 %v1800
      %v1802 = vperm.slane %v1796, %v1801
      %v1804 = vunpack.c.l.s4 1934713408
      %v1805 = vunpack.c.0.s8 %v1804
      %v1806 = vperm.slane %v1798, %v1805
      %v1807 = vrot.slane %v1802, 4
      %v1808 = vsel %vm495, 0, %v1807
      %v1809 = vrot.slane %v1806, 4
      %v1810 = vsel %vm495, 0, %v1809
      %v1813 = vunpack.c.l.s4 1983009808
      %v1814 = vunpack.c.0.s8 %v1813
      %v1815 = vperm.slane %v1726, %v1814
      %v1818 = vunpack.c.l.s4 1983009808
      %v1819 = vunpack.c.0.s8 %v1818
      %v1820 = vperm.slane %v1732, %v1819
      %v1821 = vrot.slane %v1820, 4
      %v1822 = vsel %vm495, %v1821, %v1815
      %v1823 = vrot.slane %v1815, 4
      %v1824 = vsel %vm495, %v1820, %v1823
      %v1826 = vunpack.c.l.s4 1934713408
      %v1827 = vunpack.c.0.s8 %v1826
      %v1828 = vperm.slane %v1822, %v1827
      %v1830 = vunpack.c.l.s4 1934713408
      %v1831 = vunpack.c.0.s8 %v1830
      %v1832 = vperm.slane %v1824, %v1831
      %v1833 = vrot.slane %v1828, 4
      %v1834 = vsel %vm495, 0, %v1833
      %v1835 = vrot.slane %v1832, 4
      %v1836 = vsel %vm495, 0, %v1835
      %v1838 = vunpack.c.l.b16 %v1776
      %v1839 = vpack.c.b16 %v1838, %v1838
      %1840 = vrot.lane.b32.xlu0 %v1839, 16
      %v1841 = vpop.permute.xlu0 %1840
      %v1843 = vunpack.c.l.b16 %v1756
      %v1844 = vpack.c.b16 %v1843, %v1843
      %1845 = vrot.lane.b32.xlu0 %v1844, 32
      %v1846 = vpop.permute.xlu0 %1845
      %v1848 = vunpack.c.l.b16 %v1782
      %v1849 = vpack.c.b16 %v1848, %v1848
      %1850 = vrot.lane.b32.xlu0 %v1849, 48
      %v1851 = vpop.permute.xlu0 %1850
      %v1853 = vunpack.c.l.b16 %v1754
      %v1854 = vpack.c.b16 %v1853, %v1853
      %1855 = vrot.lane.b32.xlu0 %v1854, 64
      %v1856 = vpop.permute.xlu0 %1855
      %v1858 = vunpack.c.l.b16 %v1780
      %v1859 = vpack.c.b16 %v1858, %v1858
      %1860 = vrot.lane.b32.xlu0 %v1859, 80
      %v1861 = vpop.permute.xlu0 %1860
      %v1863 = vunpack.c.l.b16 %v1758
      %v1864 = vpack.c.b16 %v1863, %v1863
      %1865 = vrot.lane.b32.xlu0 %v1864, 96
      %v1866 = vpop.permute.xlu0 %1865
      %v1868 = vunpack.c.l.b16 %v1784
      %v1869 = vpack.c.b16 %v1868, %v1868
      %1870 = vrot.lane.b32.xlu0 %v1869, 112
      %v1871 = vpop.permute.xlu0 %1870
      %v1873 = vunpack.c.l.b16 %v1828
      %v1874 = vpack.c.b16 %v1873, %v1873
      %1875 = vrot.lane.b32.xlu0 %v1874, 16
      %v1876 = vpop.permute.xlu0 %1875
      %v1878 = vunpack.c.l.b16 %v1808
      %v1879 = vpack.c.b16 %v1878, %v1878
      %1880 = vrot.lane.b32.xlu0 %v1879, 32
      %v1881 = vpop.permute.xlu0 %1880
      %v1883 = vunpack.c.l.b16 %v1834
      %v1884 = vpack.c.b16 %v1883, %v1883
      %1885 = vrot.lane.b32.xlu0 %v1884, 48
      %v1886 = vpop.permute.xlu0 %1885
      %v1888 = vunpack.c.l.b16 %v1806
      %v1889 = vpack.c.b16 %v1888, %v1888
      %1890 = vrot.lane.b32.xlu0 %v1889, 64
      %v1891 = vpop.permute.xlu0 %1890
      %v1893 = vunpack.c.l.b16 %v1832
      %v1894 = vpack.c.b16 %v1893, %v1893
      %1895 = vrot.lane.b32.xlu0 %v1894, 80
      %v1896 = vpop.permute.xlu0 %1895
      %v1898 = vunpack.c.l.b16 %v1810
      %v1899 = vpack.c.b16 %v1898, %v1898
      %1900 = vrot.lane.b32.xlu0 %v1899, 96
      %v1901 = vpop.permute.xlu0 %1900
      %v1903 = vunpack.c.l.b16 %v1836
      %v1904 = vpack.c.b16 %v1903, %v1903
      %1905 = vrot.lane.b32.xlu0 %v1904, 112
      %v1906 = vpop.permute.xlu0 %1905
      %v1909 = vsel %vm659, %v1750, %v1841
      %v1911 = vsel %vm663, %v1909, %v1846
      %v1913 = vsel %vm666, %v1911, %v1851
      %v1915 = vsel %vm669, %v1913, %v1856
      %v1917 = vsel %vm672, %v1915, %v1861
      %v1919 = vsel %vm675, %v1917, %v1866
      %v1921 = vsel %vm678, %v1919, %v1871
      %v1924 = vsel %vm659, %v1802, %v1876
      %v1926 = vsel %vm663, %v1924, %v1881
      %v1928 = vsel %vm666, %v1926, %v1886
      %v1930 = vsel %vm669, %v1928, %v1891
      %v1932 = vsel %vm672, %v1930, %v1896
      %v1934 = vsel %vm675, %v1932, %v1901
      %v1936 = vsel %vm678, %v1934, %v1906
      %v1939 = vunpack.c.l.b16 %v1921
      %v1940 = vunpack.c.l.b16 %v1936
      %v1941 = vpack.c.b16 %v1940, %v1939
      %1943 = vst [vmem:[#allocation3 + $0x10] sm:$0x33] %v1941
      %v1944 = vld [vmem:[#allocation2] sm:$0xf]
      %v1945 = vld [vmem:[#allocation2 + $0x4] sm:$0xf]
      %v1946 = vld [vmem:[#allocation2 + $0x8] sm:$0x1]
      %v1947 = vld [vmem:[#allocation2 + $0xc] sm:$0xf]
      %v1948 = vld [vmem:[#allocation2 + $0x10] sm:$0xf]
      %v1949 = vld [vmem:[#allocation2 + $0x14] sm:$0x1]
      %v1950 = vld [vmem:[#allocation2 + $0x18] sm:$0xf]
      %v1951 = vld [vmem:[#allocation2 + $0x1c] sm:$0xf]
      %v1952 = vld [vmem:[#allocation2 + $0x20] sm:$0x1]
      %v1953 = vld [vmem:[#allocation2 + $0x24] sm:$0xf]
      %v1954 = vld [vmem:[#allocation2 + $0x28] sm:$0xf]
      %v1955 = vld [vmem:[#allocation2 + $0x2c] sm:$0x1]
      %v1957 = vshrl.u32 %v1944, 16
      %v1959 = vrot.slane %v1957, 4
      %v1960 = vshll.u32 %v1944, 16
      %v1962 = vrot.slane %v1960, 5
      %v1963 = vor.u32 %v1959, %v1962
      %v1964 = vrot.slane %v1963, 4
      %v1966 = vshll.u32 %v1945, 16
      %v1968 = vrot.slane %v1966, 5
      %v1969 = vsel %vm1252, %v1964, %v1968
      %v1970 = vshrl.u32 %v1945, 16
      %v1972 = vrot.slane %v1970, 4
      %v1973 = vor.u32 %v1972, %v1968
      %v1974 = vrot.slane %v1973, 4
      %v1976 = vshll.u32 %v1946, 16
      %v1978 = vrot.slane %v1976, 5
      %v1979 = vsel %vm1252, %v1974, %v1978
      %v1981 = vshrl.u32 %v1947, 16
      %v1983 = vrot.slane %v1981, 4
      %v1984 = vshll.u32 %v1947, 16
      %v1986 = vrot.slane %v1984, 5
      %v1987 = vor.u32 %v1983, %v1986
      %v1988 = vrot.slane %v1987, 4
      %v1990 = vshll.u32 %v1948, 16
      %v1992 = vrot.slane %v1990, 5
      %v1993 = vsel %vm1252, %v1988, %v1992
      %v1994 = vshrl.u32 %v1948, 16
      %v1996 = vrot.slane %v1994, 4
      %v1997 = vor.u32 %v1996, %v1992
      %v1998 = vrot.slane %v1997, 4
      %v2000 = vshll.u32 %v1949, 16
      %v2002 = vrot.slane %v2000, 5
      %v2003 = vsel %vm1252, %v1998, %v2002
      %v2005 = vshrl.u32 %v1950, 16
      %v2007 = vrot.slane %v2005, 4
      %v2008 = vshll.u32 %v1950, 16
      %v2010 = vrot.slane %v2008, 5
      %v2011 = vor.u32 %v2007, %v2010
      %v2012 = vrot.slane %v2011, 4
      %v2014 = vshll.u32 %v1951, 16
      %v2016 = vrot.slane %v2014, 5
      %v2017 = vsel %vm1252, %v2012, %v2016
      %v2018 = vshrl.u32 %v1951, 16
      %v2020 = vrot.slane %v2018, 4
      %v2021 = vor.u32 %v2020, %v2016
      %v2022 = vrot.slane %v2021, 4
      %v2024 = vshll.u32 %v1952, 16
      %v2026 = vrot.slane %v2024, 5
      %v2027 = vsel %vm1252, %v2022, %v2026
      %v2029 = vshrl.u32 %v1953, 16
      %v2031 = vrot.slane %v2029, 4
      %v2032 = vshll.u32 %v1953, 16
      %v2034 = vrot.slane %v2032, 5
      %v2035 = vor.u32 %v2031, %v2034
      %v2036 = vrot.slane %v2035, 4
      %v2038 = vshll.u32 %v1954, 16
      %v2040 = vrot.slane %v2038, 5
      %v2041 = vsel %vm1252, %v2036, %v2040
      %v2042 = vshrl.u32 %v1954, 16
      %v2044 = vrot.slane %v2042, 4
      %v2045 = vor.u32 %v2044, %v2040
      %v2046 = vrot.slane %v2045, 4
      %v2048 = vshll.u32 %v1955, 16
      %v2050 = vrot.slane %v2048, 5
      %v2051 = vsel %vm1252, %v2046, %v2050
      %2052 = vrot.lane.b32.xlu0 %v1969, 126
      %v2053 = vpop.permute.xlu0 %2052
      %2054 = vrot.lane.b32.xlu0 %v1979, 126
      %v2055 = vpop.permute.xlu0 %2054
      %2056 = vrot.lane.b32.xlu0 %v1993, 126
      %v2057 = vpop.permute.xlu0 %2056
      %2058 = vrot.lane.b32.xlu0 %v2003, 126
      %v2059 = vpop.permute.xlu0 %2058
      %2060 = vrot.lane.b32.xlu0 %v2017, 126
      %v2061 = vpop.permute.xlu0 %2060
      %2062 = vrot.lane.b32.xlu0 %v2027, 126
      %v2063 = vpop.permute.xlu0 %2062
      %2064 = vrot.lane.b32.xlu0 %v2041, 126
      %v2065 = vpop.permute.xlu0 %2064
      %2066 = vrot.lane.b32.xlu0 %v2051, 126
      %v2067 = vpop.permute.xlu0 %2066
      %v2070 = vpack.i.b16 %v2057, %v2053
      %v2071 = vshrl.u32 %v2053, 16
      %v2072 = vshrl.u32 %v2057, 16
      %v2073 = vpack.i.b16 %v2072, %v2071
      %v2076 = vpack.i.b16 %v2065, %v2061
      %v2077 = vshrl.u32 %v2061, 16
      %v2078 = vshrl.u32 %v2065, 16
      %v2079 = vpack.i.b16 %v2078, %v2077
      %v2082 = vpack.i.b16 %v2059, %v2055
      %v2083 = vshrl.u32 %v2055, 16
      %v2084 = vshrl.u32 %v2059, 16
      %v2085 = vpack.i.b16 %v2084, %v2083
      %v2088 = vpack.i.b16 %v2067, %v2063
      %v2089 = vshrl.u32 %v2063, 16
      %v2090 = vshrl.u32 %v2067, 16
      %v2091 = vpack.i.b16 %v2090, %v2089
      %v2094 = vunpack.c.l.s4 1983009808
      %v2095 = vunpack.c.0.s8 %v2094
      %v2096 = vperm.slane %v2070, %v2095
      %v2099 = vunpack.c.l.s4 1983009808
      %v2100 = vunpack.c.0.s8 %v2099
      %v2101 = vperm.slane %v2076, %v2100
      %v2102 = vrot.slane %v2101, 4
      %v2103 = vsel %vm495, %v2102, %v2096
      %v2104 = vrot.slane %v2096, 4
      %v2105 = vsel %vm495, %v2101, %v2104
      %v2107 = vunpack.c.l.s4 1934713408
      %v2108 = vunpack.c.0.s8 %v2107
      %v2109 = vperm.slane %v2103, %v2108
      %v2111 = vunpack.c.l.s4 1934713408
      %v2112 = vunpack.c.0.s8 %v2111
      %v2113 = vperm.slane %v2105, %v2112
      %v2114 = vrot.slane %v2109, 4
      %v2115 = vsel %vm495, 0, %v2114
      %v2116 = vrot.slane %v2113, 4
      %v2117 = vsel %vm495, 0, %v2116
      %v2120 = vunpack.c.l.s4 1983009808
      %v2121 = vunpack.c.0.s8 %v2120
      %v2122 = vperm.slane %v2073, %v2121
      %v2125 = vunpack.c.l.s4 1983009808
      %v2126 = vunpack.c.0.s8 %v2125
      %v2127 = vperm.slane %v2079, %v2126
      %v2128 = vrot.slane %v2127, 4
      %v2129 = vsel %vm495, %v2128, %v2122
      %v2130 = vrot.slane %v2122, 4
      %v2131 = vsel %vm495, %v2127, %v2130
      %v2133 = vunpack.c.l.s4 1934713408
      %v2134 = vunpack.c.0.s8 %v2133
      %v2135 = vperm.slane %v2129, %v2134
      %v2137 = vunpack.c.l.s4 1934713408
      %v2138 = vunpack.c.0.s8 %v2137
      %v2139 = vperm.slane %v2131, %v2138
      %v2140 = vrot.slane %v2135, 4
      %v2141 = vsel %vm495, 0, %v2140
      %v2142 = vrot.slane %v2139, 4
      %v2143 = vsel %vm495, 0, %v2142
      %v2146 = vunpack.c.l.s4 1983009808
      %v2147 = vunpack.c.0.s8 %v2146
      %v2148 = vperm.slane %v2082, %v2147
      %v2151 = vunpack.c.l.s4 1983009808
      %v2152 = vunpack.c.0.s8 %v2151
      %v2153 = vperm.slane %v2088, %v2152
      %v2154 = vrot.slane %v2153, 4
      %v2155 = vsel %vm495, %v2154, %v2148
      %v2156 = vrot.slane %v2148, 4
      %v2157 = vsel %vm495, %v2153, %v2156
      %v2159 = vunpack.c.l.s4 1934713408
      %v2160 = vunpack.c.0.s8 %v2159
      %v2161 = vperm.slane %v2155, %v2160
      %v2163 = vunpack.c.l.s4 1934713408
      %v2164 = vunpack.c.0.s8 %v2163
      %v2165 = vperm.slane %v2157, %v2164
      %v2166 = vrot.slane %v2161, 4
      %v2167 = vsel %vm495, 0, %v2166
      %v2168 = vrot.slane %v2165, 4
      %v2169 = vsel %vm495, 0, %v2168
      %v2172 = vunpack.c.l.s4 1983009808
      %v2173 = vunpack.c.0.s8 %v2172
      %v2174 = vperm.slane %v2085, %v2173
      %v2177 = vunpack.c.l.s4 1983009808
      %v2178 = vunpack.c.0.s8 %v2177
      %v2179 = vperm.slane %v2091, %v2178
      %v2180 = vrot.slane %v2179, 4
      %v2181 = vsel %vm495, %v2180, %v2174
      %v2182 = vrot.slane %v2174, 4
      %v2183 = vsel %vm495, %v2179, %v2182
      %v2185 = vunpack.c.l.s4 1934713408
      %v2186 = vunpack.c.0.s8 %v2185
      %v2187 = vperm.slane %v2181, %v2186
      %v2189 = vunpack.c.l.s4 1934713408
      %v2190 = vunpack.c.0.s8 %v2189
      %v2191 = vperm.slane %v2183, %v2190
      %v2192 = vrot.slane %v2187, 4
      %v2193 = vsel %vm495, 0, %v2192
      %v2194 = vrot.slane %v2191, 4
      %v2195 = vsel %vm495, 0, %v2194
      %v2197 = vunpack.c.l.b16 %v2135
      %v2198 = vpack.c.b16 %v2197, %v2197
      %2199 = vrot.lane.b32.xlu0 %v2198, 16
      %v2200 = vpop.permute.xlu0 %2199
      %v2202 = vunpack.c.l.b16 %v2115
      %v2203 = vpack.c.b16 %v2202, %v2202
      %2204 = vrot.lane.b32.xlu0 %v2203, 32
      %v2205 = vpop.permute.xlu0 %2204
      %v2207 = vunpack.c.l.b16 %v2141
      %v2208 = vpack.c.b16 %v2207, %v2207
      %2209 = vrot.lane.b32.xlu0 %v2208, 48
      %v2210 = vpop.permute.xlu0 %2209
      %v2212 = vunpack.c.l.b16 %v2113
      %v2213 = vpack.c.b16 %v2212, %v2212
      %2214 = vrot.lane.b32.xlu0 %v2213, 64
      %v2215 = vpop.permute.xlu0 %2214
      %v2217 = vunpack.c.l.b16 %v2139
      %v2218 = vpack.c.b16 %v2217, %v2217
      %2219 = vrot.lane.b32.xlu0 %v2218, 80
      %v2220 = vpop.permute.xlu0 %2219
      %v2222 = vunpack.c.l.b16 %v2117
      %v2223 = vpack.c.b16 %v2222, %v2222
      %2224 = vrot.lane.b32.xlu0 %v2223, 96
      %v2225 = vpop.permute.xlu0 %2224
      %v2227 = vunpack.c.l.b16 %v2143
      %v2228 = vpack.c.b16 %v2227, %v2227
      %2229 = vrot.lane.b32.xlu0 %v2228, 112
      %v2230 = vpop.permute.xlu0 %2229
      %v2232 = vunpack.c.l.b16 %v2187
      %v2233 = vpack.c.b16 %v2232, %v2232
      %2234 = vrot.lane.b32.xlu0 %v2233, 16
      %v2235 = vpop.permute.xlu0 %2234
      %v2237 = vunpack.c.l.b16 %v2167
      %v2238 = vpack.c.b16 %v2237, %v2237
      %2239 = vrot.lane.b32.xlu0 %v2238, 32
      %v2240 = vpop.permute.xlu0 %2239
      %v2242 = vunpack.c.l.b16 %v2193
      %v2243 = vpack.c.b16 %v2242, %v2242
      %2244 = vrot.lane.b32.xlu0 %v2243, 48
      %v2245 = vpop.permute.xlu0 %2244
      %v2247 = vunpack.c.l.b16 %v2165
      %v2248 = vpack.c.b16 %v2247, %v2247
      %2249 = vrot.lane.b32.xlu0 %v2248, 64
      %v2250 = vpop.permute.xlu0 %2249
      %v2252 = vunpack.c.l.b16 %v2191
      %v2253 = vpack.c.b16 %v2252, %v2252
      %2254 = vrot.lane.b32.xlu0 %v2253, 80
      %v2255 = vpop.permute.xlu0 %2254
      %v2257 = vunpack.c.l.b16 %v2169
      %v2258 = vpack.c.b16 %v2257, %v2257
      %2259 = vrot.lane.b32.xlu0 %v2258, 96
      %v2260 = vpop.permute.xlu0 %2259
      %v2262 = vunpack.c.l.b16 %v2195
      %v2263 = vpack.c.b16 %v2262, %v2262
      %2264 = vrot.lane.b32.xlu0 %v2263, 112
      %v2265 = vpop.permute.xlu0 %2264
      %v2268 = vsel %vm659, %v2109, %v2200
      %v2270 = vsel %vm663, %v2268, %v2205
      %v2272 = vsel %vm666, %v2270, %v2210
      %v2274 = vsel %vm669, %v2272, %v2215
      %v2276 = vsel %vm672, %v2274, %v2220
      %v2278 = vsel %vm675, %v2276, %v2225
      %v2280 = vsel %vm678, %v2278, %v2230
      %v2283 = vsel %vm659, %v2161, %v2235
      %v2285 = vsel %vm663, %v2283, %v2240
      %v2287 = vsel %vm666, %v2285, %v2245
      %v2289 = vsel %vm669, %v2287, %v2250
      %v2291 = vsel %vm672, %v2289, %v2255
      %v2293 = vsel %vm675, %v2291, %v2260
      %v2295 = vsel %vm678, %v2293, %v2265
      %v2298 = vunpack.c.l.b16 %v2280
      %v2299 = vunpack.c.l.b16 %v2295
      %v2300 = vpack.c.b16 %v2299, %v2298
      %v2301 = vrot.slane %v2300, 6
      %2303 = vst [vmem:[#allocation3 + $0x10] sm:$0xcc] %v2301
      %v2304 = vld [vmem:[#allocation2] sm:$0xe]
      %v2305 = vld [vmem:[#allocation2 + $0x4] sm:$0xf]
      %v2306 = vld [vmem:[#allocation2 + $0x8] sm:$0x1]
      %v2307 = vld [vmem:[#allocation2 + $0xc] sm:$0xe]
      %v2308 = vld [vmem:[#allocation2 + $0x10] sm:$0xf]
      %v2309 = vld [vmem:[#allocation2 + $0x14] sm:$0x1]
      %v2310 = vld [vmem:[#allocation2 + $0x18] sm:$0xe]
      %v2311 = vld [vmem:[#allocation2 + $0x1c] sm:$0xf]
      %v2312 = vld [vmem:[#allocation2 + $0x20] sm:$0x1]
      %v2313 = vld [vmem:[#allocation2 + $0x24] sm:$0xe]
      %v2314 = vld [vmem:[#allocation2 + $0x28] sm:$0xf]
      %v2315 = vld [vmem:[#allocation2 + $0x2c] sm:$0x1]
      %vm2328 = vcmask 1042432
      %vm2329 = vcmask 1046532
      %vm2330 = vmor %vm2328, %vm2329
      %v2331 = vrot.slane %v2304, 5
      %v2332 = vrot.slane %v2331, 4
      %v2333 = vrot.slane %v2305, 5
      %v2334 = vsel %vm2330, %v2332, %v2333
      %v2335 = vrot.slane %v2333, 4
      %v2336 = vrot.slane %v2306, 5
      %v2337 = vsel %vm2330, %v2335, %v2336
      %v2338 = vrot.slane %v2307, 5
      %v2339 = vrot.slane %v2338, 4
      %v2340 = vrot.slane %v2308, 5
      %v2341 = vsel %vm2330, %v2339, %v2340
      %v2342 = vrot.slane %v2340, 4
      %v2343 = vrot.slane %v2309, 5
      %v2344 = vsel %vm2330, %v2342, %v2343
      %v2345 = vrot.slane %v2310, 5
      %v2346 = vrot.slane %v2345, 4
      %v2347 = vrot.slane %v2311, 5
      %v2348 = vsel %vm2330, %v2346, %v2347
      %v2349 = vrot.slane %v2347, 4
      %v2350 = vrot.slane %v2312, 5
      %v2351 = vsel %vm2330, %v2349, %v2350
      %v2352 = vrot.slane %v2313, 5
      %v2353 = vrot.slane %v2352, 4
      %v2354 = vrot.slane %v2314, 5
      %v2355 = vsel %vm2330, %v2353, %v2354
      %v2356 = vrot.slane %v2354, 4
      %v2357 = vrot.slane %v2315, 5
      %v2358 = vsel %vm2330, %v2356, %v2357
      %v2361 = vpack.i.b16 %v2341, %v2334
      %v2362 = vshrl.u32 %v2334, 16
      %v2363 = vshrl.u32 %v2341, 16
      %v2364 = vpack.i.b16 %v2363, %v2362
      %v2367 = vpack.i.b16 %v2355, %v2348
      %v2368 = vshrl.u32 %v2348, 16
      %v2369 = vshrl.u32 %v2355, 16
      %v2370 = vpack.i.b16 %v2369, %v2368
      %v2373 = vpack.i.b16 %v2344, %v2337
      %v2374 = vshrl.u32 %v2337, 16
      %v2375 = vshrl.u32 %v2344, 16
      %v2376 = vpack.i.b16 %v2375, %v2374
      %v2379 = vpack.i.b16 %v2358, %v2351
      %v2380 = vshrl.u32 %v2351, 16
      %v2381 = vshrl.u32 %v2358, 16
      %v2382 = vpack.i.b16 %v2381, %v2380
      %v2385 = vunpack.c.l.s4 1983009808
      %v2386 = vunpack.c.0.s8 %v2385
      %v2387 = vperm.slane %v2361, %v2386
      %v2390 = vunpack.c.l.s4 1983009808
      %v2391 = vunpack.c.0.s8 %v2390
      %v2392 = vperm.slane %v2367, %v2391
      %v2393 = vrot.slane %v2392, 4
      %v2394 = vsel %vm495, %v2393, %v2387
      %v2395 = vrot.slane %v2387, 4
      %v2396 = vsel %vm495, %v2392, %v2395
      %v2398 = vunpack.c.l.s4 1934713408
      %v2399 = vunpack.c.0.s8 %v2398
      %v2400 = vperm.slane %v2394, %v2399
      %v2402 = vunpack.c.l.s4 1934713408
      %v2403 = vunpack.c.0.s8 %v2402
      %v2404 = vperm.slane %v2396, %v2403
      %v2405 = vrot.slane %v2400, 4
      %v2406 = vsel %vm495, 0, %v2405
      %v2407 = vrot.slane %v2404, 4
      %v2408 = vsel %vm495, 0, %v2407
      %v2411 = vunpack.c.l.s4 1983009808
      %v2412 = vunpack.c.0.s8 %v2411
      %v2413 = vperm.slane %v2364, %v2412
      %v2416 = vunpack.c.l.s4 1983009808
      %v2417 = vunpack.c.0.s8 %v2416
      %v2418 = vperm.slane %v2370, %v2417
      %v2419 = vrot.slane %v2418, 4
      %v2420 = vsel %vm495, %v2419, %v2413
      %v2421 = vrot.slane %v2413, 4
      %v2422 = vsel %vm495, %v2418, %v2421
      %v2424 = vunpack.c.l.s4 1934713408
      %v2425 = vunpack.c.0.s8 %v2424
      %v2426 = vperm.slane %v2420, %v2425
      %v2428 = vunpack.c.l.s4 1934713408
      %v2429 = vunpack.c.0.s8 %v2428
      %v2430 = vperm.slane %v2422, %v2429
      %v2431 = vrot.slane %v2426, 4
      %v2432 = vsel %vm495, 0, %v2431
      %v2433 = vrot.slane %v2430, 4
      %v2434 = vsel %vm495, 0, %v2433
      %v2437 = vunpack.c.l.s4 1983009808
      %v2438 = vunpack.c.0.s8 %v2437
      %v2439 = vperm.slane %v2373, %v2438
      %v2442 = vunpack.c.l.s4 1983009808
      %v2443 = vunpack.c.0.s8 %v2442
      %v2444 = vperm.slane %v2379, %v2443
      %v2445 = vrot.slane %v2444, 4
      %v2446 = vsel %vm495, %v2445, %v2439
      %v2447 = vrot.slane %v2439, 4
      %v2448 = vsel %vm495, %v2444, %v2447
      %v2450 = vunpack.c.l.s4 1934713408
      %v2451 = vunpack.c.0.s8 %v2450
      %v2452 = vperm.slane %v2446, %v2451
      %v2454 = vunpack.c.l.s4 1934713408
      %v2455 = vunpack.c.0.s8 %v2454
      %v2456 = vperm.slane %v2448, %v2455
      %v2457 = vrot.slane %v2452, 4
      %v2458 = vsel %vm495, 0, %v2457
      %v2459 = vrot.slane %v2456, 4
      %v2460 = vsel %vm495, 0, %v2459
      %v2463 = vunpack.c.l.s4 1983009808
      %v2464 = vunpack.c.0.s8 %v2463
      %v2465 = vperm.slane %v2376, %v2464
      %v2468 = vunpack.c.l.s4 1983009808
      %v2469 = vunpack.c.0.s8 %v2468
      %v2470 = vperm.slane %v2382, %v2469
      %v2471 = vrot.slane %v2470, 4
      %v2472 = vsel %vm495, %v2471, %v2465
      %v2473 = vrot.slane %v2465, 4
      %v2474 = vsel %vm495, %v2470, %v2473
      %v2476 = vunpack.c.l.s4 1934713408
      %v2477 = vunpack.c.0.s8 %v2476
      %v2478 = vperm.slane %v2472, %v2477
      %v2480 = vunpack.c.l.s4 1934713408
      %v2481 = vunpack.c.0.s8 %v2480
      %v2482 = vperm.slane %v2474, %v2481
      %v2483 = vrot.slane %v2478, 4
      %v2484 = vsel %vm495, 0, %v2483
      %v2485 = vrot.slane %v2482, 4
      %v2486 = vsel %vm495, 0, %v2485
      %v2488 = vunpack.c.l.b16 %v2426
      %v2489 = vpack.c.b16 %v2488, %v2488
      %2490 = vrot.lane.b32.xlu0 %v2489, 16
      %v2491 = vpop.permute.xlu0 %2490
      %v2493 = vunpack.c.l.b16 %v2406
      %v2494 = vpack.c.b16 %v2493, %v2493
      %2495 = vrot.lane.b32.xlu0 %v2494, 32
      %v2496 = vpop.permute.xlu0 %2495
      %v2498 = vunpack.c.l.b16 %v2432
      %v2499 = vpack.c.b16 %v2498, %v2498
      %2500 = vrot.lane.b32.xlu0 %v2499, 48
      %v2501 = vpop.permute.xlu0 %2500
      %v2503 = vunpack.c.l.b16 %v2404
      %v2504 = vpack.c.b16 %v2503, %v2503
      %2505 = vrot.lane.b32.xlu0 %v2504, 64
      %v2506 = vpop.permute.xlu0 %2505
      %v2508 = vunpack.c.l.b16 %v2430
      %v2509 = vpack.c.b16 %v2508, %v2508
      %2510 = vrot.lane.b32.xlu0 %v2509, 80
      %v2511 = vpop.permute.xlu0 %2510
      %v2513 = vunpack.c.l.b16 %v2408
      %v2514 = vpack.c.b16 %v2513, %v2513
      %2515 = vrot.lane.b32.xlu0 %v2514, 96
      %v2516 = vpop.permute.xlu0 %2515
      %v2518 = vunpack.c.l.b16 %v2434
      %v2519 = vpack.c.b16 %v2518, %v2518
      %2520 = vrot.lane.b32.xlu0 %v2519, 112
      %v2521 = vpop.permute.xlu0 %2520
      %v2523 = vunpack.c.l.b16 %v2478
      %v2524 = vpack.c.b16 %v2523, %v2523
      %2525 = vrot.lane.b32.xlu0 %v2524, 16
      %v2526 = vpop.permute.xlu0 %2525
      %v2528 = vunpack.c.l.b16 %v2458
      %v2529 = vpack.c.b16 %v2528, %v2528
      %2530 = vrot.lane.b32.xlu0 %v2529, 32
      %v2531 = vpop.permute.xlu0 %2530
      %v2533 = vunpack.c.l.b16 %v2484
      %v2534 = vpack.c.b16 %v2533, %v2533
      %2535 = vrot.lane.b32.xlu0 %v2534, 48
      %v2536 = vpop.permute.xlu0 %2535
      %v2538 = vunpack.c.l.b16 %v2456
      %v2539 = vpack.c.b16 %v2538, %v2538
      %2540 = vrot.lane.b32.xlu0 %v2539, 64
      %v2541 = vpop.permute.xlu0 %2540
      %v2543 = vunpack.c.l.b16 %v2482
      %v2544 = vpack.c.b16 %v2543, %v2543
      %2545 = vrot.lane.b32.xlu0 %v2544, 80
      %v2546 = vpop.permute.xlu0 %2545
      %v2548 = vunpack.c.l.b16 %v2460
      %v2549 = vpack.c.b16 %v2548, %v2548
      %2550 = vrot.lane.b32.xlu0 %v2549, 96
      %v2551 = vpop.permute.xlu0 %2550
      %v2553 = vunpack.c.l.b16 %v2486
      %v2554 = vpack.c.b16 %v2553, %v2553
      %2555 = vrot.lane.b32.xlu0 %v2554, 112
      %v2556 = vpop.permute.xlu0 %2555
      %v2559 = vsel %vm659, %v2400, %v2491
      %v2561 = vsel %vm663, %v2559, %v2496
      %v2563 = vsel %vm666, %v2561, %v2501
      %v2565 = vsel %vm669, %v2563, %v2506
      %v2567 = vsel %vm672, %v2565, %v2511
      %v2569 = vsel %vm675, %v2567, %v2516
      %v2571 = vsel %vm678, %v2569, %v2521
      %v2574 = vsel %vm659, %v2452, %v2526
      %v2576 = vsel %vm663, %v2574, %v2531
      %v2578 = vsel %vm666, %v2576, %v2536
      %v2580 = vsel %vm669, %v2578, %v2541
      %v2582 = vsel %vm672, %v2580, %v2546
      %v2584 = vsel %vm675, %v2582, %v2551
      %v2586 = vsel %vm678, %v2584, %v2556
      %v2589 = vunpack.c.l.b16 %v2571
      %v2590 = vunpack.c.l.b16 %v2586
      %v2591 = vpack.c.b16 %v2590, %v2589
      %2593 = vst [vmem:[#allocation3 + $0x18] sm:$0x33] %v2591
      %v2594 = vld [vmem:[#allocation2] sm:$0xe]
      %v2595 = vld [vmem:[#allocation2 + $0x4] sm:$0xf]
      %v2596 = vld [vmem:[#allocation2 + $0x8] sm:$0x1]
      %v2597 = vld [vmem:[#allocation2 + $0xc] sm:$0xe]
      %v2598 = vld [vmem:[#allocation2 + $0x10] sm:$0xf]
      %v2599 = vld [vmem:[#allocation2 + $0x14] sm:$0x1]
      %v2600 = vld [vmem:[#allocation2 + $0x18] sm:$0xe]
      %v2601 = vld [vmem:[#allocation2 + $0x1c] sm:$0xf]
      %v2602 = vld [vmem:[#allocation2 + $0x20] sm:$0x1]
      %v2603 = vld [vmem:[#allocation2 + $0x24] sm:$0xe]
      %v2604 = vld [vmem:[#allocation2 + $0x28] sm:$0xf]
      %v2605 = vld [vmem:[#allocation2 + $0x2c] sm:$0x1]
      %v2618 = vrot.slane %v2594, 5
      %v2619 = vrot.slane %v2618, 4
      %v2620 = vrot.slane %v2595, 5
      %v2621 = vsel %vm2330, %v2619, %v2620
      %v2622 = vrot.slane %v2620, 4
      %v2623 = vrot.slane %v2596, 5
      %v2624 = vsel %vm2330, %v2622, %v2623
      %v2625 = vrot.slane %v2597, 5
      %v2626 = vrot.slane %v2625, 4
      %v2627 = vrot.slane %v2598, 5
      %v2628 = vsel %vm2330, %v2626, %v2627
      %v2629 = vrot.slane %v2627, 4
      %v2630 = vrot.slane %v2599, 5
      %v2631 = vsel %vm2330, %v2629, %v2630
      %v2632 = vrot.slane %v2600, 5
      %v2633 = vrot.slane %v2632, 4
      %v2634 = vrot.slane %v2601, 5
      %v2635 = vsel %vm2330, %v2633, %v2634
      %v2636 = vrot.slane %v2634, 4
      %v2637 = vrot.slane %v2602, 5
      %v2638 = vsel %vm2330, %v2636, %v2637
      %v2639 = vrot.slane %v2603, 5
      %v2640 = vrot.slane %v2639, 4
      %v2641 = vrot.slane %v2604, 5
      %v2642 = vsel %vm2330, %v2640, %v2641
      %v2643 = vrot.slane %v2641, 4
      %v2644 = vrot.slane %v2605, 5
      %v2645 = vsel %vm2330, %v2643, %v2644
      %2646 = vrot.lane.b32.xlu0 %v2621, 127
      %v2647 = vpop.permute.xlu0 %2646
      %2648 = vrot.lane.b32.xlu0 %v2624, 127
      %v2649 = vpop.permute.xlu0 %2648
      %2650 = vrot.lane.b32.xlu0 %v2628, 127
      %v2651 = vpop.permute.xlu0 %2650
      %2652 = vrot.lane.b32.xlu0 %v2631, 127
      %v2653 = vpop.permute.xlu0 %2652
      %2654 = vrot.lane.b32.xlu0 %v2635, 127
      %v2655 = vpop.permute.xlu0 %2654
      %2656 = vrot.lane.b32.xlu0 %v2638, 127
      %v2657 = vpop.permute.xlu0 %2656
      %2658 = vrot.lane.b32.xlu0 %v2642, 127
      %v2659 = vpop.permute.xlu0 %2658
      %2660 = vrot.lane.b32.xlu0 %v2645, 127
      %v2661 = vpop.permute.xlu0 %2660
      %v2664 = vpack.i.b16 %v2651, %v2647
      %v2665 = vshrl.u32 %v2647, 16
      %v2666 = vshrl.u32 %v2651, 16
      %v2667 = vpack.i.b16 %v2666, %v2665
      %v2670 = vpack.i.b16 %v2659, %v2655
      %v2671 = vshrl.u32 %v2655, 16
      %v2672 = vshrl.u32 %v2659, 16
      %v2673 = vpack.i.b16 %v2672, %v2671
      %v2676 = vpack.i.b16 %v2653, %v2649
      %v2677 = vshrl.u32 %v2649, 16
      %v2678 = vshrl.u32 %v2653, 16
      %v2679 = vpack.i.b16 %v2678, %v2677
      %v2682 = vpack.i.b16 %v2661, %v2657
      %v2683 = vshrl.u32 %v2657, 16
      %v2684 = vshrl.u32 %v2661, 16
      %v2685 = vpack.i.b16 %v2684, %v2683
      %v2688 = vunpack.c.l.s4 1983009808
      %v2689 = vunpack.c.0.s8 %v2688
      %v2690 = vperm.slane %v2664, %v2689
      %v2693 = vunpack.c.l.s4 1983009808
      %v2694 = vunpack.c.0.s8 %v2693
      %v2695 = vperm.slane %v2670, %v2694
      %v2696 = vrot.slane %v2695, 4
      %v2697 = vsel %vm495, %v2696, %v2690
      %v2698 = vrot.slane %v2690, 4
      %v2699 = vsel %vm495, %v2695, %v2698
      %v2701 = vunpack.c.l.s4 1934713408
      %v2702 = vunpack.c.0.s8 %v2701
      %v2703 = vperm.slane %v2697, %v2702
      %v2705 = vunpack.c.l.s4 1934713408
      %v2706 = vunpack.c.0.s8 %v2705
      %v2707 = vperm.slane %v2699, %v2706
      %v2708 = vrot.slane %v2703, 4
      %v2709 = vsel %vm495, 0, %v2708
      %v2710 = vrot.slane %v2707, 4
      %v2711 = vsel %vm495, 0, %v2710
      %v2714 = vunpack.c.l.s4 1983009808
      %v2715 = vunpack.c.0.s8 %v2714
      %v2716 = vperm.slane %v2667, %v2715
      %v2719 = vunpack.c.l.s4 1983009808
      %v2720 = vunpack.c.0.s8 %v2719
      %v2721 = vperm.slane %v2673, %v2720
      %v2722 = vrot.slane %v2721, 4
      %v2723 = vsel %vm495, %v2722, %v2716
      %v2724 = vrot.slane %v2716, 4
      %v2725 = vsel %vm495, %v2721, %v2724
      %v2727 = vunpack.c.l.s4 1934713408
      %v2728 = vunpack.c.0.s8 %v2727
      %v2729 = vperm.slane %v2723, %v2728
      %v2731 = vunpack.c.l.s4 1934713408
      %v2732 = vunpack.c.0.s8 %v2731
      %v2733 = vperm.slane %v2725, %v2732
      %v2734 = vrot.slane %v2729, 4
      %v2735 = vsel %vm495, 0, %v2734
      %v2736 = vrot.slane %v2733, 4
      %v2737 = vsel %vm495, 0, %v2736
      %v2740 = vunpack.c.l.s4 1983009808
      %v2741 = vunpack.c.0.s8 %v2740
      %v2742 = vperm.slane %v2676, %v2741
      %v2745 = vunpack.c.l.s4 1983009808
      %v2746 = vunpack.c.0.s8 %v2745
      %v2747 = vperm.slane %v2682, %v2746
      %v2748 = vrot.slane %v2747, 4
      %v2749 = vsel %vm495, %v2748, %v2742
      %v2750 = vrot.slane %v2742, 4
      %v2751 = vsel %vm495, %v2747, %v2750
      %v2753 = vunpack.c.l.s4 1934713408
      %v2754 = vunpack.c.0.s8 %v2753
      %v2755 = vperm.slane %v2749, %v2754
      %v2757 = vunpack.c.l.s4 1934713408
      %v2758 = vunpack.c.0.s8 %v2757
      %v2759 = vperm.slane %v2751, %v2758
      %v2760 = vrot.slane %v2755, 4
      %v2761 = vsel %vm495, 0, %v2760
      %v2762 = vrot.slane %v2759, 4
      %v2763 = vsel %vm495, 0, %v2762
      %v2766 = vunpack.c.l.s4 1983009808
      %v2767 = vunpack.c.0.s8 %v2766
      %v2768 = vperm.slane %v2679, %v2767
      %v2771 = vunpack.c.l.s4 1983009808
      %v2772 = vunpack.c.0.s8 %v2771
      %v2773 = vperm.slane %v2685, %v2772
      %v2774 = vrot.slane %v2773, 4
      %v2775 = vsel %vm495, %v2774, %v2768
      %v2776 = vrot.slane %v2768, 4
      %v2777 = vsel %vm495, %v2773, %v2776
      %v2779 = vunpack.c.l.s4 1934713408
      %v2780 = vunpack.c.0.s8 %v2779
      %v2781 = vperm.slane %v2775, %v2780
      %v2783 = vunpack.c.l.s4 1934713408
      %v2784 = vunpack.c.0.s8 %v2783
      %v2785 = vperm.slane %v2777, %v2784
      %v2786 = vrot.slane %v2781, 4
      %v2787 = vsel %vm495, 0, %v2786
      %v2788 = vrot.slane %v2785, 4
      %v2789 = vsel %vm495, 0, %v2788
      %v2791 = vunpack.c.l.b16 %v2729
      %v2792 = vpack.c.b16 %v2791, %v2791
      %2793 = vrot.lane.b32.xlu0 %v2792, 16
      %v2794 = vpop.permute.xlu0 %2793
      %v2796 = vunpack.c.l.b16 %v2709
      %v2797 = vpack.c.b16 %v2796, %v2796
      %2798 = vrot.lane.b32.xlu0 %v2797, 32
      %v2799 = vpop.permute.xlu0 %2798
      %v2801 = vunpack.c.l.b16 %v2735
      %v2802 = vpack.c.b16 %v2801, %v2801
      %2803 = vrot.lane.b32.xlu0 %v2802, 48
      %v2804 = vpop.permute.xlu0 %2803
      %v2806 = vunpack.c.l.b16 %v2707
      %v2807 = vpack.c.b16 %v2806, %v2806
      %2808 = vrot.lane.b32.xlu0 %v2807, 64
      %v2809 = vpop.permute.xlu0 %2808
      %v2811 = vunpack.c.l.b16 %v2733
      %v2812 = vpack.c.b16 %v2811, %v2811
      %2813 = vrot.lane.b32.xlu0 %v2812, 80
      %v2814 = vpop.permute.xlu0 %2813
      %v2816 = vunpack.c.l.b16 %v2711
      %v2817 = vpack.c.b16 %v2816, %v2816
      %2818 = vrot.lane.b32.xlu0 %v2817, 96
      %v2819 = vpop.permute.xlu0 %2818
      %v2821 = vunpack.c.l.b16 %v2737
      %v2822 = vpack.c.b16 %v2821, %v2821
      %2823 = vrot.lane.b32.xlu0 %v2822, 112
      %v2824 = vpop.permute.xlu0 %2823
      %v2826 = vunpack.c.l.b16 %v2781
      %v2827 = vpack.c.b16 %v2826, %v2826
      %2828 = vrot.lane.b32.xlu0 %v2827, 16
      %v2829 = vpop.permute.xlu0 %2828
      %v2831 = vunpack.c.l.b16 %v2761
      %v2832 = vpack.c.b16 %v2831, %v2831
      %2833 = vrot.lane.b32.xlu0 %v2832, 32
      %v2834 = vpop.permute.xlu0 %2833
      %v2836 = vunpack.c.l.b16 %v2787
      %v2837 = vpack.c.b16 %v2836, %v2836
      %2838 = vrot.lane.b32.xlu0 %v2837, 48
      %v2839 = vpop.permute.xlu0 %2838
      %v2841 = vunpack.c.l.b16 %v2759
      %v2842 = vpack.c.b16 %v2841, %v2841
      %2843 = vrot.lane.b32.xlu0 %v2842, 64
      %v2844 = vpop.permute.xlu0 %2843
      %v2846 = vunpack.c.l.b16 %v2785
      %v2847 = vpack.c.b16 %v2846, %v2846
      %2848 = vrot.lane.b32.xlu0 %v2847, 80
      %v2849 = vpop.permute.xlu0 %2848
      %v2851 = vunpack.c.l.b16 %v2763
      %v2852 = vpack.c.b16 %v2851, %v2851
      %2853 = vrot.lane.b32.xlu0 %v2852, 96
      %v2854 = vpop.permute.xlu0 %2853
      %v2856 = vunpack.c.l.b16 %v2789
      %v2857 = vpack.c.b16 %v2856, %v2856
      %2858 = vrot.lane.b32.xlu0 %v2857, 112
      %v2859 = vpop.permute.xlu0 %2858
      %v2862 = vsel %vm659, %v2703, %v2794
      %v2864 = vsel %vm663, %v2862, %v2799
      %v2866 = vsel %vm666, %v2864, %v2804
      %v2868 = vsel %vm669, %v2866, %v2809
      %v2870 = vsel %vm672, %v2868, %v2814
      %v2872 = vsel %vm675, %v2870, %v2819
      %v2874 = vsel %vm678, %v2872, %v2824
      %v2877 = vsel %vm659, %v2755, %v2829
      %v2879 = vsel %vm663, %v2877, %v2834
      %v2881 = vsel %vm666, %v2879, %v2839
      %v2883 = vsel %vm669, %v2881, %v2844
      %v2885 = vsel %vm672, %v2883, %v2849
      %v2887 = vsel %vm675, %v2885, %v2854
      %v2889 = vsel %vm678, %v2887, %v2859
      %v2892 = vunpack.c.l.b16 %v2874
      %v2893 = vunpack.c.l.b16 %v2889
      %v2894 = vpack.c.b16 %v2893, %v2892
      %v2895 = vrot.slane %v2894, 6
      %2897 = vst [vmem:[#allocation3 + $0x18] sm:$0xcc] %v2895
      %v2898 = vld [vmem:[#allocation2] sm:$0xe]
      %v2899 = vld [vmem:[#allocation2 + $0x4] sm:$0xf]
      %v2900 = vld [vmem:[#allocation2 + $0x8] sm:$0x1]
      %v2901 = vld [vmem:[#allocation2 + $0xc] sm:$0xe]
      %v2902 = vld [vmem:[#allocation2 + $0x10] sm:$0xf]
      %v2903 = vld [vmem:[#allocation2 + $0x14] sm:$0x1]
      %v2904 = vld [vmem:[#allocation2 + $0x18] sm:$0xe]
      %v2905 = vld [vmem:[#allocation2 + $0x1c] sm:$0xf]
      %v2906 = vld [vmem:[#allocation2 + $0x20] sm:$0x1]
      %v2907 = vld [vmem:[#allocation2 + $0x24] sm:$0xe]
      %v2908 = vld [vmem:[#allocation2 + $0x28] sm:$0xf]
      %v2909 = vld [vmem:[#allocation2 + $0x2c] sm:$0x1]
      %v2922 = vrot.slane %v2898, 5
      %v2923 = vrot.slane %v2922, 4
      %v2924 = vrot.slane %v2899, 5
      %v2925 = vsel %vm2330, %v2923, %v2924
      %v2926 = vrot.slane %v2924, 4
      %v2927 = vrot.slane %v2900, 5
      %v2928 = vsel %vm2330, %v2926, %v2927
      %v2929 = vrot.slane %v2901, 5
      %v2930 = vrot.slane %v2929, 4
      %v2931 = vrot.slane %v2902, 5
      %v2932 = vsel %vm2330, %v2930, %v2931
      %v2933 = vrot.slane %v2931, 4
      %v2934 = vrot.slane %v2903, 5
      %v2935 = vsel %vm2330, %v2933, %v2934
      %v2936 = vrot.slane %v2904, 5
      %v2937 = vrot.slane %v2936, 4
      %v2938 = vrot.slane %v2905, 5
      %v2939 = vsel %vm2330, %v2937, %v2938
      %v2940 = vrot.slane %v2938, 4
      %v2941 = vrot.slane %v2906, 5
      %v2942 = vsel %vm2330, %v2940, %v2941
      %v2943 = vrot.slane %v2907, 5
      %v2944 = vrot.slane %v2943, 4
      %v2945 = vrot.slane %v2908, 5
      %v2946 = vsel %vm2330, %v2944, %v2945
      %v2947 = vrot.slane %v2945, 4
      %v2948 = vrot.slane %v2909, 5
      %v2949 = vsel %vm2330, %v2947, %v2948
      %2950 = vrot.lane.b32.xlu0 %v2925, 126
      %v2951 = vpop.permute.xlu0 %2950
      %2952 = vrot.lane.b32.xlu0 %v2928, 126
      %v2953 = vpop.permute.xlu0 %2952
      %2954 = vrot.lane.b32.xlu0 %v2932, 126
      %v2955 = vpop.permute.xlu0 %2954
      %2956 = vrot.lane.b32.xlu0 %v2935, 126
      %v2957 = vpop.permute.xlu0 %2956
      %2958 = vrot.lane.b32.xlu0 %v2939, 126
      %v2959 = vpop.permute.xlu0 %2958
      %2960 = vrot.lane.b32.xlu0 %v2942, 126
      %v2961 = vpop.permute.xlu0 %2960
      %2962 = vrot.lane.b32.xlu0 %v2946, 126
      %v2963 = vpop.permute.xlu0 %2962
      %2964 = vrot.lane.b32.xlu0 %v2949, 126
      %v2965 = vpop.permute.xlu0 %2964
      %v2968 = vpack.i.b16 %v2955, %v2951
      %v2969 = vshrl.u32 %v2951, 16
      %v2970 = vshrl.u32 %v2955, 16
      %v2971 = vpack.i.b16 %v2970, %v2969
      %v2974 = vpack.i.b16 %v2963, %v2959
      %v2975 = vshrl.u32 %v2959, 16
      %v2976 = vshrl.u32 %v2963, 16
      %v2977 = vpack.i.b16 %v2976, %v2975
      %v2980 = vpack.i.b16 %v2957, %v2953
      %v2981 = vshrl.u32 %v2953, 16
      %v2982 = vshrl.u32 %v2957, 16
      %v2983 = vpack.i.b16 %v2982, %v2981
      %v2986 = vpack.i.b16 %v2965, %v2961
      %v2987 = vshrl.u32 %v2961, 16
      %v2988 = vshrl.u32 %v2965, 16
      %v2989 = vpack.i.b16 %v2988, %v2987
      %v2992 = vunpack.c.l.s4 1983009808
      %v2993 = vunpack.c.0.s8 %v2992
      %v2994 = vperm.slane %v2968, %v2993
      %v2997 = vunpack.c.l.s4 1983009808
      %v2998 = vunpack.c.0.s8 %v2997
      %v2999 = vperm.slane %v2974, %v2998
      %v3000 = vrot.slane %v2999, 4
      %v3001 = vsel %vm495, %v3000, %v2994
      %v3002 = vrot.slane %v2994, 4
      %v3003 = vsel %vm495, %v2999, %v3002
      %v3005 = vunpack.c.l.s4 1934713408
      %v3006 = vunpack.c.0.s8 %v3005
      %v3007 = vperm.slane %v3001, %v3006
      %v3009 = vunpack.c.l.s4 1934713408
      %v3010 = vunpack.c.0.s8 %v3009
      %v3011 = vperm.slane %v3003, %v3010
      %v3012 = vrot.slane %v3007, 4
      %v3013 = vsel %vm495, 0, %v3012
      %v3014 = vrot.slane %v3011, 4
      %v3015 = vsel %vm495, 0, %v3014
      %v3018 = vunpack.c.l.s4 1983009808
      %v3019 = vunpack.c.0.s8 %v3018
      %v3020 = vperm.slane %v2971, %v3019
      %v3023 = vunpack.c.l.s4 1983009808
      %v3024 = vunpack.c.0.s8 %v3023
      %v3025 = vperm.slane %v2977, %v3024
      %v3026 = vrot.slane %v3025, 4
      %v3027 = vsel %vm495, %v3026, %v3020
      %v3028 = vrot.slane %v3020, 4
      %v3029 = vsel %vm495, %v3025, %v3028
      %v3031 = vunpack.c.l.s4 1934713408
      %v3032 = vunpack.c.0.s8 %v3031
      %v3033 = vperm.slane %v3027, %v3032
      %v3035 = vunpack.c.l.s4 1934713408
      %v3036 = vunpack.c.0.s8 %v3035
      %v3037 = vperm.slane %v3029, %v3036
      %v3038 = vrot.slane %v3033, 4
      %v3039 = vsel %vm495, 0, %v3038
      %v3040 = vrot.slane %v3037, 4
      %v3041 = vsel %vm495, 0, %v3040
      %v3044 = vunpack.c.l.s4 1983009808
      %v3045 = vunpack.c.0.s8 %v3044
      %v3046 = vperm.slane %v2980, %v3045
      %v3049 = vunpack.c.l.s4 1983009808
      %v3050 = vunpack.c.0.s8 %v3049
      %v3051 = vperm.slane %v2986, %v3050
      %v3052 = vrot.slane %v3051, 4
      %v3053 = vsel %vm495, %v3052, %v3046
      %v3054 = vrot.slane %v3046, 4
      %v3055 = vsel %vm495, %v3051, %v3054
      %v3057 = vunpack.c.l.s4 1934713408
      %v3058 = vunpack.c.0.s8 %v3057
      %v3059 = vperm.slane %v3053, %v3058
      %v3061 = vunpack.c.l.s4 1934713408
      %v3062 = vunpack.c.0.s8 %v3061
      %v3063 = vperm.slane %v3055, %v3062
      %v3064 = vrot.slane %v3059, 4
      %v3065 = vsel %vm495, 0, %v3064
      %v3066 = vrot.slane %v3063, 4
      %v3067 = vsel %vm495, 0, %v3066
      %v3070 = vunpack.c.l.s4 1983009808
      %v3071 = vunpack.c.0.s8 %v3070
      %v3072 = vperm.slane %v2983, %v3071
      %v3075 = vunpack.c.l.s4 1983009808
      %v3076 = vunpack.c.0.s8 %v3075
      %v3077 = vperm.slane %v2989, %v3076
      %v3078 = vrot.slane %v3077, 4
      %v3079 = vsel %vm495, %v3078, %v3072
      %v3080 = vrot.slane %v3072, 4
      %v3081 = vsel %vm495, %v3077, %v3080
      %v3083 = vunpack.c.l.s4 1934713408
      %v3084 = vunpack.c.0.s8 %v3083
      %v3085 = vperm.slane %v3079, %v3084
      %v3087 = vunpack.c.l.s4 1934713408
      %v3088 = vunpack.c.0.s8 %v3087
      %v3089 = vperm.slane %v3081, %v3088
      %v3090 = vrot.slane %v3085, 4
      %v3091 = vsel %vm495, 0, %v3090
      %v3092 = vrot.slane %v3089, 4
      %v3093 = vsel %vm495, 0, %v3092
      %v3095 = vunpack.c.l.b16 %v3033
      %v3096 = vpack.c.b16 %v3095, %v3095
      %3097 = vrot.lane.b32.xlu0 %v3096, 16
      %v3098 = vpop.permute.xlu0 %3097
      %v3100 = vunpack.c.l.b16 %v3013
      %v3101 = vpack.c.b16 %v3100, %v3100
      %3102 = vrot.lane.b32.xlu0 %v3101, 32
      %v3103 = vpop.permute.xlu0 %3102
      %v3105 = vunpack.c.l.b16 %v3039
      %v3106 = vpack.c.b16 %v3105, %v3105
      %3107 = vrot.lane.b32.xlu0 %v3106, 48
      %v3108 = vpop.permute.xlu0 %3107
      %v3110 = vunpack.c.l.b16 %v3011
      %v3111 = vpack.c.b16 %v3110, %v3110
      %3112 = vrot.lane.b32.xlu0 %v3111, 64
      %v3113 = vpop.permute.xlu0 %3112
      %v3115 = vunpack.c.l.b16 %v3037
      %v3116 = vpack.c.b16 %v3115, %v3115
      %3117 = vrot.lane.b32.xlu0 %v3116, 80
      %v3118 = vpop.permute.xlu0 %3117
      %v3120 = vunpack.c.l.b16 %v3015
      %v3121 = vpack.c.b16 %v3120, %v3120
      %3122 = vrot.lane.b32.xlu0 %v3121, 96
      %v3123 = vpop.permute.xlu0 %3122
      %v3125 = vunpack.c.l.b16 %v3041
      %v3126 = vpack.c.b16 %v3125, %v3125
      %3127 = vrot.lane.b32.xlu0 %v3126, 112
      %v3128 = vpop.permute.xlu0 %3127
      %v3130 = vunpack.c.l.b16 %v3085
      %v3131 = vpack.c.b16 %v3130, %v3130
      %3132 = vrot.lane.b32.xlu0 %v3131, 16
      %v3133 = vpop.permute.xlu0 %3132
      %v3135 = vunpack.c.l.b16 %v3065
      %v3136 = vpack.c.b16 %v3135, %v3135
      %3137 = vrot.lane.b32.xlu0 %v3136, 32
      %v3138 = vpop.permute.xlu0 %3137
      %v3140 = vunpack.c.l.b16 %v3091
      %v3141 = vpack.c.b16 %v3140, %v3140
      %3142 = vrot.lane.b32.xlu0 %v3141, 48
      %v3143 = vpop.permute.xlu0 %3142
      %v3145 = vunpack.c.l.b16 %v3063
      %v3146 = vpack.c.b16 %v3145, %v3145
      %3147 = vrot.lane.b32.xlu0 %v3146, 64
      %v3148 = vpop.permute.xlu0 %3147
      %v3150 = vunpack.c.l.b16 %v3089
      %v3151 = vpack.c.b16 %v3150, %v3150
      %3152 = vrot.lane.b32.xlu0 %v3151, 80
      %v3153 = vpop.permute.xlu0 %3152
      %v3155 = vunpack.c.l.b16 %v3067
      %v3156 = vpack.c.b16 %v3155, %v3155
      %3157 = vrot.lane.b32.xlu0 %v3156, 96
      %v3158 = vpop.permute.xlu0 %3157
      %v3160 = vunpack.c.l.b16 %v3093
      %v3161 = vpack.c.b16 %v3160, %v3160
      %3162 = vrot.lane.b32.xlu0 %v3161, 112
      %v3163 = vpop.permute.xlu0 %3162
      %v3166 = vsel %vm659, %v3007, %v3098
      %v3168 = vsel %vm663, %v3166, %v3103
      %v3170 = vsel %vm666, %v3168, %v3108
      %v3172 = vsel %vm669, %v3170, %v3113
      %v3174 = vsel %vm672, %v3172, %v3118
      %v3176 = vsel %vm675, %v3174, %v3123
      %v3178 = vsel %vm678, %v3176, %v3128
      %v3181 = vsel %vm659, %v3059, %v3133
      %v3183 = vsel %vm663, %v3181, %v3138
      %v3185 = vsel %vm666, %v3183, %v3143
      %v3187 = vsel %vm669, %v3185, %v3148
      %v3189 = vsel %vm672, %v3187, %v3153
      %v3191 = vsel %vm675, %v3189, %v3158
      %v3193 = vsel %vm678, %v3191, %v3163
      %v3196 = vunpack.c.l.b16 %v3178
      %v3197 = vunpack.c.l.b16 %v3193
      %v3198 = vpack.c.b16 %v3197, %v3196
      %3200 = vst [vmem:[#allocation3 + $0x20] sm:$0x33] %v3198
      %v3201 = vld [vmem:[%s1] sm:$0x3]
      %v3202 = vld [vmem:[#allocation3] sm:$0xff]
      %v3203 = vld [vmem:[#allocation3 + $0x8] sm:$0xff]
      %v3204 = vld [vmem:[#allocation3 + $0x10] sm:$0xff]
      %v3205 = vld [vmem:[#allocation3 + $0x18] sm:$0xff]
      %v3206 = vld [vmem:[#allocation3 + $0x20] sm:$0x33]
      %v3207 = vld [vmem:[%s2] sm:$0xf]
      %3209 = vset.pattern.permute.xlu0 0
      %3210 = vperm.xlu0 %3209, %v3207
      %v3211 = vpop.permute.xlu0 %3210
      %v3218 = vunpack.c.l.b16 %v3202
      %v3219 = vunpack.c.h.b16 %v3202
      %v3220 = vunpack.c.l.b16 %v3203
      %v3221 = vunpack.c.h.b16 %v3203
      %v3222 = vunpack.c.l.b16 %v3204
      %v3223 = vunpack.c.h.b16 %v3204
      %v3224 = vunpack.c.l.b16 %v3205
      %v3225 = vunpack.c.h.b16 %v3205
      %v3226 = vunpack.c.l.b16 %v3206
      %v3227 = vunpack.c.h.b16 %v3206
      %v3228 = vpack.c.b16 %v3220, %v3218
      %v3229 = vpack.c.b16 %v3221, %v3219
      %v3230 = vpack.c.b16 %v3224, %v3222
      %v3231 = vpack.c.b16 %v3225, %v3223
      %v3232 = vpack.c.b16 %v3226, %v3226
      %v3233 = vpack.c.b16 %v3227, %v3227
      %vm3238 = vcmask 293888
      %v3240 = vsel %vm3238, %v3201, 0
      %vm3242 = vcmask 1041408
      %v3244 = vsel %vm3242, %v3232, 0
      %v3247 = vsel %vm3242, %v3233, 0
      %3249 = vmatpush.bf16.msra.mxu0 0
      %3250 = vmatpush.bf16.msra.mxu0 0
      %3251 = vmatpush.bf16.msra.mxu0 0
      %3252 = vmatpush.bf16.msra.mxu0 0
      %3253 = vmatpush.bf16.msra.mxu0 0
      %3254 = vmatpush.bf16.msra.mxu0 %v3244
      %3255 = vmatpush.bf16.msra.mxu0 %v3230
      %3256 = vmatpush.bf16.msra.mxu0 %v3228
      %3257 = vmatmul.bf16.gmra.mxu0 %v3240
      %v3258 = vpop.f32.mrf.mxu0
      %v3259 = vadd.f32 %v3211, %v3258
      %v3260 = vpop.f32.mrf.mxu0
      %3261 = vdwg.mxu0
      %3262 = vmatpush.bf16.msra.mxu0 0
      %3263 = vmatpush.bf16.msra.mxu0 0
      %3264 = vmatpush.bf16.msra.mxu0 0
      %3265 = vmatpush.bf16.msra.mxu0 0
      %3266 = vmatpush.bf16.msra.mxu0 0
      %3267 = vmatpush.bf16.msra.mxu0 %v3247
      %3268 = vmatpush.bf16.msra.mxu0 %v3231
      %3269 = vmatpush.bf16.msra.mxu0 %v3229
      %3270 = vmatmul.bf16.gmra.mxu0 %v3240
      %v3271 = vpop.f32.mrf.mxu0
      %v3272 = vadd.f32 %v3211, %v3271
      %v3273 = vpop.f32.mrf.mxu0
      %3274 = vdwg.mxu0
      %v3277 = vrot.slane %v3272, 4
      %vm3278 = vcmask 1043456
      %v3279 = vsel %vm3278, %v3259, %v3277
      %3281 = vst [vmem:[%s204] sm:$0xff] %v3279
      %v3282 = vsel %vm3278, %v3259, 0.0
      %v3283 = vsel %vm3278, %v3272, 0.0
      %v3284 = vadd.f32 %v3282, %v3283
      %3285 = vadd.xlane.f32.xlu0 %v3284
      %v3286 = vpop.xlane.xlu0 %3285
      %3287 = vst.msk [vmem:[%s208] sm:$0xf] %vm244, %v3286
      %v3288 = vmul.f32 %v3259, %v3259
      %v3289 = vmul.f32 %v3272, %v3272
      %v3290 = vsel %vm3278, %v3288, 0.0
      %v3291 = vsel %vm3278, %v3289, 0.0
      %v3292 = vadd.f32 %v3290, %v3291
      %3293 = vadd.xlane.f32.xlu0 %v3292
      %v3294 = vpop.xlane.xlu0 %3293
      %vm3295 = vcmask 11272
      %3296 = vst.msk [vmem:[%s208] sm:$0xf] %vm3295, %v3294
      %p3297 = scmp.lt.s32.totalorder %s16, 1
      %s3298 = scalar_select %p3297, %s16, 1
      %s3299 = smul.addr %s3298, 2
      %s3300 = smul.addr %s3299, 4
      %s3301 = scalar_lea.vmem %s3, %s3300
      %p3302 = scmp.lt.s32.totalorder %s16, 1
      %s3303 = scalar_select %p3302, %s16, 1
      %s3304 = smul.addr %s3303, 4
      %s3305 = scalar_lea.vmem %s4, %s3304
      // Predicated region
      $region33: #{resnet_block.2} parent=31 // pred_check
        %p3306 = pneg %p102
      $region34: #{resnet_block.2} parent=31 // pred_check_branch
        %3308 = sbr.rel (%p3306) target = $region36
      $region35: #{resnet_block.2} parent=31 // pred_region
        _
      $region36: #{resnet_block.2} parent=31 // pred_fallthru
        _
      // Predicated region
      $region37: #{resnet_block.2} parent=31 // pred_check
        %p3309 = pneg %p128
      $region38: #{resnet_block.2} parent=31 // pred_check_branch
        %3311 = sbr.rel (%p3309) target = $region40
      $region39: #{resnet_block.2} parent=31 // pred_region
        _
      $region40: #{resnet_block.2} parent=31 // pred_fallthru
        _
    $region32: #{resnet_block.2} parent=5 // pred_fallthru
      _
    %p3312 = scmp.le.s32.totalorder 2, %s11
    // Predicated region
    $region41: #{resnet_block.2} parent=5 // pred_check
      %p3313 = pneg %p3312
    $region42: #{resnet_block.2} parent=5 // pred_check_branch
      %3315 = sbr.rel (%p3313) target = $region44
    $region43: #{resnet_block.2} parent=5 // pred_region
      %s3316 = ssub.s32 %s11, 2
      // Predicated region
      $region45: #{resnet_block.2} parent=43 // pred_check
        %p3317 = pneg %p108
      $region46: #{resnet_block.2} parent=43 // pred_check_branch
        %3319 = sbr.rel (%p3317) target = $region48
      $region47: #{resnet_block.2} parent=43 // pred_region
        %p3320 = scmp.lt.s32.totalorder %s17, 1
        %s3321 = scalar_select %p3320, %s17, 1
        %s3322 = smul.addr %s3321, 2
        %s3323 = smul.addr %s3322, 4
        %s3324 = scalar_lea.vmem %s3, %s3323
      $region48: #{resnet_block.2} parent=43 // pred_fallthru
        _
      // Predicated region
      $region49: #{resnet_block.2} parent=43 // pred_check
        %p3325 = pneg %p134
      $region50: #{resnet_block.2} parent=43 // pred_check_branch
        %3327 = sbr.rel (%p3325) target = $region52
      $region51: #{resnet_block.2} parent=43 // pred_region
        %p3328 = scmp.lt.s32.totalorder %s17, 1
        %s3329 = scalar_select %p3328, %s17, 1
        %s3330 = smul.addr %s3329, 4
        %s3331 = scalar_lea.vmem %s4, %s3330
      $region52: #{resnet_block.2} parent=43 // pred_fallthru
        _
    $region44: #{resnet_block.2} parent=5 // pred_fallthru
      _
  $region6: #{resnet_block.2} parent=0 // loop_footer
    %s15 = sadd.s32 1, %s11
  $region7: #{resnet_block.2} parent=0 // loop_footer_branch
    %10 = sbr.rel target = $region3
  $region8: #{resnet_block.2} parent=0 // loop_exit
    _

// kernel: resnet_block.3
$region0: #{resnet_block.3}
  #allocation0 [shape = 'u32[]', space=smem, size = 0x4, offset = 0x4, fixed_abs, tag = 'smem constant byte address 0x4 - core index']
  #allocation1 [shape = 'u32[72,128]{1,0:T(1,128)}', space=vmem, size = 0x9000, scoped, tag = 'internal scratch']
  #allocation2 [shape = 'bf16[4,18,18]{2,1,0:T(8,128)(2,1)}', space=vmem, size = 0x6000, scoped, tag = 'scratch operand']
  #allocation3 [shape = 'bf16[36,256]{1,0:T(8,128)(2,1)}', space=vmem, size = 0x5000, scoped, tag = 'scratch operand']
  %s0 = inlined_call_operand.vmem [shape: f32[2,4,256], index: 0, kind: input, shape index: {}]
  %s1 = inlined_call_operand.vmem [shape: f32[4,1], index: 1, kind: input, shape index: {}]
  %s2 = inlined_call_operand.vmem [shape: f32[4,1], index: 2, kind: input, shape index: {}]
  %s3 = inlined_call_operand.vmem [shape: bf16[4,36], index: 3, kind: input, shape index: {}]
  %s4 = inlined_call_operand.vmem [shape: f32[4,1], index: 4, kind: input, shape index: {}]
  %s5 = inlined_call_operand.vmem [shape: f32[2,4,256], index: 5, kind: input, shape index: {}]
  %s6 = inlined_call_operand.vmem [shape: f32[2,4,256], index: 6, kind: output, shape index: {}]
  %s7 = sld [smem:[#allocation0]]
  $region57: #{resnet_block.3} parent=0
    _
  %s9 = ssub.s32 1, %s7
  %s10 = scalar_select 0, %s9, %s7
  loop: start=0, step=1, limit=4
  $region2: #{resnet_block.3} parent=0 // loop_pre_header
    _
  $region3: #{resnet_block.3} parent=0 // loop_header
    %s12 = sphi 0, %s16
    %p13 = scmp.ge.s32.totalorder %s12, 4
    %s22 = sphi 0, %s24
    %s25 = sphi 0, %s22
    %s26 = sphi 0, %s25
    %s42 = sphi 0, %s26
    %s46 = sphi 0, %s46
    %s48 = sphi 0, %s46
    %s49 = sphi 0, %s48
    %s63 = sphi 0, %s49
    %s67 = sphi 0, %s67
    %s69 = sphi 0, %s67
    %s70 = sphi 0, %s69
    %s84 = sphi 0, %s70
    %s88 = sphi 0, %s88
    %s90 = sphi 0, %s88
    %s91 = sphi 0, %s90
    %s105 = sphi 0, %s91
    %s109 = sphi 0, %s109
    %s111 = sphi 0, %s109
    %s112 = sphi 0, %s111
    %s126 = sphi 0, %s112
    %s132 = sphi 0, %s134
    %s135 = sphi 0, %s132
    %s136 = sphi 0, %s135
    %s152 = sphi 0, %s136
    %s158 = sphi 0, %s160
    %s161 = sphi 0, %s158
    %s162 = sphi 0, %s161
    %s178 = sphi 0, %s162
  $region4: #{resnet_block.3} parent=0 // loop_header_branch
    %15 = sbr.rel (%p13) target = $region8
  $region5: #{resnet_block.3} parent=0 // loop_body
    %s17 = ssub.s32 %s12, 1
    %s18 = ssub.s32 %s12, 2
    %s19 = sadd.s32 %s12, 1
    %s20 = ssub.s32 %s12, %s19
    %p21 = scmp.eq.s32.totalorder %s20, 0
    %s23 = sadd.s32 %s22, 1
    %s24 = scalar_select %p21, %s22, %s23
    %p27 = pneg %p21
    %p28 = scmp.eq.s32.totalorder %s12, 1
    %p29 = por %p27, %p28
    %p30 = scmp.ne.s32.totalorder %s22, %s25
    %p31 = scmp.eq.s32.totalorder %s12, 0
    %p32 = por %p30, %p31
    %p33 = scmp.ne.s32.totalorder %s22, %s25
    %p34 = scmp.eq.s32.totalorder %s17, 1
    %p35 = por %p33, %p34
    %p36 = scmp.ne.s32.totalorder %s25, %s26
    %p37 = scmp.eq.s32.totalorder %s17, 0
    %p38 = por %p36, %p37
    %p39 = scmp.ne.s32.totalorder %s25, %s26
    %p40 = scmp.eq.s32.totalorder %s18, 1
    %p41 = por %p39, %p40
    %p43 = scmp.ne.s32.totalorder %s26, %s42
    %p44 = scmp.eq.s32.totalorder %s18, 0
    %p45 = por %p43, %p44
    %s47 = sadd.s32 %s46, 1
    %p50 = scmp.eq.s32.totalorder %s12, 1
    %p51 = scmp.ne.s32.totalorder %s46, %s48
    %p52 = scmp.eq.s32.totalorder %s12, 0
    %p53 = por %p51, %p52
    %p54 = scmp.ne.s32.totalorder %s46, %s48
    %p55 = scmp.eq.s32.totalorder %s17, 1
    %p56 = por %p54, %p55
    %p57 = scmp.ne.s32.totalorder %s48, %s49
    %p58 = scmp.eq.s32.totalorder %s17, 0
    %p59 = por %p57, %p58
    %p60 = scmp.ne.s32.totalorder %s48, %s49
    %p61 = scmp.eq.s32.totalorder %s18, 1
    %p62 = por %p60, %p61
    %p64 = scmp.ne.s32.totalorder %s49, %s63
    %p65 = scmp.eq.s32.totalorder %s18, 0
    %p66 = por %p64, %p65
    %s68 = sadd.s32 %s67, 1
    %p71 = scmp.eq.s32.totalorder %s12, 1
    %p72 = scmp.ne.s32.totalorder %s67, %s69
    %p73 = scmp.eq.s32.totalorder %s12, 0
    %p74 = por %p72, %p73
    %p75 = scmp.ne.s32.totalorder %s67, %s69
    %p76 = scmp.eq.s32.totalorder %s17, 1
    %p77 = por %p75, %p76
    %p78 = scmp.ne.s32.totalorder %s69, %s70
    %p79 = scmp.eq.s32.totalorder %s17, 0
    %p80 = por %p78, %p79
    %p81 = scmp.ne.s32.totalorder %s69, %s70
    %p82 = scmp.eq.s32.totalorder %s18, 1
    %p83 = por %p81, %p82
    %p85 = scmp.ne.s32.totalorder %s70, %s84
    %p86 = scmp.eq.s32.totalorder %s18, 0
    %p87 = por %p85, %p86
    %s89 = sadd.s32 %s88, 1
    %p92 = scmp.eq.s32.totalorder %s12, 1
    %p93 = scmp.ne.s32.totalorder %s88, %s90
    %p94 = scmp.eq.s32.totalorder %s12, 0
    %p95 = por %p93, %p94
    %p96 = scmp.ne.s32.totalorder %s88, %s90
    %p97 = scmp.eq.s32.totalorder %s17, 1
    %p98 = por %p96, %p97
    %p99 = scmp.ne.s32.totalorder %s90, %s91
    %p100 = scmp.eq.s32.totalorder %s17, 0
    %p101 = por %p99, %p100
    %p102 = scmp.ne.s32.totalorder %s90, %s91
    %p103 = scmp.eq.s32.totalorder %s18, 1
    %p104 = por %p102, %p103
    %p106 = scmp.ne.s32.totalorder %s91, %s105
    %p107 = scmp.eq.s32.totalorder %s18, 0
    %p108 = por %p106, %p107
    %s110 = sadd.s32 %s109, 1
    %p113 = scmp.eq.s32.totalorder %s12, 1
    %p114 = scmp.ne.s32.totalorder %s109, %s111
    %p115 = scmp.eq.s32.totalorder %s12, 0
    %p116 = por %p114, %p115
    %p117 = scmp.ne.s32.totalorder %s109, %s111
    %p118 = scmp.eq.s32.totalorder %s17, 1
    %p119 = por %p117, %p118
    %p120 = scmp.ne.s32.totalorder %s111, %s112
    %p121 = scmp.eq.s32.totalorder %s17, 0
    %p122 = por %p120, %p121
    %p123 = scmp.ne.s32.totalorder %s111, %s112
    %p124 = scmp.eq.s32.totalorder %s18, 1
    %p125 = por %p123, %p124
    %p127 = scmp.ne.s32.totalorder %s112, %s126
    %p128 = scmp.eq.s32.totalorder %s18, 0
    %p129 = por %p127, %p128
    %s130 = ssub.s32 %s12, %s19
    %p131 = scmp.eq.s32.totalorder %s130, 0
    %s133 = sadd.s32 %s132, 1
    %s134 = scalar_select %p131, %s132, %s133
    %p137 = pneg %p131
    %p138 = scmp.eq.s32.totalorder %s12, 1
    %p139 = por %p137, %p138
    %p140 = scmp.ne.s32.totalorder %s132, %s135
    %p141 = scmp.eq.s32.totalorder %s12, 0
    %p142 = por %p140, %p141
    %p143 = scmp.ne.s32.totalorder %s132, %s135
    %p144 = scmp.eq.s32.totalorder %s17, 1
    %p145 = por %p143, %p144
    %p146 = scmp.ne.s32.totalorder %s135, %s136
    %p147 = scmp.eq.s32.totalorder %s17, 0
    %p148 = por %p146, %p147
    %p149 = scmp.ne.s32.totalorder %s135, %s136
    %p150 = scmp.eq.s32.totalorder %s18, 1
    %p151 = por %p149, %p150
    %p153 = scmp.ne.s32.totalorder %s136, %s152
    %p154 = scmp.eq.s32.totalorder %s18, 0
    %p155 = por %p153, %p154
    %s156 = ssub.s32 %s12, %s19
    %p157 = scmp.eq.s32.totalorder %s156, 0
    %s159 = sadd.s32 %s158, 1
    %s160 = scalar_select %p157, %s158, %s159
    %p163 = pneg %p157
    %p164 = scmp.eq.s32.totalorder %s12, 1
    %p165 = por %p163, %p164
    %p166 = scmp.ne.s32.totalorder %s158, %s161
    %p167 = scmp.eq.s32.totalorder %s12, 0
    %p168 = por %p166, %p167
    %p169 = scmp.ne.s32.totalorder %s158, %s161
    %p170 = scmp.eq.s32.totalorder %s17, 1
    %p171 = por %p169, %p170
    %p172 = scmp.ne.s32.totalorder %s161, %s162
    %p173 = scmp.eq.s32.totalorder %s17, 0
    %p174 = por %p172, %p173
    %p175 = scmp.ne.s32.totalorder %s161, %s162
    %p176 = scmp.eq.s32.totalorder %s18, 1
    %p177 = por %p175, %p176
    %p179 = scmp.ne.s32.totalorder %s162, %s178
    %p180 = scmp.eq.s32.totalorder %s18, 0
    %p181 = por %p179, %p180
    %p182 = scmp.le.s32.totalorder 1, %s12
    %p183 = scmp.lt.s32.totalorder %s12, 3
    %p184 = pnand %p182, %p183
    %p185 = pneg %p184
    // Predicated region
    $region9: #{resnet_block.3} parent=5 // pred_check
      _
    $region10: #{resnet_block.3} parent=5 // pred_check_branch
      %187 = sbr.rel (%p184) target = $region12
    $region11: #{resnet_block.3} parent=5 // pred_region
      %s188 = ssub.s32 %s12, 1
      // Predicated region
      $region13: #{resnet_block.3} parent=11 // pred_check
        %p189 = pneg %p59
      $region14: #{resnet_block.3} parent=11 // pred_check_branch
        %191 = sbr.rel (%p189) target = $region16
      $region15: #{resnet_block.3} parent=11 // pred_region
        _
      $region16: #{resnet_block.3} parent=11 // pred_fallthru
        _
      // Predicated region
      $region17: #{resnet_block.3} parent=11 // pred_check
        %p192 = pneg %p80
      $region18: #{resnet_block.3} parent=11 // pred_check_branch
        %194 = sbr.rel (%p192) target = $region20
      $region19: #{resnet_block.3} parent=11 // pred_region
        _
      $region20: #{resnet_block.3} parent=11 // pred_fallthru
        _
      // Predicated region
      $region21: #{resnet_block.3} parent=11 // pred_check
        %p195 = pneg %p101
      $region22: #{resnet_block.3} parent=11 // pred_check_branch
        %197 = sbr.rel (%p195) target = $region24
      $region23: #{resnet_block.3} parent=11 // pred_region
        _
      $region24: #{resnet_block.3} parent=11 // pred_fallthru
        _
      // Predicated region
      $region25: #{resnet_block.3} parent=11 // pred_check
        %p198 = pneg %p122
      $region26: #{resnet_block.3} parent=11 // pred_check_branch
        %200 = sbr.rel (%p198) target = $region28
      $region27: #{resnet_block.3} parent=11 // pred_region
        _
      $region28: #{resnet_block.3} parent=11 // pred_fallthru
        _
    $region12: #{resnet_block.3} parent=5 // pred_fallthru
      _
    %p201 = scmp.lt.s32.totalorder %s12, 2
    // Predicated region
    $region29: #{resnet_block.3} parent=5 // pred_check
      %p202 = pneg %p201
    $region30: #{resnet_block.3} parent=5 // pred_check_branch
      %204 = sbr.rel (%p202) target = $region32
    $region31: #{resnet_block.3} parent=5 // pred_region
      // Predicated region
      $region33: #{resnet_block.3} parent=31 // pred_check
        %p205 = pneg %p32
      $region34: #{resnet_block.3} parent=31 // pred_check_branch
        %207 = sbr.rel (%p205) target = $region36
      $region35: #{resnet_block.3} parent=31 // pred_region
        %p208 = scmp.lt.s32.totalorder %s12, 1
        %s209 = scalar_select %p208, %s12, 1
        %s210 = smul.addr %s209, 2
        %s211 = smul.addr %s210, 4
        %s212 = scalar_lea.vmem %s0, %s211
      $region36: #{resnet_block.3} parent=31 // pred_fallthru
        _
      // Predicated region
      $region37: #{resnet_block.3} parent=31 // pred_check
        %p213 = pneg %p142
      $region38: #{resnet_block.3} parent=31 // pred_check_branch
        %215 = sbr.rel (%p213) target = $region40
      $region39: #{resnet_block.3} parent=31 // pred_region
        %p216 = scmp.lt.s32.totalorder %s12, 1
        %s217 = scalar_select %p216, %s12, 1
        %s218 = smul.addr %s217, 2
        %s219 = smul.addr %s218, 4
        %s220 = scalar_lea.vmem %s5, %s219
      $region40: #{resnet_block.3} parent=31 // pred_fallthru
        _
    $region32: #{resnet_block.3} parent=5 // pred_fallthru
      _
    %p221 = scmp.le.s32.totalorder 1, %s12
    %p222 = scmp.lt.s32.totalorder %s12, 3
    %p223 = pnand %p221, %p222
    %p224 = pneg %p223
    // Predicated region
    $region41: #{resnet_block.3} parent=5 // pred_check
      _
    $region42: #{resnet_block.3} parent=5 // pred_check_branch
      %226 = sbr.rel (%p223) target = $region44
    $region43: #{resnet_block.3} parent=5 // pred_region
      %s227 = ssub.s32 %s12, 1
      %p228 = scmp.lt.s32.totalorder %s17, 1
      %s229 = scalar_select %p228, %s17, 1
      %s230 = smul.addr %s229, 2
      %s231 = smul.addr %s230, 4
      %s232 = scalar_lea.vmem %s0, %s231
      %p233 = pneg %p38
      %p234 = pneg %p35
      %p235 = pneg %p59
      %p236 = pneg %p56
      %p237 = pneg %p80
      %p238 = pneg %p77
      %p239 = pneg %p101
      %p240 = pneg %p98
      %p241 = pneg %p122
      %p242 = pneg %p119
      %p243 = scmp.lt.s32.totalorder %s17, 1
      %s244 = scalar_select %p243, %s17, 1
      %s245 = smul.addr %s244, 2
      %s246 = smul.addr %s245, 4
      %s247 = scalar_lea.vmem %s5, %s246
      %p248 = pneg %p148
      %p249 = pneg %p145
      %p250 = pneg %p174
      %p251 = pneg %p171
      %p252 = scmp.lt.s32.totalorder %s17, 1
      %s253 = scalar_select %p252, %s17, 1
      %s254 = smul.addr %s253, 2
      %s255 = smul.addr %s254, 4
      %s256 = scalar_lea.vmem %s6, %s255
      %p257 = scmp.lt.s32.totalorder %s17, 1
      %s258 = scalar_select %p257, %s17, 1
      %s259 = smul.addr %s258, 2
      %s260 = smul.addr %s259, 4
      %s261 = scalar_lea.vmem %s0, %s260
      %p262 = scmp.lt.s32.totalorder %s17, 1
      %s263 = scalar_select %p262, %s17, 1
      %s264 = smul.addr %s263, 2
      %s265 = smul.addr %s264, 4
      %s266 = scalar_lea.vmem %s5, %s265
      %p267 = scmp.lt.s32.totalorder %s17, 1
      %s268 = scalar_select %p267, %s17, 1
      %s269 = smul.addr %s268, 2
      %s270 = smul.addr %s269, 4
      %s271 = scalar_lea.vmem %s6, %s270
      %v273 = vld [vmem:[%s261] sm:$0xff]
      %v274 = vld [vmem:[%s1] sm:$0xf]
      %276 = vset.pattern.permute.xlu0 0
      %277 = vperm.xlu0 %276, %v274
      %v278 = vpop.permute.xlu0 %277
      %v280 = vunpack.c.l.s4 839922192
      %v281 = vunpack.c.0.s8 %v280
      %v282 = vperm.slane %v278, %v281
      %v284 = vmul.f32 %v273, %v282
      %v285 = vld [vmem:[%s2] sm:$0xf]
      %287 = vset.pattern.permute.xlu0 0
      %288 = vperm.xlu0 %287, %v285
      %v289 = vpop.permute.xlu0 %288
      %v291 = vunpack.c.l.s4 839922192
      %v292 = vunpack.c.0.s8 %v291
      %v293 = vperm.slane %v289, %v292
      %v295 = vadd.f32 %v284, %v293
      %v296 = vmax.f32 %v295, 0.0
      %vm297 = vcmask 139264
      %vm298 = vsmask.f32 256
      %vm299 = vmand %vm297, %vm298
      %v300 = vld [vmem:[#allocation2] sm:$0x1]
      %v301 = vsel %vm299, 0, %v300
      %302 = vst [vmem:[#allocation2] sm:$0x1] %v301
      %v303 = vld [vmem:[#allocation2 + $0xc] sm:$0x1]
      %v304 = vsel %vm299, 0, %v303
      %305 = vst [vmem:[#allocation2 + $0xc] sm:$0x1] %v304
      %v306 = vld [vmem:[#allocation2 + $0x18] sm:$0x1]
      %v307 = vsel %vm299, 0, %v306
      %308 = vst [vmem:[#allocation2 + $0x18] sm:$0x1] %v307
      %v309 = vld [vmem:[#allocation2 + $0x24] sm:$0x1]
      %v310 = vsel %vm299, 0, %v309
      %311 = vst [vmem:[#allocation2 + $0x24] sm:$0x1] %v310
      %vm312 = vsmask.f32 7938
      %vm313 = vmand %vm297, %vm312
      %v314 = vld [vmem:[#allocation2 + $0x8] sm:$0x1]
      %v315 = vsel %vm313, 0, %v314
      %316 = vst [vmem:[#allocation2 + $0x8] sm:$0x1] %v315
      %v317 = vld [vmem:[#allocation2 + $0x14] sm:$0x1]
      %v318 = vsel %vm313, 0, %v317
      %319 = vst [vmem:[#allocation2 + $0x14] sm:$0x1] %v318
      %v320 = vld [vmem:[#allocation2 + $0x20] sm:$0x1]
      %v321 = vsel %vm313, 0, %v320
      %322 = vst [vmem:[#allocation2 + $0x20] sm:$0x1] %v321
      %v323 = vld [vmem:[#allocation2 + $0x2c] sm:$0x1]
      %v324 = vsel %vm313, 0, %v323
      %325 = vst [vmem:[#allocation2 + $0x2c] sm:$0x1] %v324
      %vm326 = vcmask 3072
      %vm327 = vmand %vm326, %vm312
      %v328 = vld [vmem:[#allocation2] sm:$0xf]
      %v329 = vsel %vm327, 0, %v328
      %330 = vst [vmem:[#allocation2] sm:$0xf] %v329
      %vm331 = vcmask 3072
      %332 = vst.msk [vmem:[#allocation2 + $0x4] sm:$0xf] %vm331, 0
      %vm333 = vcmask 0
      %vm334 = vmand %vm333, %vm298
      %v335 = vld [vmem:[#allocation2 + $0x8] sm:$0x1]
      %v336 = vsel %vm334, 0, %v335
      %337 = vst [vmem:[#allocation2 + $0x8] sm:$0x1] %v336
      %v338 = vld [vmem:[#allocation2 + $0xc] sm:$0xf]
      %v339 = vsel %vm327, 0, %v338
      %340 = vst [vmem:[#allocation2 + $0xc] sm:$0xf] %v339
      %341 = vst.msk [vmem:[#allocation2 + $0x10] sm:$0xf] %vm331, 0
      %v342 = vld [vmem:[#allocation2 + $0x14] sm:$0x1]
      %v343 = vsel %vm334, 0, %v342
      %344 = vst [vmem:[#allocation2 + $0x14] sm:$0x1] %v343
      %v345 = vld [vmem:[#allocation2 + $0x18] sm:$0xf]
      %v346 = vsel %vm327, 0, %v345
      %347 = vst [vmem:[#allocation2 + $0x18] sm:$0xf] %v346
      %348 = vst.msk [vmem:[#allocation2 + $0x1c] sm:$0xf] %vm331, 0
      %v349 = vld [vmem:[#allocation2 + $0x20] sm:$0x1]
      %v350 = vsel %vm334, 0, %v349
      %351 = vst [vmem:[#allocation2 + $0x20] sm:$0x1] %v350
      %v352 = vld [vmem:[#allocation2 + $0x24] sm:$0xf]
      %v353 = vsel %vm327, 0, %v352
      %354 = vst [vmem:[#allocation2 + $0x24] sm:$0xf] %v353
      %355 = vst.msk [vmem:[#allocation2 + $0x28] sm:$0xf] %vm331, 0
      %v356 = vld [vmem:[#allocation2 + $0x2c] sm:$0x1]
      %v357 = vsel %vm334, 0, %v356
      %358 = vst [vmem:[#allocation2 + $0x2c] sm:$0x1] %v357
      %vm359 = vcmask 142472
      %vm360 = vmand %vm359, %vm312
      %v361 = vld [vmem:[#allocation2] sm:$0xf]
      %v362 = vsel %vm360, 0, %v361
      %363 = vst [vmem:[#allocation2] sm:$0xf] %v362
      %vm364 = vcmask 142472
      %365 = vst.msk [vmem:[#allocation2 + $0x4] sm:$0xf] %vm364, 0
      %vm366 = vcmask 139400
      %vm367 = vmand %vm366, %vm298
      %v368 = vld [vmem:[#allocation2 + $0x8] sm:$0x1]
      %v369 = vsel %vm367, 0, %v368
      %370 = vst [vmem:[#allocation2 + $0x8] sm:$0x1] %v369
      %v371 = vld [vmem:[#allocation2 + $0xc] sm:$0xf]
      %v372 = vsel %vm360, 0, %v371
      %373 = vst [vmem:[#allocation2 + $0xc] sm:$0xf] %v372
      %374 = vst.msk [vmem:[#allocation2 + $0x10] sm:$0xf] %vm364, 0
      %v375 = vld [vmem:[#allocation2 + $0x14] sm:$0x1]
      %v376 = vsel %vm367, 0, %v375
      %377 = vst [vmem:[#allocation2 + $0x14] sm:$0x1] %v376
      %v378 = vld [vmem:[#allocation2 + $0x18] sm:$0xf]
      %v379 = vsel %vm360, 0, %v378
      %380 = vst [vmem:[#allocation2 + $0x18] sm:$0xf] %v379
      %381 = vst.msk [vmem:[#allocation2 + $0x1c] sm:$0xf] %vm364, 0
      %v382 = vld [vmem:[#allocation2 + $0x20] sm:$0x1]
      %v383 = vsel %vm367, 0, %v382
      %384 = vst [vmem:[#allocation2 + $0x20] sm:$0x1] %v383
      %v385 = vld [vmem:[#allocation2 + $0x24] sm:$0xf]
      %v386 = vsel %vm360, 0, %v385
      %387 = vst [vmem:[#allocation2 + $0x24] sm:$0xf] %v386
      %388 = vst.msk [vmem:[#allocation2 + $0x28] sm:$0xf] %vm364, 0
      %v389 = vld [vmem:[#allocation2 + $0x2c] sm:$0x1]
      %v390 = vsel %vm367, 0, %v389
      %391 = vst [vmem:[#allocation2 + $0x2c] sm:$0x1] %v390
      %393 = vst [vmem:[#allocation1] ss:$2 sm:$0xff] %v296
      %v394 = vld.sshfl [vmem:[#allocation1] sm:$0xff pattern:$0x75316420]
      %v395 = vld.sshfl [vmem:[#allocation1 + $0x8] sm:$0xff pattern:$0x75316420]
      %v398 = vpack.c.bf16 %v395, %v394
      %v400 = vrot.slane %v398, 4
      %402 = vrot.lane.b32.xlu0 %v398, 112
      %v403 = vpop.permute.xlu0 %402
      %v404 = vrot.slane %v403, 4
      %406 = vrot.lane.b32.xlu0 %v398, 96
      %v407 = vpop.permute.xlu0 %406
      %v408 = vrot.slane %v407, 4
      %410 = vrot.lane.b32.xlu0 %v398, 80
      %v411 = vpop.permute.xlu0 %410
      %v412 = vrot.slane %v411, 4
      %414 = vrot.lane.b32.xlu0 %v398, 64
      %v415 = vpop.permute.xlu0 %414
      %v416 = vrot.slane %v415, 4
      %418 = vrot.lane.b32.xlu0 %v398, 48
      %v419 = vpop.permute.xlu0 %418
      %v420 = vrot.slane %v419, 4
      %422 = vrot.lane.b32.xlu0 %v398, 32
      %v423 = vpop.permute.xlu0 %422
      %v424 = vrot.slane %v423, 4
      %426 = vrot.lane.b32.xlu0 %v398, 16
      %v427 = vpop.permute.xlu0 %426
      %v428 = vrot.slane %v427, 4
      %v437 = vrot.slane %v415, 4
      %vm438 = vcmask 1047556
      %v439 = vsel %vm438, %v437, %v398
      %v441 = vunpack.c.l.s4 1983009808
      %v442 = vunpack.c.0.s8 %v441
      %v443 = vperm.slane %v439, %v442
      %v444 = vrot.slane %v423, 4
      %v445 = vsel %vm438, %v444, %v407
      %v447 = vunpack.c.l.s4 1983009808
      %v448 = vunpack.c.0.s8 %v447
      %v449 = vperm.slane %v445, %v448
      %v450 = vrot.slane %v449, 4
      %v451 = vsel %vm438, %v450, %v443
      %v453 = vunpack.c.l.s4 1934713408
      %v454 = vunpack.c.0.s8 %v453
      %v455 = vperm.slane %v451, %v454
      %v456 = vrot.slane %v455, 4
      %v457 = vsel %vm438, 0, %v456
      %v458 = vrot.slane %v419, 4
      %v459 = vsel %vm438, %v458, %v403
      %v461 = vunpack.c.l.s4 1983009808
      %v462 = vunpack.c.0.s8 %v461
      %v463 = vperm.slane %v459, %v462
      %v464 = vrot.slane %v427, 4
      %v465 = vsel %vm438, %v464, %v411
      %v467 = vunpack.c.l.s4 1983009808
      %v468 = vunpack.c.0.s8 %v467
      %v469 = vperm.slane %v465, %v468
      %v470 = vrot.slane %v469, 4
      %v471 = vsel %vm438, %v470, %v463
      %v473 = vunpack.c.l.s4 1934713408
      %v474 = vunpack.c.0.s8 %v473
      %v475 = vperm.slane %v471, %v474
      %v476 = vrot.slane %v475, 4
      %v477 = vsel %vm438, 0, %v476
      %v478 = vrot.slane %v416, 4
      %v479 = vsel %vm438, %v478, %v400
      %v481 = vunpack.c.l.s4 1983009808
      %v482 = vunpack.c.0.s8 %v481
      %v483 = vperm.slane %v479, %v482
      %v484 = vrot.slane %v424, 4
      %v485 = vsel %vm438, %v484, %v408
      %v487 = vunpack.c.l.s4 1983009808
      %v488 = vunpack.c.0.s8 %v487
      %v489 = vperm.slane %v485, %v488
      %v490 = vrot.slane %v489, 4
      %v491 = vsel %vm438, %v490, %v483
      %v493 = vunpack.c.l.s4 1934713408
      %v494 = vunpack.c.0.s8 %v493
      %v495 = vperm.slane %v491, %v494
      %v496 = vrot.slane %v495, 4
      %v497 = vsel %vm438, 0, %v496
      %v498 = vrot.slane %v420, 4
      %v499 = vsel %vm438, %v498, %v404
      %v501 = vunpack.c.l.s4 1983009808
      %v502 = vunpack.c.0.s8 %v501
      %v503 = vperm.slane %v499, %v502
      %v504 = vrot.slane %v428, 4
      %v505 = vsel %vm438, %v504, %v412
      %v507 = vunpack.c.l.s4 1983009808
      %v508 = vunpack.c.0.s8 %v507
      %v509 = vperm.slane %v505, %v508
      %v510 = vrot.slane %v509, 4
      %v511 = vsel %vm438, %v510, %v503
      %v513 = vunpack.c.l.s4 1934713408
      %v514 = vunpack.c.0.s8 %v513
      %v515 = vperm.slane %v511, %v514
      %v516 = vrot.slane %v515, 4
      %v517 = vsel %vm438, 0, %v516
      %v520 = vpack.i.b16 %v475, %v455
      %v521 = vshrl.u32 %v455, 16
      %v522 = vshrl.u32 %v475, 16
      %v523 = vpack.i.b16 %v522, %v521
      %v526 = vpack.i.b16 %v477, %v457
      %v527 = vshrl.u32 %v457, 16
      %v528 = vshrl.u32 %v477, 16
      %v529 = vpack.i.b16 %v528, %v527
      %v532 = vpack.i.b16 %v515, %v495
      %v533 = vshrl.u32 %v495, 16
      %v534 = vshrl.u32 %v515, 16
      %v535 = vpack.i.b16 %v534, %v533
      %v538 = vpack.i.b16 %v517, %v497
      %v539 = vshrl.u32 %v497, 16
      %v540 = vshrl.u32 %v517, 16
      %v541 = vpack.i.b16 %v540, %v539
      %vm542 = vsmask.f32 4368
      %vm543 = vmor %vm298, %vm542
      %v545 = vshrl.u32 %v520, 16
      %v547 = vrot.slane %v545, 7
      %v548 = vshll.u32 %v520, 16
      %v550 = vor.u32 %v547, %v548
      %v551 = vrot.slane %v547, 4
      %v553 = vshrl.u32 %v532, 16
      %v555 = vrot.slane %v553, 7
      %v556 = vshll.u32 %v532, 16
      %v558 = vor.u32 %v555, %v556
      %v559 = vsel %vm543, %v551, %v558
      %v560 = vrot.slane %v555, 4
      %v562 = vshrl.u32 %v523, 16
      %v564 = vrot.slane %v562, 7
      %v565 = vshll.u32 %v523, 16
      %v567 = vor.u32 %v564, %v565
      %v568 = vrot.slane %v564, 4
      %v570 = vshrl.u32 %v535, 16
      %v572 = vrot.slane %v570, 7
      %v573 = vshll.u32 %v535, 16
      %v575 = vor.u32 %v572, %v573
      %v576 = vsel %vm543, %v568, %v575
      %v577 = vrot.slane %v572, 4
      %v579 = vshrl.u32 %v526, 16
      %v581 = vrot.slane %v579, 7
      %v582 = vshll.u32 %v526, 16
      %v584 = vor.u32 %v581, %v582
      %v585 = vrot.slane %v581, 4
      %v587 = vshrl.u32 %v538, 16
      %v589 = vrot.slane %v587, 7
      %v590 = vshll.u32 %v538, 16
      %v592 = vor.u32 %v589, %v590
      %v593 = vsel %vm543, %v585, %v592
      %v594 = vrot.slane %v589, 4
      %v596 = vshrl.u32 %v529, 16
      %v598 = vrot.slane %v596, 7
      %v599 = vshll.u32 %v529, 16
      %v601 = vor.u32 %v598, %v599
      %v602 = vrot.slane %v598, 4
      %v604 = vshrl.u32 %v541, 16
      %v606 = vrot.slane %v604, 7
      %v607 = vshll.u32 %v541, 16
      %v609 = vor.u32 %v606, %v607
      %v610 = vsel %vm543, %v602, %v609
      %v611 = vrot.slane %v606, 4
      %612 = vrot.lane.b32.xlu0 %v550, 1
      %v613 = vpop.permute.xlu0 %612
      %614 = vrot.lane.b32.xlu0 %v559, 1
      %v615 = vpop.permute.xlu0 %614
      %616 = vrot.lane.b32.xlu0 %v560, 1
      %v617 = vpop.permute.xlu0 %616
      %618 = vrot.lane.b32.xlu0 %v567, 1
      %v619 = vpop.permute.xlu0 %618
      %620 = vrot.lane.b32.xlu0 %v576, 1
      %v621 = vpop.permute.xlu0 %620
      %622 = vrot.lane.b32.xlu0 %v577, 1
      %v623 = vpop.permute.xlu0 %622
      %624 = vrot.lane.b32.xlu0 %v584, 1
      %v625 = vpop.permute.xlu0 %624
      %626 = vrot.lane.b32.xlu0 %v593, 1
      %v627 = vpop.permute.xlu0 %626
      %628 = vrot.lane.b32.xlu0 %v594, 1
      %v629 = vpop.permute.xlu0 %628
      %630 = vrot.lane.b32.xlu0 %v601, 1
      %v631 = vpop.permute.xlu0 %630
      %632 = vrot.lane.b32.xlu0 %v610, 1
      %v633 = vpop.permute.xlu0 %632
      %634 = vrot.lane.b32.xlu0 %v611, 1
      %v635 = vpop.permute.xlu0 %634
      %vm648 = vcmask 134152
      %vm649 = vmand %vm648, %vm312
      %v650 = vld [vmem:[#allocation2] sm:$0xf]
      %v651 = vsel %vm649, %v613, %v650
      %652 = vst [vmem:[#allocation2] sm:$0xf] %v651
      %vm653 = vcmask 134152
      %654 = vst.msk [vmem:[#allocation2 + $0x4] sm:$0xf] %vm653, %v615
      %vm655 = vcmask 131080
      %vm656 = vmand %vm655, %vm298
      %v657 = vld [vmem:[#allocation2 + $0x8] sm:$0x1]
      %v658 = vsel %vm656, %v617, %v657
      %659 = vst [vmem:[#allocation2 + $0x8] sm:$0x1] %v658
      %v660 = vld [vmem:[#allocation2 + $0xc] sm:$0xf]
      %v661 = vsel %vm649, %v619, %v660
      %662 = vst [vmem:[#allocation2 + $0xc] sm:$0xf] %v661
      %663 = vst.msk [vmem:[#allocation2 + $0x10] sm:$0xf] %vm653, %v621
      %v664 = vld [vmem:[#allocation2 + $0x14] sm:$0x1]
      %v665 = vsel %vm656, %v623, %v664
      %666 = vst [vmem:[#allocation2 + $0x14] sm:$0x1] %v665
      %v667 = vld [vmem:[#allocation2 + $0x18] sm:$0xf]
      %v668 = vsel %vm649, %v625, %v667
      %669 = vst [vmem:[#allocation2 + $0x18] sm:$0xf] %v668
      %670 = vst.msk [vmem:[#allocation2 + $0x1c] sm:$0xf] %vm653, %v627
      %v671 = vld [vmem:[#allocation2 + $0x20] sm:$0x1]
      %v672 = vsel %vm656, %v629, %v671
      %673 = vst [vmem:[#allocation2 + $0x20] sm:$0x1] %v672
      %v674 = vld [vmem:[#allocation2 + $0x24] sm:$0xf]
      %v675 = vsel %vm649, %v631, %v674
      %676 = vst [vmem:[#allocation2 + $0x24] sm:$0xf] %v675
      %677 = vst.msk [vmem:[#allocation2 + $0x28] sm:$0xf] %vm653, %v633
      %v678 = vld [vmem:[#allocation2 + $0x2c] sm:$0x1]
      %v679 = vsel %vm656, %v635, %v678
      %680 = vst [vmem:[#allocation2 + $0x2c] sm:$0x1] %v679
      %v681 = vld [vmem:[#allocation2] sm:$0xf]
      %v682 = vld [vmem:[#allocation2 + $0x4] sm:$0xf]
      %v683 = vld [vmem:[#allocation2 + $0xc] sm:$0xf]
      %v684 = vld [vmem:[#allocation2 + $0x10] sm:$0xf]
      %v685 = vld [vmem:[#allocation2 + $0x18] sm:$0xf]
      %v686 = vld [vmem:[#allocation2 + $0x1c] sm:$0xf]
      %v687 = vld [vmem:[#allocation2 + $0x24] sm:$0xf]
      %v688 = vld [vmem:[#allocation2 + $0x28] sm:$0xf]
      %v691 = vpack.i.b16 %v683, %v681
      %v692 = vshrl.u32 %v681, 16
      %v693 = vshrl.u32 %v683, 16
      %v694 = vpack.i.b16 %v693, %v692
      %v697 = vpack.i.b16 %v687, %v685
      %v698 = vshrl.u32 %v685, 16
      %v699 = vshrl.u32 %v687, 16
      %v700 = vpack.i.b16 %v699, %v698
      %v703 = vpack.i.b16 %v684, %v682
      %v704 = vshrl.u32 %v682, 16
      %v705 = vshrl.u32 %v684, 16
      %v706 = vpack.i.b16 %v705, %v704
      %v709 = vpack.i.b16 %v688, %v686
      %v710 = vshrl.u32 %v686, 16
      %v711 = vshrl.u32 %v688, 16
      %v712 = vpack.i.b16 %v711, %v710
      %v715 = vunpack.c.l.s4 1983009808
      %v716 = vunpack.c.0.s8 %v715
      %v717 = vperm.slane %v691, %v716
      %v720 = vunpack.c.l.s4 1983009808
      %v721 = vunpack.c.0.s8 %v720
      %v722 = vperm.slane %v697, %v721
      %v723 = vrot.slane %v722, 4
      %v724 = vsel %vm438, %v723, %v717
      %v725 = vrot.slane %v717, 4
      %v726 = vsel %vm438, %v722, %v725
      %v728 = vunpack.c.l.s4 1934713408
      %v729 = vunpack.c.0.s8 %v728
      %v730 = vperm.slane %v724, %v729
      %v732 = vunpack.c.l.s4 1934713408
      %v733 = vunpack.c.0.s8 %v732
      %v734 = vperm.slane %v726, %v733
      %v735 = vrot.slane %v730, 4
      %v736 = vsel %vm438, 0, %v735
      %v737 = vrot.slane %v734, 4
      %v738 = vsel %vm438, 0, %v737
      %v741 = vunpack.c.l.s4 1983009808
      %v742 = vunpack.c.0.s8 %v741
      %v743 = vperm.slane %v694, %v742
      %v746 = vunpack.c.l.s4 1983009808
      %v747 = vunpack.c.0.s8 %v746
      %v748 = vperm.slane %v700, %v747
      %v749 = vrot.slane %v748, 4
      %v750 = vsel %vm438, %v749, %v743
      %v751 = vrot.slane %v743, 4
      %v752 = vsel %vm438, %v748, %v751
      %v754 = vunpack.c.l.s4 1934713408
      %v755 = vunpack.c.0.s8 %v754
      %v756 = vperm.slane %v750, %v755
      %v758 = vunpack.c.l.s4 1934713408
      %v759 = vunpack.c.0.s8 %v758
      %v760 = vperm.slane %v752, %v759
      %v761 = vrot.slane %v756, 4
      %v762 = vsel %vm438, 0, %v761
      %v763 = vrot.slane %v760, 4
      %v764 = vsel %vm438, 0, %v763
      %v767 = vunpack.c.l.s4 1983009808
      %v768 = vunpack.c.0.s8 %v767
      %v769 = vperm.slane %v703, %v768
      %v772 = vunpack.c.l.s4 1983009808
      %v773 = vunpack.c.0.s8 %v772
      %v774 = vperm.slane %v709, %v773
      %v775 = vrot.slane %v774, 4
      %v776 = vsel %vm438, %v775, %v769
      %v777 = vrot.slane %v769, 4
      %v778 = vsel %vm438, %v774, %v777
      %v780 = vunpack.c.l.s4 1934713408
      %v781 = vunpack.c.0.s8 %v780
      %v782 = vperm.slane %v776, %v781
      %v784 = vunpack.c.l.s4 1934713408
      %v785 = vunpack.c.0.s8 %v784
      %v786 = vperm.slane %v778, %v785
      %v787 = vrot.slane %v782, 4
      %v788 = vsel %vm438, 0, %v787
      %v789 = vrot.slane %v786, 4
      %v790 = vsel %vm438, 0, %v789
      %v793 = vunpack.c.l.s4 1983009808
      %v794 = vunpack.c.0.s8 %v793
      %v795 = vperm.slane %v706, %v794
      %v798 = vunpack.c.l.s4 1983009808
      %v799 = vunpack.c.0.s8 %v798
      %v800 = vperm.slane %v712, %v799
      %v801 = vrot.slane %v800, 4
      %v802 = vsel %vm438, %v801, %v795
      %v803 = vrot.slane %v795, 4
      %v804 = vsel %vm438, %v800, %v803
      %v806 = vunpack.c.l.s4 1934713408
      %v807 = vunpack.c.0.s8 %v806
      %v808 = vperm.slane %v802, %v807
      %v810 = vunpack.c.l.s4 1934713408
      %v811 = vunpack.c.0.s8 %v810
      %v812 = vperm.slane %v804, %v811
      %v813 = vrot.slane %v808, 4
      %v814 = vsel %vm438, 0, %v813
      %v815 = vrot.slane %v812, 4
      %v816 = vsel %vm438, 0, %v815
      %v818 = vunpack.c.l.b16 %v756
      %v819 = vpack.c.b16 %v818, %v818
      %820 = vrot.lane.b32.xlu0 %v819, 16
      %v821 = vpop.permute.xlu0 %820
      %v823 = vunpack.c.l.b16 %v736
      %v824 = vpack.c.b16 %v823, %v823
      %825 = vrot.lane.b32.xlu0 %v824, 32
      %v826 = vpop.permute.xlu0 %825
      %v828 = vunpack.c.l.b16 %v762
      %v829 = vpack.c.b16 %v828, %v828
      %830 = vrot.lane.b32.xlu0 %v829, 48
      %v831 = vpop.permute.xlu0 %830
      %v833 = vunpack.c.l.b16 %v734
      %v834 = vpack.c.b16 %v833, %v833
      %835 = vrot.lane.b32.xlu0 %v834, 64
      %v836 = vpop.permute.xlu0 %835
      %v838 = vunpack.c.l.b16 %v760
      %v839 = vpack.c.b16 %v838, %v838
      %840 = vrot.lane.b32.xlu0 %v839, 80
      %v841 = vpop.permute.xlu0 %840
      %v843 = vunpack.c.l.b16 %v738
      %v844 = vpack.c.b16 %v843, %v843
      %845 = vrot.lane.b32.xlu0 %v844, 96
      %v846 = vpop.permute.xlu0 %845
      %v848 = vunpack.c.l.b16 %v764
      %v849 = vpack.c.b16 %v848, %v848
      %850 = vrot.lane.b32.xlu0 %v849, 112
      %v851 = vpop.permute.xlu0 %850
      %v853 = vunpack.c.l.b16 %v808
      %v854 = vpack.c.b16 %v853, %v853
      %855 = vrot.lane.b32.xlu0 %v854, 16
      %v856 = vpop.permute.xlu0 %855
      %v858 = vunpack.c.l.b16 %v788
      %v859 = vpack.c.b16 %v858, %v858
      %860 = vrot.lane.b32.xlu0 %v859, 32
      %v861 = vpop.permute.xlu0 %860
      %v863 = vunpack.c.l.b16 %v814
      %v864 = vpack.c.b16 %v863, %v863
      %865 = vrot.lane.b32.xlu0 %v864, 48
      %v866 = vpop.permute.xlu0 %865
      %v868 = vunpack.c.l.b16 %v786
      %v869 = vpack.c.b16 %v868, %v868
      %870 = vrot.lane.b32.xlu0 %v869, 64
      %v871 = vpop.permute.xlu0 %870
      %v873 = vunpack.c.l.b16 %v812
      %v874 = vpack.c.b16 %v873, %v873
      %875 = vrot.lane.b32.xlu0 %v874, 80
      %v876 = vpop.permute.xlu0 %875
      %v878 = vunpack.c.l.b16 %v790
      %v879 = vpack.c.b16 %v878, %v878
      %880 = vrot.lane.b32.xlu0 %v879, 96
      %v881 = vpop.permute.xlu0 %880
      %v883 = vunpack.c.l.b16 %v816
      %v884 = vpack.c.b16 %v883, %v883
      %885 = vrot.lane.b32.xlu0 %v884, 112
      %v886 = vpop.permute.xlu0 %885
      %vm887 = vcmask 130048
      %v890 = vsel %vm887, %v730, %v821
      %vm891 = vcmask 261120
      %v893 = vsel %vm891, %v890, %v826
      %vm894 = vcmask 392192
      %v896 = vsel %vm894, %v893, %v831
      %vm897 = vcmask 523264
      %v899 = vsel %vm897, %v896, %v836
      %vm900 = vcmask 654336
      %v902 = vsel %vm900, %v899, %v841
      %vm903 = vcmask 785408
      %v905 = vsel %vm903, %v902, %v846
      %vm906 = vcmask 916480
      %v908 = vsel %vm906, %v905, %v851
      %v911 = vsel %vm887, %v782, %v856
      %v913 = vsel %vm891, %v911, %v861
      %v915 = vsel %vm894, %v913, %v866
      %v917 = vsel %vm897, %v915, %v871
      %v919 = vsel %vm900, %v917, %v876
      %v921 = vsel %vm903, %v919, %v881
      %v923 = vsel %vm906, %v921, %v886
      %v926 = vunpack.c.l.b16 %v908
      %v927 = vunpack.c.l.b16 %v923
      %v928 = vpack.c.b16 %v927, %v926
      %930 = vst [vmem:[#allocation3] sm:$0x33] %v928
      %v931 = vld [vmem:[#allocation2] sm:$0xf]
      %v932 = vld [vmem:[#allocation2 + $0x4] sm:$0xf]
      %v933 = vld [vmem:[#allocation2 + $0xc] sm:$0xf]
      %v934 = vld [vmem:[#allocation2 + $0x10] sm:$0xf]
      %v935 = vld [vmem:[#allocation2 + $0x18] sm:$0xf]
      %v936 = vld [vmem:[#allocation2 + $0x1c] sm:$0xf]
      %v937 = vld [vmem:[#allocation2 + $0x24] sm:$0xf]
      %v938 = vld [vmem:[#allocation2 + $0x28] sm:$0xf]
      %947 = vrot.lane.b32.xlu0 %v931, 127
      %v948 = vpop.permute.xlu0 %947
      %949 = vrot.lane.b32.xlu0 %v932, 127
      %v950 = vpop.permute.xlu0 %949
      %951 = vrot.lane.b32.xlu0 %v933, 127
      %v952 = vpop.permute.xlu0 %951
      %953 = vrot.lane.b32.xlu0 %v934, 127
      %v954 = vpop.permute.xlu0 %953
      %955 = vrot.lane.b32.xlu0 %v935, 127
      %v956 = vpop.permute.xlu0 %955
      %957 = vrot.lane.b32.xlu0 %v936, 127
      %v958 = vpop.permute.xlu0 %957
      %959 = vrot.lane.b32.xlu0 %v937, 127
      %v960 = vpop.permute.xlu0 %959
      %961 = vrot.lane.b32.xlu0 %v938, 127
      %v962 = vpop.permute.xlu0 %961
      %v965 = vpack.i.b16 %v952, %v948
      %v966 = vshrl.u32 %v948, 16
      %v967 = vshrl.u32 %v952, 16
      %v968 = vpack.i.b16 %v967, %v966
      %v971 = vpack.i.b16 %v960, %v956
      %v972 = vshrl.u32 %v956, 16
      %v973 = vshrl.u32 %v960, 16
      %v974 = vpack.i.b16 %v973, %v972
      %v977 = vpack.i.b16 %v954, %v950
      %v978 = vshrl.u32 %v950, 16
      %v979 = vshrl.u32 %v954, 16
      %v980 = vpack.i.b16 %v979, %v978
      %v983 = vpack.i.b16 %v962, %v958
      %v984 = vshrl.u32 %v958, 16
      %v985 = vshrl.u32 %v962, 16
      %v986 = vpack.i.b16 %v985, %v984
      %v989 = vunpack.c.l.s4 1983009808
      %v990 = vunpack.c.0.s8 %v989
      %v991 = vperm.slane %v965, %v990
      %v994 = vunpack.c.l.s4 1983009808
      %v995 = vunpack.c.0.s8 %v994
      %v996 = vperm.slane %v971, %v995
      %v997 = vrot.slane %v996, 4
      %v998 = vsel %vm438, %v997, %v991
      %v999 = vrot.slane %v991, 4
      %v1000 = vsel %vm438, %v996, %v999
      %v1002 = vunpack.c.l.s4 1934713408
      %v1003 = vunpack.c.0.s8 %v1002
      %v1004 = vperm.slane %v998, %v1003
      %v1006 = vunpack.c.l.s4 1934713408
      %v1007 = vunpack.c.0.s8 %v1006
      %v1008 = vperm.slane %v1000, %v1007
      %v1009 = vrot.slane %v1004, 4
      %v1010 = vsel %vm438, 0, %v1009
      %v1011 = vrot.slane %v1008, 4
      %v1012 = vsel %vm438, 0, %v1011
      %v1015 = vunpack.c.l.s4 1983009808
      %v1016 = vunpack.c.0.s8 %v1015
      %v1017 = vperm.slane %v968, %v1016
      %v1020 = vunpack.c.l.s4 1983009808
      %v1021 = vunpack.c.0.s8 %v1020
      %v1022 = vperm.slane %v974, %v1021
      %v1023 = vrot.slane %v1022, 4
      %v1024 = vsel %vm438, %v1023, %v1017
      %v1025 = vrot.slane %v1017, 4
      %v1026 = vsel %vm438, %v1022, %v1025
      %v1028 = vunpack.c.l.s4 1934713408
      %v1029 = vunpack.c.0.s8 %v1028
      %v1030 = vperm.slane %v1024, %v1029
      %v1032 = vunpack.c.l.s4 1934713408
      %v1033 = vunpack.c.0.s8 %v1032
      %v1034 = vperm.slane %v1026, %v1033
      %v1035 = vrot.slane %v1030, 4
      %v1036 = vsel %vm438, 0, %v1035
      %v1037 = vrot.slane %v1034, 4
      %v1038 = vsel %vm438, 0, %v1037
      %v1041 = vunpack.c.l.s4 1983009808
      %v1042 = vunpack.c.0.s8 %v1041
      %v1043 = vperm.slane %v977, %v1042
      %v1046 = vunpack.c.l.s4 1983009808
      %v1047 = vunpack.c.0.s8 %v1046
      %v1048 = vperm.slane %v983, %v1047
      %v1049 = vrot.slane %v1048, 4
      %v1050 = vsel %vm438, %v1049, %v1043
      %v1051 = vrot.slane %v1043, 4
      %v1052 = vsel %vm438, %v1048, %v1051
      %v1054 = vunpack.c.l.s4 1934713408
      %v1055 = vunpack.c.0.s8 %v1054
      %v1056 = vperm.slane %v1050, %v1055
      %v1058 = vunpack.c.l.s4 1934713408
      %v1059 = vunpack.c.0.s8 %v1058
      %v1060 = vperm.slane %v1052, %v1059
      %v1061 = vrot.slane %v1056, 4
      %v1062 = vsel %vm438, 0, %v1061
      %v1063 = vrot.slane %v1060, 4
      %v1064 = vsel %vm438, 0, %v1063
      %v1067 = vunpack.c.l.s4 1983009808
      %v1068 = vunpack.c.0.s8 %v1067
      %v1069 = vperm.slane %v980, %v1068
      %v1072 = vunpack.c.l.s4 1983009808
      %v1073 = vunpack.c.0.s8 %v1072
      %v1074 = vperm.slane %v986, %v1073
      %v1075 = vrot.slane %v1074, 4
      %v1076 = vsel %vm438, %v1075, %v1069
      %v1077 = vrot.slane %v1069, 4
      %v1078 = vsel %vm438, %v1074, %v1077
      %v1080 = vunpack.c.l.s4 1934713408
      %v1081 = vunpack.c.0.s8 %v1080
      %v1082 = vperm.slane %v1076, %v1081
      %v1084 = vunpack.c.l.s4 1934713408
      %v1085 = vunpack.c.0.s8 %v1084
      %v1086 = vperm.slane %v1078, %v1085
      %v1087 = vrot.slane %v1082, 4
      %v1088 = vsel %vm438, 0, %v1087
      %v1089 = vrot.slane %v1086, 4
      %v1090 = vsel %vm438, 0, %v1089
      %v1092 = vunpack.c.l.b16 %v1030
      %v1093 = vpack.c.b16 %v1092, %v1092
      %1094 = vrot.lane.b32.xlu0 %v1093, 16
      %v1095 = vpop.permute.xlu0 %1094
      %v1097 = vunpack.c.l.b16 %v1010
      %v1098 = vpack.c.b16 %v1097, %v1097
      %1099 = vrot.lane.b32.xlu0 %v1098, 32
      %v1100 = vpop.permute.xlu0 %1099
      %v1102 = vunpack.c.l.b16 %v1036
      %v1103 = vpack.c.b16 %v1102, %v1102
      %1104 = vrot.lane.b32.xlu0 %v1103, 48
      %v1105 = vpop.permute.xlu0 %1104
      %v1107 = vunpack.c.l.b16 %v1008
      %v1108 = vpack.c.b16 %v1107, %v1107
      %1109 = vrot.lane.b32.xlu0 %v1108, 64
      %v1110 = vpop.permute.xlu0 %1109
      %v1112 = vunpack.c.l.b16 %v1034
      %v1113 = vpack.c.b16 %v1112, %v1112
      %1114 = vrot.lane.b32.xlu0 %v1113, 80
      %v1115 = vpop.permute.xlu0 %1114
      %v1117 = vunpack.c.l.b16 %v1012
      %v1118 = vpack.c.b16 %v1117, %v1117
      %1119 = vrot.lane.b32.xlu0 %v1118, 96
      %v1120 = vpop.permute.xlu0 %1119
      %v1122 = vunpack.c.l.b16 %v1038
      %v1123 = vpack.c.b16 %v1122, %v1122
      %1124 = vrot.lane.b32.xlu0 %v1123, 112
      %v1125 = vpop.permute.xlu0 %1124
      %v1127 = vunpack.c.l.b16 %v1082
      %v1128 = vpack.c.b16 %v1127, %v1127
      %1129 = vrot.lane.b32.xlu0 %v1128, 16
      %v1130 = vpop.permute.xlu0 %1129
      %v1132 = vunpack.c.l.b16 %v1062
      %v1133 = vpack.c.b16 %v1132, %v1132
      %1134 = vrot.lane.b32.xlu0 %v1133, 32
      %v1135 = vpop.permute.xlu0 %1134
      %v1137 = vunpack.c.l.b16 %v1088
      %v1138 = vpack.c.b16 %v1137, %v1137
      %1139 = vrot.lane.b32.xlu0 %v1138, 48
      %v1140 = vpop.permute.xlu0 %1139
      %v1142 = vunpack.c.l.b16 %v1060
      %v1143 = vpack.c.b16 %v1142, %v1142
      %1144 = vrot.lane.b32.xlu0 %v1143, 64
      %v1145 = vpop.permute.xlu0 %1144
      %v1147 = vunpack.c.l.b16 %v1086
      %v1148 = vpack.c.b16 %v1147, %v1147
      %1149 = vrot.lane.b32.xlu0 %v1148, 80
      %v1150 = vpop.permute.xlu0 %1149
      %v1152 = vunpack.c.l.b16 %v1064
      %v1153 = vpack.c.b16 %v1152, %v1152
      %1154 = vrot.lane.b32.xlu0 %v1153, 96
      %v1155 = vpop.permute.xlu0 %1154
      %v1157 = vunpack.c.l.b16 %v1090
      %v1158 = vpack.c.b16 %v1157, %v1157
      %1159 = vrot.lane.b32.xlu0 %v1158, 112
      %v1160 = vpop.permute.xlu0 %1159
      %v1163 = vsel %vm887, %v1004, %v1095
      %v1165 = vsel %vm891, %v1163, %v1100
      %v1167 = vsel %vm894, %v1165, %v1105
      %v1169 = vsel %vm897, %v1167, %v1110
      %v1171 = vsel %vm900, %v1169, %v1115
      %v1173 = vsel %vm903, %v1171, %v1120
      %v1175 = vsel %vm906, %v1173, %v1125
      %v1178 = vsel %vm887, %v1056, %v1130
      %v1180 = vsel %vm891, %v1178, %v1135
      %v1182 = vsel %vm894, %v1180, %v1140
      %v1184 = vsel %vm897, %v1182, %v1145
      %v1186 = vsel %vm900, %v1184, %v1150
      %v1188 = vsel %vm903, %v1186, %v1155
      %v1190 = vsel %vm906, %v1188, %v1160
      %v1193 = vunpack.c.l.b16 %v1175
      %v1194 = vunpack.c.l.b16 %v1190
      %v1195 = vpack.c.b16 %v1194, %v1193
      %v1196 = vrot.slane %v1195, 6
      %1198 = vst [vmem:[#allocation3] sm:$0xcc] %v1196
      %v1199 = vld [vmem:[#allocation2] sm:$0xf]
      %v1200 = vld [vmem:[#allocation2 + $0x4] sm:$0xf]
      %v1201 = vld [vmem:[#allocation2 + $0xc] sm:$0xf]
      %v1202 = vld [vmem:[#allocation2 + $0x10] sm:$0xf]
      %v1203 = vld [vmem:[#allocation2 + $0x18] sm:$0xf]
      %v1204 = vld [vmem:[#allocation2 + $0x1c] sm:$0xf]
      %v1205 = vld [vmem:[#allocation2 + $0x24] sm:$0xf]
      %v1206 = vld [vmem:[#allocation2 + $0x28] sm:$0xf]
      %1215 = vrot.lane.b32.xlu0 %v1199, 126
      %v1216 = vpop.permute.xlu0 %1215
      %1217 = vrot.lane.b32.xlu0 %v1200, 126
      %v1218 = vpop.permute.xlu0 %1217
      %1219 = vrot.lane.b32.xlu0 %v1201, 126
      %v1220 = vpop.permute.xlu0 %1219
      %1221 = vrot.lane.b32.xlu0 %v1202, 126
      %v1222 = vpop.permute.xlu0 %1221
      %1223 = vrot.lane.b32.xlu0 %v1203, 126
      %v1224 = vpop.permute.xlu0 %1223
      %1225 = vrot.lane.b32.xlu0 %v1204, 126
      %v1226 = vpop.permute.xlu0 %1225
      %1227 = vrot.lane.b32.xlu0 %v1205, 126
      %v1228 = vpop.permute.xlu0 %1227
      %1229 = vrot.lane.b32.xlu0 %v1206, 126
      %v1230 = vpop.permute.xlu0 %1229
      %v1233 = vpack.i.b16 %v1220, %v1216
      %v1234 = vshrl.u32 %v1216, 16
      %v1235 = vshrl.u32 %v1220, 16
      %v1236 = vpack.i.b16 %v1235, %v1234
      %v1239 = vpack.i.b16 %v1228, %v1224
      %v1240 = vshrl.u32 %v1224, 16
      %v1241 = vshrl.u32 %v1228, 16
      %v1242 = vpack.i.b16 %v1241, %v1240
      %v1245 = vpack.i.b16 %v1222, %v1218
      %v1246 = vshrl.u32 %v1218, 16
      %v1247 = vshrl.u32 %v1222, 16
      %v1248 = vpack.i.b16 %v1247, %v1246
      %v1251 = vpack.i.b16 %v1230, %v1226
      %v1252 = vshrl.u32 %v1226, 16
      %v1253 = vshrl.u32 %v1230, 16
      %v1254 = vpack.i.b16 %v1253, %v1252
      %v1257 = vunpack.c.l.s4 1983009808
      %v1258 = vunpack.c.0.s8 %v1257
      %v1259 = vperm.slane %v1233, %v1258
      %v1262 = vunpack.c.l.s4 1983009808
      %v1263 = vunpack.c.0.s8 %v1262
      %v1264 = vperm.slane %v1239, %v1263
      %v1265 = vrot.slane %v1264, 4
      %v1266 = vsel %vm438, %v1265, %v1259
      %v1267 = vrot.slane %v1259, 4
      %v1268 = vsel %vm438, %v1264, %v1267
      %v1270 = vunpack.c.l.s4 1934713408
      %v1271 = vunpack.c.0.s8 %v1270
      %v1272 = vperm.slane %v1266, %v1271
      %v1274 = vunpack.c.l.s4 1934713408
      %v1275 = vunpack.c.0.s8 %v1274
      %v1276 = vperm.slane %v1268, %v1275
      %v1277 = vrot.slane %v1272, 4
      %v1278 = vsel %vm438, 0, %v1277
      %v1279 = vrot.slane %v1276, 4
      %v1280 = vsel %vm438, 0, %v1279
      %v1283 = vunpack.c.l.s4 1983009808
      %v1284 = vunpack.c.0.s8 %v1283
      %v1285 = vperm.slane %v1236, %v1284
      %v1288 = vunpack.c.l.s4 1983009808
      %v1289 = vunpack.c.0.s8 %v1288
      %v1290 = vperm.slane %v1242, %v1289
      %v1291 = vrot.slane %v1290, 4
      %v1292 = vsel %vm438, %v1291, %v1285
      %v1293 = vrot.slane %v1285, 4
      %v1294 = vsel %vm438, %v1290, %v1293
      %v1296 = vunpack.c.l.s4 1934713408
      %v1297 = vunpack.c.0.s8 %v1296
      %v1298 = vperm.slane %v1292, %v1297
      %v1300 = vunpack.c.l.s4 1934713408
      %v1301 = vunpack.c.0.s8 %v1300
      %v1302 = vperm.slane %v1294, %v1301
      %v1303 = vrot.slane %v1298, 4
      %v1304 = vsel %vm438, 0, %v1303
      %v1305 = vrot.slane %v1302, 4
      %v1306 = vsel %vm438, 0, %v1305
      %v1309 = vunpack.c.l.s4 1983009808
      %v1310 = vunpack.c.0.s8 %v1309
      %v1311 = vperm.slane %v1245, %v1310
      %v1314 = vunpack.c.l.s4 1983009808
      %v1315 = vunpack.c.0.s8 %v1314
      %v1316 = vperm.slane %v1251, %v1315
      %v1317 = vrot.slane %v1316, 4
      %v1318 = vsel %vm438, %v1317, %v1311
      %v1319 = vrot.slane %v1311, 4
      %v1320 = vsel %vm438, %v1316, %v1319
      %v1322 = vunpack.c.l.s4 1934713408
      %v1323 = vunpack.c.0.s8 %v1322
      %v1324 = vperm.slane %v1318, %v1323
      %v1326 = vunpack.c.l.s4 1934713408
      %v1327 = vunpack.c.0.s8 %v1326
      %v1328 = vperm.slane %v1320, %v1327
      %v1329 = vrot.slane %v1324, 4
      %v1330 = vsel %vm438, 0, %v1329
      %v1331 = vrot.slane %v1328, 4
      %v1332 = vsel %vm438, 0, %v1331
      %v1335 = vunpack.c.l.s4 1983009808
      %v1336 = vunpack.c.0.s8 %v1335
      %v1337 = vperm.slane %v1248, %v1336
      %v1340 = vunpack.c.l.s4 1983009808
      %v1341 = vunpack.c.0.s8 %v1340
      %v1342 = vperm.slane %v1254, %v1341
      %v1343 = vrot.slane %v1342, 4
      %v1344 = vsel %vm438, %v1343, %v1337
      %v1345 = vrot.slane %v1337, 4
      %v1346 = vsel %vm438, %v1342, %v1345
      %v1348 = vunpack.c.l.s4 1934713408
      %v1349 = vunpack.c.0.s8 %v1348
      %v1350 = vperm.slane %v1344, %v1349
      %v1352 = vunpack.c.l.s4 1934713408
      %v1353 = vunpack.c.0.s8 %v1352
      %v1354 = vperm.slane %v1346, %v1353
      %v1355 = vrot.slane %v1350, 4
      %v1356 = vsel %vm438, 0, %v1355
      %v1357 = vrot.slane %v1354, 4
      %v1358 = vsel %vm438, 0, %v1357
      %v1360 = vunpack.c.l.b16 %v1298
      %v1361 = vpack.c.b16 %v1360, %v1360
      %1362 = vrot.lane.b32.xlu0 %v1361, 16
      %v1363 = vpop.permute.xlu0 %1362
      %v1365 = vunpack.c.l.b16 %v1278
      %v1366 = vpack.c.b16 %v1365, %v1365
      %1367 = vrot.lane.b32.xlu0 %v1366, 32
      %v1368 = vpop.permute.xlu0 %1367
      %v1370 = vunpack.c.l.b16 %v1304
      %v1371 = vpack.c.b16 %v1370, %v1370
      %1372 = vrot.lane.b32.xlu0 %v1371, 48
      %v1373 = vpop.permute.xlu0 %1372
      %v1375 = vunpack.c.l.b16 %v1276
      %v1376 = vpack.c.b16 %v1375, %v1375
      %1377 = vrot.lane.b32.xlu0 %v1376, 64
      %v1378 = vpop.permute.xlu0 %1377
      %v1380 = vunpack.c.l.b16 %v1302
      %v1381 = vpack.c.b16 %v1380, %v1380
      %1382 = vrot.lane.b32.xlu0 %v1381, 80
      %v1383 = vpop.permute.xlu0 %1382
      %v1385 = vunpack.c.l.b16 %v1280
      %v1386 = vpack.c.b16 %v1385, %v1385
      %1387 = vrot.lane.b32.xlu0 %v1386, 96
      %v1388 = vpop.permute.xlu0 %1387
      %v1390 = vunpack.c.l.b16 %v1306
      %v1391 = vpack.c.b16 %v1390, %v1390
      %1392 = vrot.lane.b32.xlu0 %v1391, 112
      %v1393 = vpop.permute.xlu0 %1392
      %v1395 = vunpack.c.l.b16 %v1350
      %v1396 = vpack.c.b16 %v1395, %v1395
      %1397 = vrot.lane.b32.xlu0 %v1396, 16
      %v1398 = vpop.permute.xlu0 %1397
      %v1400 = vunpack.c.l.b16 %v1330
      %v1401 = vpack.c.b16 %v1400, %v1400
      %1402 = vrot.lane.b32.xlu0 %v1401, 32
      %v1403 = vpop.permute.xlu0 %1402
      %v1405 = vunpack.c.l.b16 %v1356
      %v1406 = vpack.c.b16 %v1405, %v1405
      %1407 = vrot.lane.b32.xlu0 %v1406, 48
      %v1408 = vpop.permute.xlu0 %1407
      %v1410 = vunpack.c.l.b16 %v1328
      %v1411 = vpack.c.b16 %v1410, %v1410
      %1412 = vrot.lane.b32.xlu0 %v1411, 64
      %v1413 = vpop.permute.xlu0 %1412
      %v1415 = vunpack.c.l.b16 %v1354
      %v1416 = vpack.c.b16 %v1415, %v1415
      %1417 = vrot.lane.b32.xlu0 %v1416, 80
      %v1418 = vpop.permute.xlu0 %1417
      %v1420 = vunpack.c.l.b16 %v1332
      %v1421 = vpack.c.b16 %v1420, %v1420
      %1422 = vrot.lane.b32.xlu0 %v1421, 96
      %v1423 = vpop.permute.xlu0 %1422
      %v1425 = vunpack.c.l.b16 %v1358
      %v1426 = vpack.c.b16 %v1425, %v1425
      %1427 = vrot.lane.b32.xlu0 %v1426, 112
      %v1428 = vpop.permute.xlu0 %1427
      %v1431 = vsel %vm887, %v1272, %v1363
      %v1433 = vsel %vm891, %v1431, %v1368
      %v1435 = vsel %vm894, %v1433, %v1373
      %v1437 = vsel %vm897, %v1435, %v1378
      %v1439 = vsel %vm900, %v1437, %v1383
      %v1441 = vsel %vm903, %v1439, %v1388
      %v1443 = vsel %vm906, %v1441, %v1393
      %v1446 = vsel %vm887, %v1324, %v1398
      %v1448 = vsel %vm891, %v1446, %v1403
      %v1450 = vsel %vm894, %v1448, %v1408
      %v1452 = vsel %vm897, %v1450, %v1413
      %v1454 = vsel %vm900, %v1452, %v1418
      %v1456 = vsel %vm903, %v1454, %v1423
      %v1458 = vsel %vm906, %v1456, %v1428
      %v1461 = vunpack.c.l.b16 %v1443
      %v1462 = vunpack.c.l.b16 %v1458
      %v1463 = vpack.c.b16 %v1462, %v1461
      %1465 = vst [vmem:[#allocation3 + $0x8] sm:$0x33] %v1463
      %v1466 = vld [vmem:[#allocation2] sm:$0xf]
      %v1467 = vld [vmem:[#allocation2 + $0x4] sm:$0xf]
      %v1468 = vld [vmem:[#allocation2 + $0x8] sm:$0x1]
      %v1469 = vld [vmem:[#allocation2 + $0xc] sm:$0xf]
      %v1470 = vld [vmem:[#allocation2 + $0x10] sm:$0xf]
      %v1471 = vld [vmem:[#allocation2 + $0x14] sm:$0x1]
      %v1472 = vld [vmem:[#allocation2 + $0x18] sm:$0xf]
      %v1473 = vld [vmem:[#allocation2 + $0x1c] sm:$0xf]
      %v1474 = vld [vmem:[#allocation2 + $0x20] sm:$0x1]
      %v1475 = vld [vmem:[#allocation2 + $0x24] sm:$0xf]
      %v1476 = vld [vmem:[#allocation2 + $0x28] sm:$0xf]
      %v1477 = vld [vmem:[#allocation2 + $0x2c] sm:$0x1]
      %vm1478 = vsmask.f32 3328
      %vm1479 = vsmask.f32 7440
      %vm1480 = vmor %vm1478, %vm1479
      %v1482 = vshrl.u32 %v1466, 16
      %v1484 = vrot.slane %v1482, 4
      %v1485 = vshll.u32 %v1466, 16
      %v1487 = vrot.slane %v1485, 5
      %v1488 = vor.u32 %v1484, %v1487
      %v1489 = vrot.slane %v1488, 4
      %v1491 = vshll.u32 %v1467, 16
      %v1493 = vrot.slane %v1491, 5
      %v1494 = vsel %vm1480, %v1489, %v1493
      %v1495 = vshrl.u32 %v1467, 16
      %v1497 = vrot.slane %v1495, 4
      %v1498 = vor.u32 %v1497, %v1493
      %v1499 = vrot.slane %v1498, 4
      %v1501 = vshll.u32 %v1468, 16
      %v1503 = vrot.slane %v1501, 5
      %v1504 = vsel %vm1480, %v1499, %v1503
      %v1506 = vshrl.u32 %v1469, 16
      %v1508 = vrot.slane %v1506, 4
      %v1509 = vshll.u32 %v1469, 16
      %v1511 = vrot.slane %v1509, 5
      %v1512 = vor.u32 %v1508, %v1511
      %v1513 = vrot.slane %v1512, 4
      %v1515 = vshll.u32 %v1470, 16
      %v1517 = vrot.slane %v1515, 5
      %v1518 = vsel %vm1480, %v1513, %v1517
      %v1519 = vshrl.u32 %v1470, 16
      %v1521 = vrot.slane %v1519, 4
      %v1522 = vor.u32 %v1521, %v1517
      %v1523 = vrot.slane %v1522, 4
      %v1525 = vshll.u32 %v1471, 16
      %v1527 = vrot.slane %v1525, 5
      %v1528 = vsel %vm1480, %v1523, %v1527
      %v1530 = vshrl.u32 %v1472, 16
      %v1532 = vrot.slane %v1530, 4
      %v1533 = vshll.u32 %v1472, 16
      %v1535 = vrot.slane %v1533, 5
      %v1536 = vor.u32 %v1532, %v1535
      %v1537 = vrot.slane %v1536, 4
      %v1539 = vshll.u32 %v1473, 16
      %v1541 = vrot.slane %v1539, 5
      %v1542 = vsel %vm1480, %v1537, %v1541
      %v1543 = vshrl.u32 %v1473, 16
      %v1545 = vrot.slane %v1543, 4
      %v1546 = vor.u32 %v1545, %v1541
      %v1547 = vrot.slane %v1546, 4
      %v1549 = vshll.u32 %v1474, 16
      %v1551 = vrot.slane %v1549, 5
      %v1552 = vsel %vm1480, %v1547, %v1551
      %v1554 = vshrl.u32 %v1475, 16
      %v1556 = vrot.slane %v1554, 4
      %v1557 = vshll.u32 %v1475, 16
      %v1559 = vrot.slane %v1557, 5
      %v1560 = vor.u32 %v1556, %v1559
      %v1561 = vrot.slane %v1560, 4
      %v1563 = vshll.u32 %v1476, 16
      %v1565 = vrot.slane %v1563, 5
      %v1566 = vsel %vm1480, %v1561, %v1565
      %v1567 = vshrl.u32 %v1476, 16
      %v1569 = vrot.slane %v1567, 4
      %v1570 = vor.u32 %v1569, %v1565
      %v1571 = vrot.slane %v1570, 4
      %v1573 = vshll.u32 %v1477, 16
      %v1575 = vrot.slane %v1573, 5
      %v1576 = vsel %vm1480, %v1571, %v1575
      %v1579 = vpack.i.b16 %v1518, %v1494
      %v1580 = vshrl.u32 %v1494, 16
      %v1581 = vshrl.u32 %v1518, 16
      %v1582 = vpack.i.b16 %v1581, %v1580
      %v1585 = vpack.i.b16 %v1566, %v1542
      %v1586 = vshrl.u32 %v1542, 16
      %v1587 = vshrl.u32 %v1566, 16
      %v1588 = vpack.i.b16 %v1587, %v1586
      %v1591 = vpack.i.b16 %v1528, %v1504
      %v1592 = vshrl.u32 %v1504, 16
      %v1593 = vshrl.u32 %v1528, 16
      %v1594 = vpack.i.b16 %v1593, %v1592
      %v1597 = vpack.i.b16 %v1576, %v1552
      %v1598 = vshrl.u32 %v1552, 16
      %v1599 = vshrl.u32 %v1576, 16
      %v1600 = vpack.i.b16 %v1599, %v1598
      %v1603 = vunpack.c.l.s4 1983009808
      %v1604 = vunpack.c.0.s8 %v1603
      %v1605 = vperm.slane %v1579, %v1604
      %v1608 = vunpack.c.l.s4 1983009808
      %v1609 = vunpack.c.0.s8 %v1608
      %v1610 = vperm.slane %v1585, %v1609
      %v1611 = vrot.slane %v1610, 4
      %v1612 = vsel %vm438, %v1611, %v1605
      %v1613 = vrot.slane %v1605, 4
      %v1614 = vsel %vm438, %v1610, %v1613
      %v1616 = vunpack.c.l.s4 1934713408
      %v1617 = vunpack.c.0.s8 %v1616
      %v1618 = vperm.slane %v1612, %v1617
      %v1620 = vunpack.c.l.s4 1934713408
      %v1621 = vunpack.c.0.s8 %v1620
      %v1622 = vperm.slane %v1614, %v1621
      %v1623 = vrot.slane %v1618, 4
      %v1624 = vsel %vm438, 0, %v1623
      %v1625 = vrot.slane %v1622, 4
      %v1626 = vsel %vm438, 0, %v1625
      %v1629 = vunpack.c.l.s4 1983009808
      %v1630 = vunpack.c.0.s8 %v1629
      %v1631 = vperm.slane %v1582, %v1630
      %v1634 = vunpack.c.l.s4 1983009808
      %v1635 = vunpack.c.0.s8 %v1634
      %v1636 = vperm.slane %v1588, %v1635
      %v1637 = vrot.slane %v1636, 4
      %v1638 = vsel %vm438, %v1637, %v1631
      %v1639 = vrot.slane %v1631, 4
      %v1640 = vsel %vm438, %v1636, %v1639
      %v1642 = vunpack.c.l.s4 1934713408
      %v1643 = vunpack.c.0.s8 %v1642
      %v1644 = vperm.slane %v1638, %v1643
      %v1646 = vunpack.c.l.s4 1934713408
      %v1647 = vunpack.c.0.s8 %v1646
      %v1648 = vperm.slane %v1640, %v1647
      %v1649 = vrot.slane %v1644, 4
      %v1650 = vsel %vm438, 0, %v1649
      %v1651 = vrot.slane %v1648, 4
      %v1652 = vsel %vm438, 0, %v1651
      %v1655 = vunpack.c.l.s4 1983009808
      %v1656 = vunpack.c.0.s8 %v1655
      %v1657 = vperm.slane %v1591, %v1656
      %v1660 = vunpack.c.l.s4 1983009808
      %v1661 = vunpack.c.0.s8 %v1660
      %v1662 = vperm.slane %v1597, %v1661
      %v1663 = vrot.slane %v1662, 4
      %v1664 = vsel %vm438, %v1663, %v1657
      %v1665 = vrot.slane %v1657, 4
      %v1666 = vsel %vm438, %v1662, %v1665
      %v1668 = vunpack.c.l.s4 1934713408
      %v1669 = vunpack.c.0.s8 %v1668
      %v1670 = vperm.slane %v1664, %v1669
      %v1672 = vunpack.c.l.s4 1934713408
      %v1673 = vunpack.c.0.s8 %v1672
      %v1674 = vperm.slane %v1666, %v1673
      %v1675 = vrot.slane %v1670, 4
      %v1676 = vsel %vm438, 0, %v1675
      %v1677 = vrot.slane %v1674, 4
      %v1678 = vsel %vm438, 0, %v1677
      %v1681 = vunpack.c.l.s4 1983009808
      %v1682 = vunpack.c.0.s8 %v1681
      %v1683 = vperm.slane %v1594, %v1682
      %v1686 = vunpack.c.l.s4 1983009808
      %v1687 = vunpack.c.0.s8 %v1686
      %v1688 = vperm.slane %v1600, %v1687
      %v1689 = vrot.slane %v1688, 4
      %v1690 = vsel %vm438, %v1689, %v1683
      %v1691 = vrot.slane %v1683, 4
      %v1692 = vsel %vm438, %v1688, %v1691
      %v1694 = vunpack.c.l.s4 1934713408
      %v1695 = vunpack.c.0.s8 %v1694
      %v1696 = vperm.slane %v1690, %v1695
      %v1698 = vunpack.c.l.s4 1934713408
      %v1699 = vunpack.c.0.s8 %v1698
      %v1700 = vperm.slane %v1692, %v1699
      %v1701 = vrot.slane %v1696, 4
      %v1702 = vsel %vm438, 0, %v1701
      %v1703 = vrot.slane %v1700, 4
      %v1704 = vsel %vm438, 0, %v1703
      %v1706 = vunpack.c.l.b16 %v1644
      %v1707 = vpack.c.b16 %v1706, %v1706
      %1708 = vrot.lane.b32.xlu0 %v1707, 16
      %v1709 = vpop.permute.xlu0 %1708
      %v1711 = vunpack.c.l.b16 %v1624
      %v1712 = vpack.c.b16 %v1711, %v1711
      %1713 = vrot.lane.b32.xlu0 %v1712, 32
      %v1714 = vpop.permute.xlu0 %1713
      %v1716 = vunpack.c.l.b16 %v1650
      %v1717 = vpack.c.b16 %v1716, %v1716
      %1718 = vrot.lane.b32.xlu0 %v1717, 48
      %v1719 = vpop.permute.xlu0 %1718
      %v1721 = vunpack.c.l.b16 %v1622
      %v1722 = vpack.c.b16 %v1721, %v1721
      %1723 = vrot.lane.b32.xlu0 %v1722, 64
      %v1724 = vpop.permute.xlu0 %1723
      %v1726 = vunpack.c.l.b16 %v1648
      %v1727 = vpack.c.b16 %v1726, %v1726
      %1728 = vrot.lane.b32.xlu0 %v1727, 80
      %v1729 = vpop.permute.xlu0 %1728
      %v1731 = vunpack.c.l.b16 %v1626
      %v1732 = vpack.c.b16 %v1731, %v1731
      %1733 = vrot.lane.b32.xlu0 %v1732, 96
      %v1734 = vpop.permute.xlu0 %1733
      %v1736 = vunpack.c.l.b16 %v1652
      %v1737 = vpack.c.b16 %v1736, %v1736
      %1738 = vrot.lane.b32.xlu0 %v1737, 112
      %v1739 = vpop.permute.xlu0 %1738
      %v1741 = vunpack.c.l.b16 %v1696
      %v1742 = vpack.c.b16 %v1741, %v1741
      %1743 = vrot.lane.b32.xlu0 %v1742, 16
      %v1744 = vpop.permute.xlu0 %1743
      %v1746 = vunpack.c.l.b16 %v1676
      %v1747 = vpack.c.b16 %v1746, %v1746
      %1748 = vrot.lane.b32.xlu0 %v1747, 32
      %v1749 = vpop.permute.xlu0 %1748
      %v1751 = vunpack.c.l.b16 %v1702
      %v1752 = vpack.c.b16 %v1751, %v1751
      %1753 = vrot.lane.b32.xlu0 %v1752, 48
      %v1754 = vpop.permute.xlu0 %1753
      %v1756 = vunpack.c.l.b16 %v1674
      %v1757 = vpack.c.b16 %v1756, %v1756
      %1758 = vrot.lane.b32.xlu0 %v1757, 64
      %v1759 = vpop.permute.xlu0 %1758
      %v1761 = vunpack.c.l.b16 %v1700
      %v1762 = vpack.c.b16 %v1761, %v1761
      %1763 = vrot.lane.b32.xlu0 %v1762, 80
      %v1764 = vpop.permute.xlu0 %1763
      %v1766 = vunpack.c.l.b16 %v1678
      %v1767 = vpack.c.b16 %v1766, %v1766
      %1768 = vrot.lane.b32.xlu0 %v1767, 96
      %v1769 = vpop.permute.xlu0 %1768
      %v1771 = vunpack.c.l.b16 %v1704
      %v1772 = vpack.c.b16 %v1771, %v1771
      %1773 = vrot.lane.b32.xlu0 %v1772, 112
      %v1774 = vpop.permute.xlu0 %1773
      %v1777 = vsel %vm887, %v1618, %v1709
      %v1779 = vsel %vm891, %v1777, %v1714
      %v1781 = vsel %vm894, %v1779, %v1719
      %v1783 = vsel %vm897, %v1781, %v1724
      %v1785 = vsel %vm900, %v1783, %v1729
      %v1787 = vsel %vm903, %v1785, %v1734
      %v1789 = vsel %vm906, %v1787, %v1739
      %v1792 = vsel %vm887, %v1670, %v1744
      %v1794 = vsel %vm891, %v1792, %v1749
      %v1796 = vsel %vm894, %v1794, %v1754
      %v1798 = vsel %vm897, %v1796, %v1759
      %v1800 = vsel %vm900, %v1798, %v1764
      %v1802 = vsel %vm903, %v1800, %v1769
      %v1804 = vsel %vm906, %v1802, %v1774
      %v1807 = vunpack.c.l.b16 %v1789
      %v1808 = vunpack.c.l.b16 %v1804
      %v1809 = vpack.c.b16 %v1808, %v1807
      %v1810 = vrot.slane %v1809, 6
      %1812 = vst [vmem:[#allocation3 + $0x8] sm:$0xcc] %v1810
      %v1813 = vld [vmem:[#allocation2] sm:$0xf]
      %v1814 = vld [vmem:[#allocation2 + $0x4] sm:$0xf]
      %v1815 = vld [vmem:[#allocation2 + $0x8] sm:$0x1]
      %v1816 = vld [vmem:[#allocation2 + $0xc] sm:$0xf]
      %v1817 = vld [vmem:[#allocation2 + $0x10] sm:$0xf]
      %v1818 = vld [vmem:[#allocation2 + $0x14] sm:$0x1]
      %v1819 = vld [vmem:[#allocation2 + $0x18] sm:$0xf]
      %v1820 = vld [vmem:[#allocation2 + $0x1c] sm:$0xf]
      %v1821 = vld [vmem:[#allocation2 + $0x20] sm:$0x1]
      %v1822 = vld [vmem:[#allocation2 + $0x24] sm:$0xf]
      %v1823 = vld [vmem:[#allocation2 + $0x28] sm:$0xf]
      %v1824 = vld [vmem:[#allocation2 + $0x2c] sm:$0x1]
      %v1826 = vshrl.u32 %v1813, 16
      %v1828 = vrot.slane %v1826, 4
      %v1829 = vshll.u32 %v1813, 16
      %v1831 = vrot.slane %v1829, 5
      %v1832 = vor.u32 %v1828, %v1831
      %v1833 = vrot.slane %v1832, 4
      %v1835 = vshll.u32 %v1814, 16
      %v1837 = vrot.slane %v1835, 5
      %v1838 = vsel %vm1480, %v1833, %v1837
      %v1839 = vshrl.u32 %v1814, 16
      %v1841 = vrot.slane %v1839, 4
      %v1842 = vor.u32 %v1841, %v1837
      %v1843 = vrot.slane %v1842, 4
      %v1845 = vshll.u32 %v1815, 16
      %v1847 = vrot.slane %v1845, 5
      %v1848 = vsel %vm1480, %v1843, %v1847
      %v1850 = vshrl.u32 %v1816, 16
      %v1852 = vrot.slane %v1850, 4
      %v1853 = vshll.u32 %v1816, 16
      %v1855 = vrot.slane %v1853, 5
      %v1856 = vor.u32 %v1852, %v1855
      %v1857 = vrot.slane %v1856, 4
      %v1859 = vshll.u32 %v1817, 16
      %v1861 = vrot.slane %v1859, 5
      %v1862 = vsel %vm1480, %v1857, %v1861
      %v1863 = vshrl.u32 %v1817, 16
      %v1865 = vrot.slane %v1863, 4
      %v1866 = vor.u32 %v1865, %v1861
      %v1867 = vrot.slane %v1866, 4
      %v1869 = vshll.u32 %v1818, 16
      %v1871 = vrot.slane %v1869, 5
      %v1872 = vsel %vm1480, %v1867, %v1871
      %v1874 = vshrl.u32 %v1819, 16
      %v1876 = vrot.slane %v1874, 4
      %v1877 = vshll.u32 %v1819, 16
      %v1879 = vrot.slane %v1877, 5
      %v1880 = vor.u32 %v1876, %v1879
      %v1881 = vrot.slane %v1880, 4
      %v1883 = vshll.u32 %v1820, 16
      %v1885 = vrot.slane %v1883, 5
      %v1886 = vsel %vm1480, %v1881, %v1885
      %v1887 = vshrl.u32 %v1820, 16
      %v1889 = vrot.slane %v1887, 4
      %v1890 = vor.u32 %v1889, %v1885
      %v1891 = vrot.slane %v1890, 4
      %v1893 = vshll.u32 %v1821, 16
      %v1895 = vrot.slane %v1893, 5
      %v1896 = vsel %vm1480, %v1891, %v1895
      %v1898 = vshrl.u32 %v1822, 16
      %v1900 = vrot.slane %v1898, 4
      %v1901 = vshll.u32 %v1822, 16
      %v1903 = vrot.slane %v1901, 5
      %v1904 = vor.u32 %v1900, %v1903
      %v1905 = vrot.slane %v1904, 4
      %v1907 = vshll.u32 %v1823, 16
      %v1909 = vrot.slane %v1907, 5
      %v1910 = vsel %vm1480, %v1905, %v1909
      %v1911 = vshrl.u32 %v1823, 16
      %v1913 = vrot.slane %v1911, 4
      %v1914 = vor.u32 %v1913, %v1909
      %v1915 = vrot.slane %v1914, 4
      %v1917 = vshll.u32 %v1824, 16
      %v1919 = vrot.slane %v1917, 5
      %v1920 = vsel %vm1480, %v1915, %v1919
      %1921 = vrot.lane.b32.xlu0 %v1838, 127
      %v1922 = vpop.permute.xlu0 %1921
      %1923 = vrot.lane.b32.xlu0 %v1848, 127
      %v1924 = vpop.permute.xlu0 %1923
      %1925 = vrot.lane.b32.xlu0 %v1862, 127
      %v1926 = vpop.permute.xlu0 %1925
      %1927 = vrot.lane.b32.xlu0 %v1872, 127
      %v1928 = vpop.permute.xlu0 %1927
      %1929 = vrot.lane.b32.xlu0 %v1886, 127
      %v1930 = vpop.permute.xlu0 %1929
      %1931 = vrot.lane.b32.xlu0 %v1896, 127
      %v1932 = vpop.permute.xlu0 %1931
      %1933 = vrot.lane.b32.xlu0 %v1910, 127
      %v1934 = vpop.permute.xlu0 %1933
      %1935 = vrot.lane.b32.xlu0 %v1920, 127
      %v1936 = vpop.permute.xlu0 %1935
      %v1939 = vpack.i.b16 %v1926, %v1922
      %v1940 = vshrl.u32 %v1922, 16
      %v1941 = vshrl.u32 %v1926, 16
      %v1942 = vpack.i.b16 %v1941, %v1940
      %v1945 = vpack.i.b16 %v1934, %v1930
      %v1946 = vshrl.u32 %v1930, 16
      %v1947 = vshrl.u32 %v1934, 16
      %v1948 = vpack.i.b16 %v1947, %v1946
      %v1951 = vpack.i.b16 %v1928, %v1924
      %v1952 = vshrl.u32 %v1924, 16
      %v1953 = vshrl.u32 %v1928, 16
      %v1954 = vpack.i.b16 %v1953, %v1952
      %v1957 = vpack.i.b16 %v1936, %v1932
      %v1958 = vshrl.u32 %v1932, 16
      %v1959 = vshrl.u32 %v1936, 16
      %v1960 = vpack.i.b16 %v1959, %v1958
      %v1963 = vunpack.c.l.s4 1983009808
      %v1964 = vunpack.c.0.s8 %v1963
      %v1965 = vperm.slane %v1939, %v1964
      %v1968 = vunpack.c.l.s4 1983009808
      %v1969 = vunpack.c.0.s8 %v1968
      %v1970 = vperm.slane %v1945, %v1969
      %v1971 = vrot.slane %v1970, 4
      %v1972 = vsel %vm438, %v1971, %v1965
      %v1973 = vrot.slane %v1965, 4
      %v1974 = vsel %vm438, %v1970, %v1973
      %v1976 = vunpack.c.l.s4 1934713408
      %v1977 = vunpack.c.0.s8 %v1976
      %v1978 = vperm.slane %v1972, %v1977
      %v1980 = vunpack.c.l.s4 1934713408
      %v1981 = vunpack.c.0.s8 %v1980
      %v1982 = vperm.slane %v1974, %v1981
      %v1983 = vrot.slane %v1978, 4
      %v1984 = vsel %vm438, 0, %v1983
      %v1985 = vrot.slane %v1982, 4
      %v1986 = vsel %vm438, 0, %v1985
      %v1989 = vunpack.c.l.s4 1983009808
      %v1990 = vunpack.c.0.s8 %v1989
      %v1991 = vperm.slane %v1942, %v1990
      %v1994 = vunpack.c.l.s4 1983009808
      %v1995 = vunpack.c.0.s8 %v1994
      %v1996 = vperm.slane %v1948, %v1995
      %v1997 = vrot.slane %v1996, 4
      %v1998 = vsel %vm438, %v1997, %v1991
      %v1999 = vrot.slane %v1991, 4
      %v2000 = vsel %vm438, %v1996, %v1999
      %v2002 = vunpack.c.l.s4 1934713408
      %v2003 = vunpack.c.0.s8 %v2002
      %v2004 = vperm.slane %v1998, %v2003
      %v2006 = vunpack.c.l.s4 1934713408
      %v2007 = vunpack.c.0.s8 %v2006
      %v2008 = vperm.slane %v2000, %v2007
      %v2009 = vrot.slane %v2004, 4
      %v2010 = vsel %vm438, 0, %v2009
      %v2011 = vrot.slane %v2008, 4
      %v2012 = vsel %vm438, 0, %v2011
      %v2015 = vunpack.c.l.s4 1983009808
      %v2016 = vunpack.c.0.s8 %v2015
      %v2017 = vperm.slane %v1951, %v2016
      %v2020 = vunpack.c.l.s4 1983009808
      %v2021 = vunpack.c.0.s8 %v2020
      %v2022 = vperm.slane %v1957, %v2021
      %v2023 = vrot.slane %v2022, 4
      %v2024 = vsel %vm438, %v2023, %v2017
      %v2025 = vrot.slane %v2017, 4
      %v2026 = vsel %vm438, %v2022, %v2025
      %v2028 = vunpack.c.l.s4 1934713408
      %v2029 = vunpack.c.0.s8 %v2028
      %v2030 = vperm.slane %v2024, %v2029
      %v2032 = vunpack.c.l.s4 1934713408
      %v2033 = vunpack.c.0.s8 %v2032
      %v2034 = vperm.slane %v2026, %v2033
      %v2035 = vrot.slane %v2030, 4
      %v2036 = vsel %vm438, 0, %v2035
      %v2037 = vrot.slane %v2034, 4
      %v2038 = vsel %vm438, 0, %v2037
      %v2041 = vunpack.c.l.s4 1983009808
      %v2042 = vunpack.c.0.s8 %v2041
      %v2043 = vperm.slane %v1954, %v2042
      %v2046 = vunpack.c.l.s4 1983009808
      %v2047 = vunpack.c.0.s8 %v2046
      %v2048 = vperm.slane %v1960, %v2047
      %v2049 = vrot.slane %v2048, 4
      %v2050 = vsel %vm438, %v2049, %v2043
      %v2051 = vrot.slane %v2043, 4
      %v2052 = vsel %vm438, %v2048, %v2051
      %v2054 = vunpack.c.l.s4 1934713408
      %v2055 = vunpack.c.0.s8 %v2054
      %v2056 = vperm.slane %v2050, %v2055
      %v2058 = vunpack.c.l.s4 1934713408
      %v2059 = vunpack.c.0.s8 %v2058
      %v2060 = vperm.slane %v2052, %v2059
      %v2061 = vrot.slane %v2056, 4
      %v2062 = vsel %vm438, 0, %v2061
      %v2063 = vrot.slane %v2060, 4
      %v2064 = vsel %vm438, 0, %v2063
      %v2066 = vunpack.c.l.b16 %v2004
      %v2067 = vpack.c.b16 %v2066, %v2066
      %2068 = vrot.lane.b32.xlu0 %v2067, 16
      %v2069 = vpop.permute.xlu0 %2068
      %v2071 = vunpack.c.l.b16 %v1984
      %v2072 = vpack.c.b16 %v2071, %v2071
      %2073 = vrot.lane.b32.xlu0 %v2072, 32
      %v2074 = vpop.permute.xlu0 %2073
      %v2076 = vunpack.c.l.b16 %v2010
      %v2077 = vpack.c.b16 %v2076, %v2076
      %2078 = vrot.lane.b32.xlu0 %v2077, 48
      %v2079 = vpop.permute.xlu0 %2078
      %v2081 = vunpack.c.l.b16 %v1982
      %v2082 = vpack.c.b16 %v2081, %v2081
      %2083 = vrot.lane.b32.xlu0 %v2082, 64
      %v2084 = vpop.permute.xlu0 %2083
      %v2086 = vunpack.c.l.b16 %v2008
      %v2087 = vpack.c.b16 %v2086, %v2086
      %2088 = vrot.lane.b32.xlu0 %v2087, 80
      %v2089 = vpop.permute.xlu0 %2088
      %v2091 = vunpack.c.l.b16 %v1986
      %v2092 = vpack.c.b16 %v2091, %v2091
      %2093 = vrot.lane.b32.xlu0 %v2092, 96
      %v2094 = vpop.permute.xlu0 %2093
      %v2096 = vunpack.c.l.b16 %v2012
      %v2097 = vpack.c.b16 %v2096, %v2096
      %2098 = vrot.lane.b32.xlu0 %v2097, 112
      %v2099 = vpop.permute.xlu0 %2098
      %v2101 = vunpack.c.l.b16 %v2056
      %v2102 = vpack.c.b16 %v2101, %v2101
      %2103 = vrot.lane.b32.xlu0 %v2102, 16
      %v2104 = vpop.permute.xlu0 %2103
      %v2106 = vunpack.c.l.b16 %v2036
      %v2107 = vpack.c.b16 %v2106, %v2106
      %2108 = vrot.lane.b32.xlu0 %v2107, 32
      %v2109 = vpop.permute.xlu0 %2108
      %v2111 = vunpack.c.l.b16 %v2062
      %v2112 = vpack.c.b16 %v2111, %v2111
      %2113 = vrot.lane.b32.xlu0 %v2112, 48
      %v2114 = vpop.permute.xlu0 %2113
      %v2116 = vunpack.c.l.b16 %v2034
      %v2117 = vpack.c.b16 %v2116, %v2116
      %2118 = vrot.lane.b32.xlu0 %v2117, 64
      %v2119 = vpop.permute.xlu0 %2118
      %v2121 = vunpack.c.l.b16 %v2060
      %v2122 = vpack.c.b16 %v2121, %v2121
      %2123 = vrot.lane.b32.xlu0 %v2122, 80
      %v2124 = vpop.permute.xlu0 %2123
      %v2126 = vunpack.c.l.b16 %v2038
      %v2127 = vpack.c.b16 %v2126, %v2126
      %2128 = vrot.lane.b32.xlu0 %v2127, 96
      %v2129 = vpop.permute.xlu0 %2128
      %v2131 = vunpack.c.l.b16 %v2064
      %v2132 = vpack.c.b16 %v2131, %v2131
      %2133 = vrot.lane.b32.xlu0 %v2132, 112
      %v2134 = vpop.permute.xlu0 %2133
      %v2137 = vsel %vm887, %v1978, %v2069
      %v2139 = vsel %vm891, %v2137, %v2074
      %v2141 = vsel %vm894, %v2139, %v2079
      %v2143 = vsel %vm897, %v2141, %v2084
      %v2145 = vsel %vm900, %v2143, %v2089
      %v2147 = vsel %vm903, %v2145, %v2094
      %v2149 = vsel %vm906, %v2147, %v2099
      %v2152 = vsel %vm887, %v2030, %v2104
      %v2154 = vsel %vm891, %v2152, %v2109
      %v2156 = vsel %vm894, %v2154, %v2114
      %v2158 = vsel %vm897, %v2156, %v2119
      %v2160 = vsel %vm900, %v2158, %v2124
      %v2162 = vsel %vm903, %v2160, %v2129
      %v2164 = vsel %vm906, %v2162, %v2134
      %v2167 = vunpack.c.l.b16 %v2149
      %v2168 = vunpack.c.l.b16 %v2164
      %v2169 = vpack.c.b16 %v2168, %v2167
      %2171 = vst [vmem:[#allocation3 + $0x10] sm:$0x33] %v2169
      %v2172 = vld [vmem:[#allocation2] sm:$0xf]
      %v2173 = vld [vmem:[#allocation2 + $0x4] sm:$0xf]
      %v2174 = vld [vmem:[#allocation2 + $0x8] sm:$0x1]
      %v2175 = vld [vmem:[#allocation2 + $0xc] sm:$0xf]
      %v2176 = vld [vmem:[#allocation2 + $0x10] sm:$0xf]
      %v2177 = vld [vmem:[#allocation2 + $0x14] sm:$0x1]
      %v2178 = vld [vmem:[#allocation2 + $0x18] sm:$0xf]
      %v2179 = vld [vmem:[#allocation2 + $0x1c] sm:$0xf]
      %v2180 = vld [vmem:[#allocation2 + $0x20] sm:$0x1]
      %v2181 = vld [vmem:[#allocation2 + $0x24] sm:$0xf]
      %v2182 = vld [vmem:[#allocation2 + $0x28] sm:$0xf]
      %v2183 = vld [vmem:[#allocation2 + $0x2c] sm:$0x1]
      %v2185 = vshrl.u32 %v2172, 16
      %v2187 = vrot.slane %v2185, 4
      %v2188 = vshll.u32 %v2172, 16
      %v2190 = vrot.slane %v2188, 5
      %v2191 = vor.u32 %v2187, %v2190
      %v2192 = vrot.slane %v2191, 4
      %v2194 = vshll.u32 %v2173, 16
      %v2196 = vrot.slane %v2194, 5
      %v2197 = vsel %vm1480, %v2192, %v2196
      %v2198 = vshrl.u32 %v2173, 16
      %v2200 = vrot.slane %v2198, 4
      %v2201 = vor.u32 %v2200, %v2196
      %v2202 = vrot.slane %v2201, 4
      %v2204 = vshll.u32 %v2174, 16
      %v2206 = vrot.slane %v2204, 5
      %v2207 = vsel %vm1480, %v2202, %v2206
      %v2209 = vshrl.u32 %v2175, 16
      %v2211 = vrot.slane %v2209, 4
      %v2212 = vshll.u32 %v2175, 16
      %v2214 = vrot.slane %v2212, 5
      %v2215 = vor.u32 %v2211, %v2214
      %v2216 = vrot.slane %v2215, 4
      %v2218 = vshll.u32 %v2176, 16
      %v2220 = vrot.slane %v2218, 5
      %v2221 = vsel %vm1480, %v2216, %v2220
      %v2222 = vshrl.u32 %v2176, 16
      %v2224 = vrot.slane %v2222, 4
      %v2225 = vor.u32 %v2224, %v2220
      %v2226 = vrot.slane %v2225, 4
      %v2228 = vshll.u32 %v2177, 16
      %v2230 = vrot.slane %v2228, 5
      %v2231 = vsel %vm1480, %v2226, %v2230
      %v2233 = vshrl.u32 %v2178, 16
      %v2235 = vrot.slane %v2233, 4
      %v2236 = vshll.u32 %v2178, 16
      %v2238 = vrot.slane %v2236, 5
      %v2239 = vor.u32 %v2235, %v2238
      %v2240 = vrot.slane %v2239, 4
      %v2242 = vshll.u32 %v2179, 16
      %v2244 = vrot.slane %v2242, 5
      %v2245 = vsel %vm1480, %v2240, %v2244
      %v2246 = vshrl.u32 %v2179, 16
      %v2248 = vrot.slane %v2246, 4
      %v2249 = vor.u32 %v2248, %v2244
      %v2250 = vrot.slane %v2249, 4
      %v2252 = vshll.u32 %v2180, 16
      %v2254 = vrot.slane %v2252, 5
      %v2255 = vsel %vm1480, %v2250, %v2254
      %v2257 = vshrl.u32 %v2181, 16
      %v2259 = vrot.slane %v2257, 4
      %v2260 = vshll.u32 %v2181, 16
      %v2262 = vrot.slane %v2260, 5
      %v2263 = vor.u32 %v2259, %v2262
      %v2264 = vrot.slane %v2263, 4
      %v2266 = vshll.u32 %v2182, 16
      %v2268 = vrot.slane %v2266, 5
      %v2269 = vsel %vm1480, %v2264, %v2268
      %v2270 = vshrl.u32 %v2182, 16
      %v2272 = vrot.slane %v2270, 4
      %v2273 = vor.u32 %v2272, %v2268
      %v2274 = vrot.slane %v2273, 4
      %v2276 = vshll.u32 %v2183, 16
      %v2278 = vrot.slane %v2276, 5
      %v2279 = vsel %vm1480, %v2274, %v2278
      %2280 = vrot.lane.b32.xlu0 %v2197, 126
      %v2281 = vpop.permute.xlu0 %2280
      %2282 = vrot.lane.b32.xlu0 %v2207, 126
      %v2283 = vpop.permute.xlu0 %2282
      %2284 = vrot.lane.b32.xlu0 %v2221, 126
      %v2285 = vpop.permute.xlu0 %2284
      %2286 = vrot.lane.b32.xlu0 %v2231, 126
      %v2287 = vpop.permute.xlu0 %2286
      %2288 = vrot.lane.b32.xlu0 %v2245, 126
      %v2289 = vpop.permute.xlu0 %2288
      %2290 = vrot.lane.b32.xlu0 %v2255, 126
      %v2291 = vpop.permute.xlu0 %2290
      %2292 = vrot.lane.b32.xlu0 %v2269, 126
      %v2293 = vpop.permute.xlu0 %2292
      %2294 = vrot.lane.b32.xlu0 %v2279, 126
      %v2295 = vpop.permute.xlu0 %2294
      %v2298 = vpack.i.b16 %v2285, %v2281
      %v2299 = vshrl.u32 %v2281, 16
      %v2300 = vshrl.u32 %v2285, 16
      %v2301 = vpack.i.b16 %v2300, %v2299
      %v2304 = vpack.i.b16 %v2293, %v2289
      %v2305 = vshrl.u32 %v2289, 16
      %v2306 = vshrl.u32 %v2293, 16
      %v2307 = vpack.i.b16 %v2306, %v2305
      %v2310 = vpack.i.b16 %v2287, %v2283
      %v2311 = vshrl.u32 %v2283, 16
      %v2312 = vshrl.u32 %v2287, 16
      %v2313 = vpack.i.b16 %v2312, %v2311
      %v2316 = vpack.i.b16 %v2295, %v2291
      %v2317 = vshrl.u32 %v2291, 16
      %v2318 = vshrl.u32 %v2295, 16
      %v2319 = vpack.i.b16 %v2318, %v2317
      %v2322 = vunpack.c.l.s4 1983009808
      %v2323 = vunpack.c.0.s8 %v2322
      %v2324 = vperm.slane %v2298, %v2323
      %v2327 = vunpack.c.l.s4 1983009808
      %v2328 = vunpack.c.0.s8 %v2327
      %v2329 = vperm.slane %v2304, %v2328
      %v2330 = vrot.slane %v2329, 4
      %v2331 = vsel %vm438, %v2330, %v2324
      %v2332 = vrot.slane %v2324, 4
      %v2333 = vsel %vm438, %v2329, %v2332
      %v2335 = vunpack.c.l.s4 1934713408
      %v2336 = vunpack.c.0.s8 %v2335
      %v2337 = vperm.slane %v2331, %v2336
      %v2339 = vunpack.c.l.s4 1934713408
      %v2340 = vunpack.c.0.s8 %v2339
      %v2341 = vperm.slane %v2333, %v2340
      %v2342 = vrot.slane %v2337, 4
      %v2343 = vsel %vm438, 0, %v2342
      %v2344 = vrot.slane %v2341, 4
      %v2345 = vsel %vm438, 0, %v2344
      %v2348 = vunpack.c.l.s4 1983009808
      %v2349 = vunpack.c.0.s8 %v2348
      %v2350 = vperm.slane %v2301, %v2349
      %v2353 = vunpack.c.l.s4 1983009808
      %v2354 = vunpack.c.0.s8 %v2353
      %v2355 = vperm.slane %v2307, %v2354
      %v2356 = vrot.slane %v2355, 4
      %v2357 = vsel %vm438, %v2356, %v2350
      %v2358 = vrot.slane %v2350, 4
      %v2359 = vsel %vm438, %v2355, %v2358
      %v2361 = vunpack.c.l.s4 1934713408
      %v2362 = vunpack.c.0.s8 %v2361
      %v2363 = vperm.slane %v2357, %v2362
      %v2365 = vunpack.c.l.s4 1934713408
      %v2366 = vunpack.c.0.s8 %v2365
      %v2367 = vperm.slane %v2359, %v2366
      %v2368 = vrot.slane %v2363, 4
      %v2369 = vsel %vm438, 0, %v2368
      %v2370 = vrot.slane %v2367, 4
      %v2371 = vsel %vm438, 0, %v2370
      %v2374 = vunpack.c.l.s4 1983009808
      %v2375 = vunpack.c.0.s8 %v2374
      %v2376 = vperm.slane %v2310, %v2375
      %v2379 = vunpack.c.l.s4 1983009808
      %v2380 = vunpack.c.0.s8 %v2379
      %v2381 = vperm.slane %v2316, %v2380
      %v2382 = vrot.slane %v2381, 4
      %v2383 = vsel %vm438, %v2382, %v2376
      %v2384 = vrot.slane %v2376, 4
      %v2385 = vsel %vm438, %v2381, %v2384
      %v2387 = vunpack.c.l.s4 1934713408
      %v2388 = vunpack.c.0.s8 %v2387
      %v2389 = vperm.slane %v2383, %v2388
      %v2391 = vunpack.c.l.s4 1934713408
      %v2392 = vunpack.c.0.s8 %v2391
      %v2393 = vperm.slane %v2385, %v2392
      %v2394 = vrot.slane %v2389, 4
      %v2395 = vsel %vm438, 0, %v2394
      %v2396 = vrot.slane %v2393, 4
      %v2397 = vsel %vm438, 0, %v2396
      %v2400 = vunpack.c.l.s4 1983009808
      %v2401 = vunpack.c.0.s8 %v2400
      %v2402 = vperm.slane %v2313, %v2401
      %v2405 = vunpack.c.l.s4 1983009808
      %v2406 = vunpack.c.0.s8 %v2405
      %v2407 = vperm.slane %v2319, %v2406
      %v2408 = vrot.slane %v2407, 4
      %v2409 = vsel %vm438, %v2408, %v2402
      %v2410 = vrot.slane %v2402, 4
      %v2411 = vsel %vm438, %v2407, %v2410
      %v2413 = vunpack.c.l.s4 1934713408
      %v2414 = vunpack.c.0.s8 %v2413
      %v2415 = vperm.slane %v2409, %v2414
      %v2417 = vunpack.c.l.s4 1934713408
      %v2418 = vunpack.c.0.s8 %v2417
      %v2419 = vperm.slane %v2411, %v2418
      %v2420 = vrot.slane %v2415, 4
      %v2421 = vsel %vm438, 0, %v2420
      %v2422 = vrot.slane %v2419, 4
      %v2423 = vsel %vm438, 0, %v2422
      %v2425 = vunpack.c.l.b16 %v2363
      %v2426 = vpack.c.b16 %v2425, %v2425
      %2427 = vrot.lane.b32.xlu0 %v2426, 16
      %v2428 = vpop.permute.xlu0 %2427
      %v2430 = vunpack.c.l.b16 %v2343
      %v2431 = vpack.c.b16 %v2430, %v2430
      %2432 = vrot.lane.b32.xlu0 %v2431, 32
      %v2433 = vpop.permute.xlu0 %2432
      %v2435 = vunpack.c.l.b16 %v2369
      %v2436 = vpack.c.b16 %v2435, %v2435
      %2437 = vrot.lane.b32.xlu0 %v2436, 48
      %v2438 = vpop.permute.xlu0 %2437
      %v2440 = vunpack.c.l.b16 %v2341
      %v2441 = vpack.c.b16 %v2440, %v2440
      %2442 = vrot.lane.b32.xlu0 %v2441, 64
      %v2443 = vpop.permute.xlu0 %2442
      %v2445 = vunpack.c.l.b16 %v2367
      %v2446 = vpack.c.b16 %v2445, %v2445
      %2447 = vrot.lane.b32.xlu0 %v2446, 80
      %v2448 = vpop.permute.xlu0 %2447
      %v2450 = vunpack.c.l.b16 %v2345
      %v2451 = vpack.c.b16 %v2450, %v2450
      %2452 = vrot.lane.b32.xlu0 %v2451, 96
      %v2453 = vpop.permute.xlu0 %2452
      %v2455 = vunpack.c.l.b16 %v2371
      %v2456 = vpack.c.b16 %v2455, %v2455
      %2457 = vrot.lane.b32.xlu0 %v2456, 112
      %v2458 = vpop.permute.xlu0 %2457
      %v2460 = vunpack.c.l.b16 %v2415
      %v2461 = vpack.c.b16 %v2460, %v2460
      %2462 = vrot.lane.b32.xlu0 %v2461, 16
      %v2463 = vpop.permute.xlu0 %2462
      %v2465 = vunpack.c.l.b16 %v2395
      %v2466 = vpack.c.b16 %v2465, %v2465
      %2467 = vrot.lane.b32.xlu0 %v2466, 32
      %v2468 = vpop.permute.xlu0 %2467
      %v2470 = vunpack.c.l.b16 %v2421
      %v2471 = vpack.c.b16 %v2470, %v2470
      %2472 = vrot.lane.b32.xlu0 %v2471, 48
      %v2473 = vpop.permute.xlu0 %2472
      %v2475 = vunpack.c.l.b16 %v2393
      %v2476 = vpack.c.b16 %v2475, %v2475
      %2477 = vrot.lane.b32.xlu0 %v2476, 64
      %v2478 = vpop.permute.xlu0 %2477
      %v2480 = vunpack.c.l.b16 %v2419
      %v2481 = vpack.c.b16 %v2480, %v2480
      %2482 = vrot.lane.b32.xlu0 %v2481, 80
      %v2483 = vpop.permute.xlu0 %2482
      %v2485 = vunpack.c.l.b16 %v2397
      %v2486 = vpack.c.b16 %v2485, %v2485
      %2487 = vrot.lane.b32.xlu0 %v2486, 96
      %v2488 = vpop.permute.xlu0 %2487
      %v2490 = vunpack.c.l.b16 %v2423
      %v2491 = vpack.c.b16 %v2490, %v2490
      %2492 = vrot.lane.b32.xlu0 %v2491, 112
      %v2493 = vpop.permute.xlu0 %2492
      %v2496 = vsel %vm887, %v2337, %v2428
      %v2498 = vsel %vm891, %v2496, %v2433
      %v2500 = vsel %vm894, %v2498, %v2438
      %v2502 = vsel %vm897, %v2500, %v2443
      %v2504 = vsel %vm900, %v2502, %v2448
      %v2506 = vsel %vm903, %v2504, %v2453
      %v2508 = vsel %vm906, %v2506, %v2458
      %v2511 = vsel %vm887, %v2389, %v2463
      %v2513 = vsel %vm891, %v2511, %v2468
      %v2515 = vsel %vm894, %v2513, %v2473
      %v2517 = vsel %vm897, %v2515, %v2478
      %v2519 = vsel %vm900, %v2517, %v2483
      %v2521 = vsel %vm903, %v2519, %v2488
      %v2523 = vsel %vm906, %v2521, %v2493
      %v2526 = vunpack.c.l.b16 %v2508
      %v2527 = vunpack.c.l.b16 %v2523
      %v2528 = vpack.c.b16 %v2527, %v2526
      %v2529 = vrot.slane %v2528, 6
      %2531 = vst [vmem:[#allocation3 + $0x10] sm:$0xcc] %v2529
      %v2532 = vld [vmem:[#allocation2] sm:$0xe]
      %v2533 = vld [vmem:[#allocation2 + $0x4] sm:$0xf]
      %v2534 = vld [vmem:[#allocation2 + $0x8] sm:$0x1]
      %v2535 = vld [vmem:[#allocation2 + $0xc] sm:$0xe]
      %v2536 = vld [vmem:[#allocation2 + $0x10] sm:$0xf]
      %v2537 = vld [vmem:[#allocation2 + $0x14] sm:$0x1]
      %v2538 = vld [vmem:[#allocation2 + $0x18] sm:$0xe]
      %v2539 = vld [vmem:[#allocation2 + $0x1c] sm:$0xf]
      %v2540 = vld [vmem:[#allocation2 + $0x20] sm:$0x1]
      %v2541 = vld [vmem:[#allocation2 + $0x24] sm:$0xe]
      %v2542 = vld [vmem:[#allocation2 + $0x28] sm:$0xf]
      %v2543 = vld [vmem:[#allocation2 + $0x2c] sm:$0x1]
      %vm2556 = vcmask 1042432
      %vm2557 = vcmask 1046532
      %vm2558 = vmor %vm2556, %vm2557
      %v2559 = vrot.slane %v2532, 5
      %v2560 = vrot.slane %v2559, 4
      %v2561 = vrot.slane %v2533, 5
      %v2562 = vsel %vm2558, %v2560, %v2561
      %v2563 = vrot.slane %v2561, 4
      %v2564 = vrot.slane %v2534, 5
      %v2565 = vsel %vm2558, %v2563, %v2564
      %v2566 = vrot.slane %v2535, 5
      %v2567 = vrot.slane %v2566, 4
      %v2568 = vrot.slane %v2536, 5
      %v2569 = vsel %vm2558, %v2567, %v2568
      %v2570 = vrot.slane %v2568, 4
      %v2571 = vrot.slane %v2537, 5
      %v2572 = vsel %vm2558, %v2570, %v2571
      %v2573 = vrot.slane %v2538, 5
      %v2574 = vrot.slane %v2573, 4
      %v2575 = vrot.slane %v2539, 5
      %v2576 = vsel %vm2558, %v2574, %v2575
      %v2577 = vrot.slane %v2575, 4
      %v2578 = vrot.slane %v2540, 5
      %v2579 = vsel %vm2558, %v2577, %v2578
      %v2580 = vrot.slane %v2541, 5
      %v2581 = vrot.slane %v2580, 4
      %v2582 = vrot.slane %v2542, 5
      %v2583 = vsel %vm2558, %v2581, %v2582
      %v2584 = vrot.slane %v2582, 4
      %v2585 = vrot.slane %v2543, 5
      %v2586 = vsel %vm2558, %v2584, %v2585
      %v2589 = vpack.i.b16 %v2569, %v2562
      %v2590 = vshrl.u32 %v2562, 16
      %v2591 = vshrl.u32 %v2569, 16
      %v2592 = vpack.i.b16 %v2591, %v2590
      %v2595 = vpack.i.b16 %v2583, %v2576
      %v2596 = vshrl.u32 %v2576, 16
      %v2597 = vshrl.u32 %v2583, 16
      %v2598 = vpack.i.b16 %v2597, %v2596
      %v2601 = vpack.i.b16 %v2572, %v2565
      %v2602 = vshrl.u32 %v2565, 16
      %v2603 = vshrl.u32 %v2572, 16
      %v2604 = vpack.i.b16 %v2603, %v2602
      %v2607 = vpack.i.b16 %v2586, %v2579
      %v2608 = vshrl.u32 %v2579, 16
      %v2609 = vshrl.u32 %v2586, 16
      %v2610 = vpack.i.b16 %v2609, %v2608
      %v2613 = vunpack.c.l.s4 1983009808
      %v2614 = vunpack.c.0.s8 %v2613
      %v2615 = vperm.slane %v2589, %v2614
      %v2618 = vunpack.c.l.s4 1983009808
      %v2619 = vunpack.c.0.s8 %v2618
      %v2620 = vperm.slane %v2595, %v2619
      %v2621 = vrot.slane %v2620, 4
      %v2622 = vsel %vm438, %v2621, %v2615
      %v2623 = vrot.slane %v2615, 4
      %v2624 = vsel %vm438, %v2620, %v2623
      %v2626 = vunpack.c.l.s4 1934713408
      %v2627 = vunpack.c.0.s8 %v2626
      %v2628 = vperm.slane %v2622, %v2627
      %v2630 = vunpack.c.l.s4 1934713408
      %v2631 = vunpack.c.0.s8 %v2630
      %v2632 = vperm.slane %v2624, %v2631
      %v2633 = vrot.slane %v2628, 4
      %v2634 = vsel %vm438, 0, %v2633
      %v2635 = vrot.slane %v2632, 4
      %v2636 = vsel %vm438, 0, %v2635
      %v2639 = vunpack.c.l.s4 1983009808
      %v2640 = vunpack.c.0.s8 %v2639
      %v2641 = vperm.slane %v2592, %v2640
      %v2644 = vunpack.c.l.s4 1983009808
      %v2645 = vunpack.c.0.s8 %v2644
      %v2646 = vperm.slane %v2598, %v2645
      %v2647 = vrot.slane %v2646, 4
      %v2648 = vsel %vm438, %v2647, %v2641
      %v2649 = vrot.slane %v2641, 4
      %v2650 = vsel %vm438, %v2646, %v2649
      %v2652 = vunpack.c.l.s4 1934713408
      %v2653 = vunpack.c.0.s8 %v2652
      %v2654 = vperm.slane %v2648, %v2653
      %v2656 = vunpack.c.l.s4 1934713408
      %v2657 = vunpack.c.0.s8 %v2656
      %v2658 = vperm.slane %v2650, %v2657
      %v2659 = vrot.slane %v2654, 4
      %v2660 = vsel %vm438, 0, %v2659
      %v2661 = vrot.slane %v2658, 4
      %v2662 = vsel %vm438, 0, %v2661
      %v2665 = vunpack.c.l.s4 1983009808
      %v2666 = vunpack.c.0.s8 %v2665
      %v2667 = vperm.slane %v2601, %v2666
      %v2670 = vunpack.c.l.s4 1983009808
      %v2671 = vunpack.c.0.s8 %v2670
      %v2672 = vperm.slane %v2607, %v2671
      %v2673 = vrot.slane %v2672, 4
      %v2674 = vsel %vm438, %v2673, %v2667
      %v2675 = vrot.slane %v2667, 4
      %v2676 = vsel %vm438, %v2672, %v2675
      %v2678 = vunpack.c.l.s4 1934713408
      %v2679 = vunpack.c.0.s8 %v2678
      %v2680 = vperm.slane %v2674, %v2679
      %v2682 = vunpack.c.l.s4 1934713408
      %v2683 = vunpack.c.0.s8 %v2682
      %v2684 = vperm.slane %v2676, %v2683
      %v2685 = vrot.slane %v2680, 4
      %v2686 = vsel %vm438, 0, %v2685
      %v2687 = vrot.slane %v2684, 4
      %v2688 = vsel %vm438, 0, %v2687
      %v2691 = vunpack.c.l.s4 1983009808
      %v2692 = vunpack.c.0.s8 %v2691
      %v2693 = vperm.slane %v2604, %v2692
      %v2696 = vunpack.c.l.s4 1983009808
      %v2697 = vunpack.c.0.s8 %v2696
      %v2698 = vperm.slane %v2610, %v2697
      %v2699 = vrot.slane %v2698, 4
      %v2700 = vsel %vm438, %v2699, %v2693
      %v2701 = vrot.slane %v2693, 4
      %v2702 = vsel %vm438, %v2698, %v2701
      %v2704 = vunpack.c.l.s4 1934713408
      %v2705 = vunpack.c.0.s8 %v2704
      %v2706 = vperm.slane %v2700, %v2705
      %v2708 = vunpack.c.l.s4 1934713408
      %v2709 = vunpack.c.0.s8 %v2708
      %v2710 = vperm.slane %v2702, %v2709
      %v2711 = vrot.slane %v2706, 4
      %v2712 = vsel %vm438, 0, %v2711
      %v2713 = vrot.slane %v2710, 4
      %v2714 = vsel %vm438, 0, %v2713
      %v2716 = vunpack.c.l.b16 %v2654
      %v2717 = vpack.c.b16 %v2716, %v2716
      %2718 = vrot.lane.b32.xlu0 %v2717, 16
      %v2719 = vpop.permute.xlu0 %2718
      %v2721 = vunpack.c.l.b16 %v2634
      %v2722 = vpack.c.b16 %v2721, %v2721
      %2723 = vrot.lane.b32.xlu0 %v2722, 32
      %v2724 = vpop.permute.xlu0 %2723
      %v2726 = vunpack.c.l.b16 %v2660
      %v2727 = vpack.c.b16 %v2726, %v2726
      %2728 = vrot.lane.b32.xlu0 %v2727, 48
      %v2729 = vpop.permute.xlu0 %2728
      %v2731 = vunpack.c.l.b16 %v2632
      %v2732 = vpack.c.b16 %v2731, %v2731
      %2733 = vrot.lane.b32.xlu0 %v2732, 64
      %v2734 = vpop.permute.xlu0 %2733
      %v2736 = vunpack.c.l.b16 %v2658
      %v2737 = vpack.c.b16 %v2736, %v2736
      %2738 = vrot.lane.b32.xlu0 %v2737, 80
      %v2739 = vpop.permute.xlu0 %2738
      %v2741 = vunpack.c.l.b16 %v2636
      %v2742 = vpack.c.b16 %v2741, %v2741
      %2743 = vrot.lane.b32.xlu0 %v2742, 96
      %v2744 = vpop.permute.xlu0 %2743
      %v2746 = vunpack.c.l.b16 %v2662
      %v2747 = vpack.c.b16 %v2746, %v2746
      %2748 = vrot.lane.b32.xlu0 %v2747, 112
      %v2749 = vpop.permute.xlu0 %2748
      %v2751 = vunpack.c.l.b16 %v2706
      %v2752 = vpack.c.b16 %v2751, %v2751
      %2753 = vrot.lane.b32.xlu0 %v2752, 16
      %v2754 = vpop.permute.xlu0 %2753
      %v2756 = vunpack.c.l.b16 %v2686
      %v2757 = vpack.c.b16 %v2756, %v2756
      %2758 = vrot.lane.b32.xlu0 %v2757, 32
      %v2759 = vpop.permute.xlu0 %2758
      %v2761 = vunpack.c.l.b16 %v2712
      %v2762 = vpack.c.b16 %v2761, %v2761
      %2763 = vrot.lane.b32.xlu0 %v2762, 48
      %v2764 = vpop.permute.xlu0 %2763
      %v2766 = vunpack.c.l.b16 %v2684
      %v2767 = vpack.c.b16 %v2766, %v2766
      %2768 = vrot.lane.b32.xlu0 %v2767, 64
      %v2769 = vpop.permute.xlu0 %2768
      %v2771 = vunpack.c.l.b16 %v2710
      %v2772 = vpack.c.b16 %v2771, %v2771
      %2773 = vrot.lane.b32.xlu0 %v2772, 80
      %v2774 = vpop.permute.xlu0 %2773
      %v2776 = vunpack.c.l.b16 %v2688
      %v2777 = vpack.c.b16 %v2776, %v2776
      %2778 = vrot.lane.b32.xlu0 %v2777, 96
      %v2779 = vpop.permute.xlu0 %2778
      %v2781 = vunpack.c.l.b16 %v2714
      %v2782 = vpack.c.b16 %v2781, %v2781
      %2783 = vrot.lane.b32.xlu0 %v2782, 112
      %v2784 = vpop.permute.xlu0 %2783
      %v2787 = vsel %vm887, %v2628, %v2719
      %v2789 = vsel %vm891, %v2787, %v2724
      %v2791 = vsel %vm894, %v2789, %v2729
      %v2793 = vsel %vm897, %v2791, %v2734
      %v2795 = vsel %vm900, %v2793, %v2739
      %v2797 = vsel %vm903, %v2795, %v2744
      %v2799 = vsel %vm906, %v2797, %v2749
      %v2802 = vsel %vm887, %v2680, %v2754
      %v2804 = vsel %vm891, %v2802, %v2759
      %v2806 = vsel %vm894, %v2804, %v2764
      %v2808 = vsel %vm897, %v2806, %v2769
      %v2810 = vsel %vm900, %v2808, %v2774
      %v2812 = vsel %vm903, %v2810, %v2779
      %v2814 = vsel %vm906, %v2812, %v2784
      %v2817 = vunpack.c.l.b16 %v2799
      %v2818 = vunpack.c.l.b16 %v2814
      %v2819 = vpack.c.b16 %v2818, %v2817
      %2821 = vst [vmem:[#allocation3 + $0x18] sm:$0x33] %v2819
      %v2822 = vld [vmem:[#allocation2] sm:$0xe]
      %v2823 = vld [vmem:[#allocation2 + $0x4] sm:$0xf]
      %v2824 = vld [vmem:[#allocation2 + $0x8] sm:$0x1]
      %v2825 = vld [vmem:[#allocation2 + $0xc] sm:$0xe]
      %v2826 = vld [vmem:[#allocation2 + $0x10] sm:$0xf]
      %v2827 = vld [vmem:[#allocation2 + $0x14] sm:$0x1]
      %v2828 = vld [vmem:[#allocation2 + $0x18] sm:$0xe]
      %v2829 = vld [vmem:[#allocation2 + $0x1c] sm:$0xf]
      %v2830 = vld [vmem:[#allocation2 + $0x20] sm:$0x1]
      %v2831 = vld [vmem:[#allocation2 + $0x24] sm:$0xe]
      %v2832 = vld [vmem:[#allocation2 + $0x28] sm:$0xf]
      %v2833 = vld [vmem:[#allocation2 + $0x2c] sm:$0x1]
      %v2846 = vrot.slane %v2822, 5
      %v2847 = vrot.slane %v2846, 4
      %v2848 = vrot.slane %v2823, 5
      %v2849 = vsel %vm2558, %v2847, %v2848
      %v2850 = vrot.slane %v2848, 4
      %v2851 = vrot.slane %v2824, 5
      %v2852 = vsel %vm2558, %v2850, %v2851
      %v2853 = vrot.slane %v2825, 5
      %v2854 = vrot.slane %v2853, 4
      %v2855 = vrot.slane %v2826, 5
      %v2856 = vsel %vm2558, %v2854, %v2855
      %v2857 = vrot.slane %v2855, 4
      %v2858 = vrot.slane %v2827, 5
      %v2859 = vsel %vm2558, %v2857, %v2858
      %v2860 = vrot.slane %v2828, 5
      %v2861 = vrot.slane %v2860, 4
      %v2862 = vrot.slane %v2829, 5
      %v2863 = vsel %vm2558, %v2861, %v2862
      %v2864 = vrot.slane %v2862, 4
      %v2865 = vrot.slane %v2830, 5
      %v2866 = vsel %vm2558, %v2864, %v2865
      %v2867 = vrot.slane %v2831, 5
      %v2868 = vrot.slane %v2867, 4
      %v2869 = vrot.slane %v2832, 5
      %v2870 = vsel %vm2558, %v2868, %v2869
      %v2871 = vrot.slane %v2869, 4
      %v2872 = vrot.slane %v2833, 5
      %v2873 = vsel %vm2558, %v2871, %v2872
      %2874 = vrot.lane.b32.xlu0 %v2849, 127
      %v2875 = vpop.permute.xlu0 %2874
      %2876 = vrot.lane.b32.xlu0 %v2852, 127
      %v2877 = vpop.permute.xlu0 %2876
      %2878 = vrot.lane.b32.xlu0 %v2856, 127
      %v2879 = vpop.permute.xlu0 %2878
      %2880 = vrot.lane.b32.xlu0 %v2859, 127
      %v2881 = vpop.permute.xlu0 %2880
      %2882 = vrot.lane.b32.xlu0 %v2863, 127
      %v2883 = vpop.permute.xlu0 %2882
      %2884 = vrot.lane.b32.xlu0 %v2866, 127
      %v2885 = vpop.permute.xlu0 %2884
      %2886 = vrot.lane.b32.xlu0 %v2870, 127
      %v2887 = vpop.permute.xlu0 %2886
      %2888 = vrot.lane.b32.xlu0 %v2873, 127
      %v2889 = vpop.permute.xlu0 %2888
      %v2892 = vpack.i.b16 %v2879, %v2875
      %v2893 = vshrl.u32 %v2875, 16
      %v2894 = vshrl.u32 %v2879, 16
      %v2895 = vpack.i.b16 %v2894, %v2893
      %v2898 = vpack.i.b16 %v2887, %v2883
      %v2899 = vshrl.u32 %v2883, 16
      %v2900 = vshrl.u32 %v2887, 16
      %v2901 = vpack.i.b16 %v2900, %v2899
      %v2904 = vpack.i.b16 %v2881, %v2877
      %v2905 = vshrl.u32 %v2877, 16
      %v2906 = vshrl.u32 %v2881, 16
      %v2907 = vpack.i.b16 %v2906, %v2905
      %v2910 = vpack.i.b16 %v2889, %v2885
      %v2911 = vshrl.u32 %v2885, 16
      %v2912 = vshrl.u32 %v2889, 16
      %v2913 = vpack.i.b16 %v2912, %v2911
      %v2916 = vunpack.c.l.s4 1983009808
      %v2917 = vunpack.c.0.s8 %v2916
      %v2918 = vperm.slane %v2892, %v2917
      %v2921 = vunpack.c.l.s4 1983009808
      %v2922 = vunpack.c.0.s8 %v2921
      %v2923 = vperm.slane %v2898, %v2922
      %v2924 = vrot.slane %v2923, 4
      %v2925 = vsel %vm438, %v2924, %v2918
      %v2926 = vrot.slane %v2918, 4
      %v2927 = vsel %vm438, %v2923, %v2926
      %v2929 = vunpack.c.l.s4 1934713408
      %v2930 = vunpack.c.0.s8 %v2929
      %v2931 = vperm.slane %v2925, %v2930
      %v2933 = vunpack.c.l.s4 1934713408
      %v2934 = vunpack.c.0.s8 %v2933
      %v2935 = vperm.slane %v2927, %v2934
      %v2936 = vrot.slane %v2931, 4
      %v2937 = vsel %vm438, 0, %v2936
      %v2938 = vrot.slane %v2935, 4
      %v2939 = vsel %vm438, 0, %v2938
      %v2942 = vunpack.c.l.s4 1983009808
      %v2943 = vunpack.c.0.s8 %v2942
      %v2944 = vperm.slane %v2895, %v2943
      %v2947 = vunpack.c.l.s4 1983009808
      %v2948 = vunpack.c.0.s8 %v2947
      %v2949 = vperm.slane %v2901, %v2948
      %v2950 = vrot.slane %v2949, 4
      %v2951 = vsel %vm438, %v2950, %v2944
      %v2952 = vrot.slane %v2944, 4
      %v2953 = vsel %vm438, %v2949, %v2952
      %v2955 = vunpack.c.l.s4 1934713408
      %v2956 = vunpack.c.0.s8 %v2955
      %v2957 = vperm.slane %v2951, %v2956
      %v2959 = vunpack.c.l.s4 1934713408
      %v2960 = vunpack.c.0.s8 %v2959
      %v2961 = vperm.slane %v2953, %v2960
      %v2962 = vrot.slane %v2957, 4
      %v2963 = vsel %vm438, 0, %v2962
      %v2964 = vrot.slane %v2961, 4
      %v2965 = vsel %vm438, 0, %v2964
      %v2968 = vunpack.c.l.s4 1983009808
      %v2969 = vunpack.c.0.s8 %v2968
      %v2970 = vperm.slane %v2904, %v2969
      %v2973 = vunpack.c.l.s4 1983009808
      %v2974 = vunpack.c.0.s8 %v2973
      %v2975 = vperm.slane %v2910, %v2974
      %v2976 = vrot.slane %v2975, 4
      %v2977 = vsel %vm438, %v2976, %v2970
      %v2978 = vrot.slane %v2970, 4
      %v2979 = vsel %vm438, %v2975, %v2978
      %v2981 = vunpack.c.l.s4 1934713408
      %v2982 = vunpack.c.0.s8 %v2981
      %v2983 = vperm.slane %v2977, %v2982
      %v2985 = vunpack.c.l.s4 1934713408
      %v2986 = vunpack.c.0.s8 %v2985
      %v2987 = vperm.slane %v2979, %v2986
      %v2988 = vrot.slane %v2983, 4
      %v2989 = vsel %vm438, 0, %v2988
      %v2990 = vrot.slane %v2987, 4
      %v2991 = vsel %vm438, 0, %v2990
      %v2994 = vunpack.c.l.s4 1983009808
      %v2995 = vunpack.c.0.s8 %v2994
      %v2996 = vperm.slane %v2907, %v2995
      %v2999 = vunpack.c.l.s4 1983009808
      %v3000 = vunpack.c.0.s8 %v2999
      %v3001 = vperm.slane %v2913, %v3000
      %v3002 = vrot.slane %v3001, 4
      %v3003 = vsel %vm438, %v3002, %v2996
      %v3004 = vrot.slane %v2996, 4
      %v3005 = vsel %vm438, %v3001, %v3004
      %v3007 = vunpack.c.l.s4 1934713408
      %v3008 = vunpack.c.0.s8 %v3007
      %v3009 = vperm.slane %v3003, %v3008
      %v3011 = vunpack.c.l.s4 1934713408
      %v3012 = vunpack.c.0.s8 %v3011
      %v3013 = vperm.slane %v3005, %v3012
      %v3014 = vrot.slane %v3009, 4
      %v3015 = vsel %vm438, 0, %v3014
      %v3016 = vrot.slane %v3013, 4
      %v3017 = vsel %vm438, 0, %v3016
      %v3019 = vunpack.c.l.b16 %v2957
      %v3020 = vpack.c.b16 %v3019, %v3019
      %3021 = vrot.lane.b32.xlu0 %v3020, 16
      %v3022 = vpop.permute.xlu0 %3021
      %v3024 = vunpack.c.l.b16 %v2937
      %v3025 = vpack.c.b16 %v3024, %v3024
      %3026 = vrot.lane.b32.xlu0 %v3025, 32
      %v3027 = vpop.permute.xlu0 %3026
      %v3029 = vunpack.c.l.b16 %v2963
      %v3030 = vpack.c.b16 %v3029, %v3029
      %3031 = vrot.lane.b32.xlu0 %v3030, 48
      %v3032 = vpop.permute.xlu0 %3031
      %v3034 = vunpack.c.l.b16 %v2935
      %v3035 = vpack.c.b16 %v3034, %v3034
      %3036 = vrot.lane.b32.xlu0 %v3035, 64
      %v3037 = vpop.permute.xlu0 %3036
      %v3039 = vunpack.c.l.b16 %v2961
      %v3040 = vpack.c.b16 %v3039, %v3039
      %3041 = vrot.lane.b32.xlu0 %v3040, 80
      %v3042 = vpop.permute.xlu0 %3041
      %v3044 = vunpack.c.l.b16 %v2939
      %v3045 = vpack.c.b16 %v3044, %v3044
      %3046 = vrot.lane.b32.xlu0 %v3045, 96
      %v3047 = vpop.permute.xlu0 %3046
      %v3049 = vunpack.c.l.b16 %v2965
      %v3050 = vpack.c.b16 %v3049, %v3049
      %3051 = vrot.lane.b32.xlu0 %v3050, 112
      %v3052 = vpop.permute.xlu0 %3051
      %v3054 = vunpack.c.l.b16 %v3009
      %v3055 = vpack.c.b16 %v3054, %v3054
      %3056 = vrot.lane.b32.xlu0 %v3055, 16
      %v3057 = vpop.permute.xlu0 %3056
      %v3059 = vunpack.c.l.b16 %v2989
      %v3060 = vpack.c.b16 %v3059, %v3059
      %3061 = vrot.lane.b32.xlu0 %v3060, 32
      %v3062 = vpop.permute.xlu0 %3061
      %v3064 = vunpack.c.l.b16 %v3015
      %v3065 = vpack.c.b16 %v3064, %v3064
      %3066 = vrot.lane.b32.xlu0 %v3065, 48
      %v3067 = vpop.permute.xlu0 %3066
      %v3069 = vunpack.c.l.b16 %v2987
      %v3070 = vpack.c.b16 %v3069, %v3069
      %3071 = vrot.lane.b32.xlu0 %v3070, 64
      %v3072 = vpop.permute.xlu0 %3071
      %v3074 = vunpack.c.l.b16 %v3013
      %v3075 = vpack.c.b16 %v3074, %v3074
      %3076 = vrot.lane.b32.xlu0 %v3075, 80
      %v3077 = vpop.permute.xlu0 %3076
      %v3079 = vunpack.c.l.b16 %v2991
      %v3080 = vpack.c.b16 %v3079, %v3079
      %3081 = vrot.lane.b32.xlu0 %v3080, 96
      %v3082 = vpop.permute.xlu0 %3081
      %v3084 = vunpack.c.l.b16 %v3017
      %v3085 = vpack.c.b16 %v3084, %v3084
      %3086 = vrot.lane.b32.xlu0 %v3085, 112
      %v3087 = vpop.permute.xlu0 %3086
      %v3090 = vsel %vm887, %v2931, %v3022
      %v3092 = vsel %vm891, %v3090, %v3027
      %v3094 = vsel %vm894, %v3092, %v3032
      %v3096 = vsel %vm897, %v3094, %v3037
      %v3098 = vsel %vm900, %v3096, %v3042
      %v3100 = vsel %vm903, %v3098, %v3047
      %v3102 = vsel %vm906, %v3100, %v3052
      %v3105 = vsel %vm887, %v2983, %v3057
      %v3107 = vsel %vm891, %v3105, %v3062
      %v3109 = vsel %vm894, %v3107, %v3067
      %v3111 = vsel %vm897, %v3109, %v3072
      %v3113 = vsel %vm900, %v3111, %v3077
      %v3115 = vsel %vm903, %v3113, %v3082
      %v3117 = vsel %vm906, %v3115, %v3087
      %v3120 = vunpack.c.l.b16 %v3102
      %v3121 = vunpack.c.l.b16 %v3117
      %v3122 = vpack.c.b16 %v3121, %v3120
      %v3123 = vrot.slane %v3122, 6
      %3125 = vst [vmem:[#allocation3 + $0x18] sm:$0xcc] %v3123
      %v3126 = vld [vmem:[#allocation2] sm:$0xe]
      %v3127 = vld [vmem:[#allocation2 + $0x4] sm:$0xf]
      %v3128 = vld [vmem:[#allocation2 + $0x8] sm:$0x1]
      %v3129 = vld [vmem:[#allocation2 + $0xc] sm:$0xe]
      %v3130 = vld [vmem:[#allocation2 + $0x10] sm:$0xf]
      %v3131 = vld [vmem:[#allocation2 + $0x14] sm:$0x1]
      %v3132 = vld [vmem:[#allocation2 + $0x18] sm:$0xe]
      %v3133 = vld [vmem:[#allocation2 + $0x1c] sm:$0xf]
      %v3134 = vld [vmem:[#allocation2 + $0x20] sm:$0x1]
      %v3135 = vld [vmem:[#allocation2 + $0x24] sm:$0xe]
      %v3136 = vld [vmem:[#allocation2 + $0x28] sm:$0xf]
      %v3137 = vld [vmem:[#allocation2 + $0x2c] sm:$0x1]
      %v3150 = vrot.slane %v3126, 5
      %v3151 = vrot.slane %v3150, 4
      %v3152 = vrot.slane %v3127, 5
      %v3153 = vsel %vm2558, %v3151, %v3152
      %v3154 = vrot.slane %v3152, 4
      %v3155 = vrot.slane %v3128, 5
      %v3156 = vsel %vm2558, %v3154, %v3155
      %v3157 = vrot.slane %v3129, 5
      %v3158 = vrot.slane %v3157, 4
      %v3159 = vrot.slane %v3130, 5
      %v3160 = vsel %vm2558, %v3158, %v3159
      %v3161 = vrot.slane %v3159, 4
      %v3162 = vrot.slane %v3131, 5
      %v3163 = vsel %vm2558, %v3161, %v3162
      %v3164 = vrot.slane %v3132, 5
      %v3165 = vrot.slane %v3164, 4
      %v3166 = vrot.slane %v3133, 5
      %v3167 = vsel %vm2558, %v3165, %v3166
      %v3168 = vrot.slane %v3166, 4
      %v3169 = vrot.slane %v3134, 5
      %v3170 = vsel %vm2558, %v3168, %v3169
      %v3171 = vrot.slane %v3135, 5
      %v3172 = vrot.slane %v3171, 4
      %v3173 = vrot.slane %v3136, 5
      %v3174 = vsel %vm2558, %v3172, %v3173
      %v3175 = vrot.slane %v3173, 4
      %v3176 = vrot.slane %v3137, 5
      %v3177 = vsel %vm2558, %v3175, %v3176
      %3178 = vrot.lane.b32.xlu0 %v3153, 126
      %v3179 = vpop.permute.xlu0 %3178
      %3180 = vrot.lane.b32.xlu0 %v3156, 126
      %v3181 = vpop.permute.xlu0 %3180
      %3182 = vrot.lane.b32.xlu0 %v3160, 126
      %v3183 = vpop.permute.xlu0 %3182
      %3184 = vrot.lane.b32.xlu0 %v3163, 126
      %v3185 = vpop.permute.xlu0 %3184
      %3186 = vrot.lane.b32.xlu0 %v3167, 126
      %v3187 = vpop.permute.xlu0 %3186
      %3188 = vrot.lane.b32.xlu0 %v3170, 126
      %v3189 = vpop.permute.xlu0 %3188
      %3190 = vrot.lane.b32.xlu0 %v3174, 126
      %v3191 = vpop.permute.xlu0 %3190
      %3192 = vrot.lane.b32.xlu0 %v3177, 126
      %v3193 = vpop.permute.xlu0 %3192
      %v3196 = vpack.i.b16 %v3183, %v3179
      %v3197 = vshrl.u32 %v3179, 16
      %v3198 = vshrl.u32 %v3183, 16
      %v3199 = vpack.i.b16 %v3198, %v3197
      %v3202 = vpack.i.b16 %v3191, %v3187
      %v3203 = vshrl.u32 %v3187, 16
      %v3204 = vshrl.u32 %v3191, 16
      %v3205 = vpack.i.b16 %v3204, %v3203
      %v3208 = vpack.i.b16 %v3185, %v3181
      %v3209 = vshrl.u32 %v3181, 16
      %v3210 = vshrl.u32 %v3185, 16
      %v3211 = vpack.i.b16 %v3210, %v3209
      %v3214 = vpack.i.b16 %v3193, %v3189
      %v3215 = vshrl.u32 %v3189, 16
      %v3216 = vshrl.u32 %v3193, 16
      %v3217 = vpack.i.b16 %v3216, %v3215
      %v3220 = vunpack.c.l.s4 1983009808
      %v3221 = vunpack.c.0.s8 %v3220
      %v3222 = vperm.slane %v3196, %v3221
      %v3225 = vunpack.c.l.s4 1983009808
      %v3226 = vunpack.c.0.s8 %v3225
      %v3227 = vperm.slane %v3202, %v3226
      %v3228 = vrot.slane %v3227, 4
      %v3229 = vsel %vm438, %v3228, %v3222
      %v3230 = vrot.slane %v3222, 4
      %v3231 = vsel %vm438, %v3227, %v3230
      %v3233 = vunpack.c.l.s4 1934713408
      %v3234 = vunpack.c.0.s8 %v3233
      %v3235 = vperm.slane %v3229, %v3234
      %v3237 = vunpack.c.l.s4 1934713408
      %v3238 = vunpack.c.0.s8 %v3237
      %v3239 = vperm.slane %v3231, %v3238
      %v3240 = vrot.slane %v3235, 4
      %v3241 = vsel %vm438, 0, %v3240
      %v3242 = vrot.slane %v3239, 4
      %v3243 = vsel %vm438, 0, %v3242
      %v3246 = vunpack.c.l.s4 1983009808
      %v3247 = vunpack.c.0.s8 %v3246
      %v3248 = vperm.slane %v3199, %v3247
      %v3251 = vunpack.c.l.s4 1983009808
      %v3252 = vunpack.c.0.s8 %v3251
      %v3253 = vperm.slane %v3205, %v3252
      %v3254 = vrot.slane %v3253, 4
      %v3255 = vsel %vm438, %v3254, %v3248
      %v3256 = vrot.slane %v3248, 4
      %v3257 = vsel %vm438, %v3253, %v3256
      %v3259 = vunpack.c.l.s4 1934713408
      %v3260 = vunpack.c.0.s8 %v3259
      %v3261 = vperm.slane %v3255, %v3260
      %v3263 = vunpack.c.l.s4 1934713408
      %v3264 = vunpack.c.0.s8 %v3263
      %v3265 = vperm.slane %v3257, %v3264
      %v3266 = vrot.slane %v3261, 4
      %v3267 = vsel %vm438, 0, %v3266
      %v3268 = vrot.slane %v3265, 4
      %v3269 = vsel %vm438, 0, %v3268
      %v3272 = vunpack.c.l.s4 1983009808
      %v3273 = vunpack.c.0.s8 %v3272
      %v3274 = vperm.slane %v3208, %v3273
      %v3277 = vunpack.c.l.s4 1983009808
      %v3278 = vunpack.c.0.s8 %v3277
      %v3279 = vperm.slane %v3214, %v3278
      %v3280 = vrot.slane %v3279, 4
      %v3281 = vsel %vm438, %v3280, %v3274
      %v3282 = vrot.slane %v3274, 4
      %v3283 = vsel %vm438, %v3279, %v3282
      %v3285 = vunpack.c.l.s4 1934713408
      %v3286 = vunpack.c.0.s8 %v3285
      %v3287 = vperm.slane %v3281, %v3286
      %v3289 = vunpack.c.l.s4 1934713408
      %v3290 = vunpack.c.0.s8 %v3289
      %v3291 = vperm.slane %v3283, %v3290
      %v3292 = vrot.slane %v3287, 4
      %v3293 = vsel %vm438, 0, %v3292
      %v3294 = vrot.slane %v3291, 4
      %v3295 = vsel %vm438, 0, %v3294
      %v3298 = vunpack.c.l.s4 1983009808
      %v3299 = vunpack.c.0.s8 %v3298
      %v3300 = vperm.slane %v3211, %v3299
      %v3303 = vunpack.c.l.s4 1983009808
      %v3304 = vunpack.c.0.s8 %v3303
      %v3305 = vperm.slane %v3217, %v3304
      %v3306 = vrot.slane %v3305, 4
      %v3307 = vsel %vm438, %v3306, %v3300
      %v3308 = vrot.slane %v3300, 4
      %v3309 = vsel %vm438, %v3305, %v3308
      %v3311 = vunpack.c.l.s4 1934713408
      %v3312 = vunpack.c.0.s8 %v3311
      %v3313 = vperm.slane %v3307, %v3312
      %v3315 = vunpack.c.l.s4 1934713408
      %v3316 = vunpack.c.0.s8 %v3315
      %v3317 = vperm.slane %v3309, %v3316
      %v3318 = vrot.slane %v3313, 4
      %v3319 = vsel %vm438, 0, %v3318
      %v3320 = vrot.slane %v3317, 4
      %v3321 = vsel %vm438, 0, %v3320
      %v3323 = vunpack.c.l.b16 %v3261
      %v3324 = vpack.c.b16 %v3323, %v3323
      %3325 = vrot.lane.b32.xlu0 %v3324, 16
      %v3326 = vpop.permute.xlu0 %3325
      %v3328 = vunpack.c.l.b16 %v3241
      %v3329 = vpack.c.b16 %v3328, %v3328
      %3330 = vrot.lane.b32.xlu0 %v3329, 32
      %v3331 = vpop.permute.xlu0 %3330
      %v3333 = vunpack.c.l.b16 %v3267
      %v3334 = vpack.c.b16 %v3333, %v3333
      %3335 = vrot.lane.b32.xlu0 %v3334, 48
      %v3336 = vpop.permute.xlu0 %3335
      %v3338 = vunpack.c.l.b16 %v3239
      %v3339 = vpack.c.b16 %v3338, %v3338
      %3340 = vrot.lane.b32.xlu0 %v3339, 64
      %v3341 = vpop.permute.xlu0 %3340
      %v3343 = vunpack.c.l.b16 %v3265
      %v3344 = vpack.c.b16 %v3343, %v3343
      %3345 = vrot.lane.b32.xlu0 %v3344, 80
      %v3346 = vpop.permute.xlu0 %3345
      %v3348 = vunpack.c.l.b16 %v3243
      %v3349 = vpack.c.b16 %v3348, %v3348
      %3350 = vrot.lane.b32.xlu0 %v3349, 96
      %v3351 = vpop.permute.xlu0 %3350
      %v3353 = vunpack.c.l.b16 %v3269
      %v3354 = vpack.c.b16 %v3353, %v3353
      %3355 = vrot.lane.b32.xlu0 %v3354, 112
      %v3356 = vpop.permute.xlu0 %3355
      %v3358 = vunpack.c.l.b16 %v3313
      %v3359 = vpack.c.b16 %v3358, %v3358
      %3360 = vrot.lane.b32.xlu0 %v3359, 16
      %v3361 = vpop.permute.xlu0 %3360
      %v3363 = vunpack.c.l.b16 %v3293
      %v3364 = vpack.c.b16 %v3363, %v3363
      %3365 = vrot.lane.b32.xlu0 %v3364, 32
      %v3366 = vpop.permute.xlu0 %3365
      %v3368 = vunpack.c.l.b16 %v3319
      %v3369 = vpack.c.b16 %v3368, %v3368
      %3370 = vrot.lane.b32.xlu0 %v3369, 48
      %v3371 = vpop.permute.xlu0 %3370
      %v3373 = vunpack.c.l.b16 %v3291
      %v3374 = vpack.c.b16 %v3373, %v3373
      %3375 = vrot.lane.b32.xlu0 %v3374, 64
      %v3376 = vpop.permute.xlu0 %3375
      %v3378 = vunpack.c.l.b16 %v3317
      %v3379 = vpack.c.b16 %v3378, %v3378
      %3380 = vrot.lane.b32.xlu0 %v3379, 80
      %v3381 = vpop.permute.xlu0 %3380
      %v3383 = vunpack.c.l.b16 %v3295
      %v3384 = vpack.c.b16 %v3383, %v3383
      %3385 = vrot.lane.b32.xlu0 %v3384, 96
      %v3386 = vpop.permute.xlu0 %3385
      %v3388 = vunpack.c.l.b16 %v3321
      %v3389 = vpack.c.b16 %v3388, %v3388
      %3390 = vrot.lane.b32.xlu0 %v3389, 112
      %v3391 = vpop.permute.xlu0 %3390
      %v3394 = vsel %vm887, %v3235, %v3326
      %v3396 = vsel %vm891, %v3394, %v3331
      %v3398 = vsel %vm894, %v3396, %v3336
      %v3400 = vsel %vm897, %v3398, %v3341
      %v3402 = vsel %vm900, %v3400, %v3346
      %v3404 = vsel %vm903, %v3402, %v3351
      %v3406 = vsel %vm906, %v3404, %v3356
      %v3409 = vsel %vm887, %v3287, %v3361
      %v3411 = vsel %vm891, %v3409, %v3366
      %v3413 = vsel %vm894, %v3411, %v3371
      %v3415 = vsel %vm897, %v3413, %v3376
      %v3417 = vsel %vm900, %v3415, %v3381
      %v3419 = vsel %vm903, %v3417, %v3386
      %v3421 = vsel %vm906, %v3419, %v3391
      %v3424 = vunpack.c.l.b16 %v3406
      %v3425 = vunpack.c.l.b16 %v3421
      %v3426 = vpack.c.b16 %v3425, %v3424
      %3428 = vst [vmem:[#allocation3 + $0x20] sm:$0x33] %v3426
      %v3429 = vld [vmem:[%s3] sm:$0x3]
      %v3430 = vld [vmem:[#allocation3] sm:$0xff]
      %v3431 = vld [vmem:[#allocation3 + $0x8] sm:$0xff]
      %v3432 = vld [vmem:[#allocation3 + $0x10] sm:$0xff]
      %v3433 = vld [vmem:[#allocation3 + $0x18] sm:$0xff]
      %v3434 = vld [vmem:[#allocation3 + $0x20] sm:$0x33]
      %v3435 = vld [vmem:[%s4] sm:$0xf]
      %3437 = vset.pattern.permute.xlu0 0
      %3438 = vperm.xlu0 %3437, %v3435
      %v3439 = vpop.permute.xlu0 %3438
      %v3446 = vunpack.c.l.b16 %v3430
      %v3447 = vunpack.c.h.b16 %v3430
      %v3448 = vunpack.c.l.b16 %v3431
      %v3449 = vunpack.c.h.b16 %v3431
      %v3450 = vunpack.c.l.b16 %v3432
      %v3451 = vunpack.c.h.b16 %v3432
      %v3452 = vunpack.c.l.b16 %v3433
      %v3453 = vunpack.c.h.b16 %v3433
      %v3454 = vunpack.c.l.b16 %v3434
      %v3455 = vunpack.c.h.b16 %v3434
      %v3456 = vpack.c.b16 %v3448, %v3446
      %v3457 = vpack.c.b16 %v3449, %v3447
      %v3458 = vpack.c.b16 %v3452, %v3450
      %v3459 = vpack.c.b16 %v3453, %v3451
      %v3460 = vpack.c.b16 %v3454, %v3454
      %v3461 = vpack.c.b16 %v3455, %v3455
      %vm3466 = vcmask 293888
      %v3468 = vsel %vm3466, %v3429, 0
      %vm3470 = vcmask 1041408
      %v3472 = vsel %vm3470, %v3460, 0
      %v3475 = vsel %vm3470, %v3461, 0
      %3477 = vmatpush.bf16.msra.mxu0 0
      %3478 = vmatpush.bf16.msra.mxu0 0
      %3479 = vmatpush.bf16.msra.mxu0 0
      %3480 = vmatpush.bf16.msra.mxu0 0
      %3481 = vmatpush.bf16.msra.mxu0 0
      %3482 = vmatpush.bf16.msra.mxu0 %v3472
      %3483 = vmatpush.bf16.msra.mxu0 %v3458
      %3484 = vmatpush.bf16.msra.mxu0 %v3456
      %3485 = vmatmul.bf16.gmra.mxu0 %v3468
      %v3486 = vpop.f32.mrf.mxu0
      %v3487 = vadd.f32 %v3439, %v3486
      %v3488 = vpop.f32.mrf.mxu0
      %3489 = vdwg.mxu0
      %3490 = vmatpush.bf16.msra.mxu0 0
      %3491 = vmatpush.bf16.msra.mxu0 0
      %3492 = vmatpush.bf16.msra.mxu0 0
      %3493 = vmatpush.bf16.msra.mxu0 0
      %3494 = vmatpush.bf16.msra.mxu0 0
      %3495 = vmatpush.bf16.msra.mxu0 %v3475
      %3496 = vmatpush.bf16.msra.mxu0 %v3459
      %3497 = vmatpush.bf16.msra.mxu0 %v3457
      %3498 = vmatmul.bf16.gmra.mxu0 %v3468
      %v3499 = vpop.f32.mrf.mxu0
      %v3500 = vadd.f32 %v3439, %v3499
      %v3501 = vpop.f32.mrf.mxu0
      %3502 = vdwg.mxu0
      %v3503 = vld [vmem:[%s266] sm:$0xff]
      %3505 = vst [vmem:[#allocation1] ss:$2 sm:$0xff] %v3503
      %v3506 = vld.sshfl [vmem:[#allocation1] sm:$0xff pattern:$0x75316420]
      %v3507 = vld.sshfl [vmem:[#allocation1 + $0x8] sm:$0xff pattern:$0x75316420]
      %v3510 = vadd.f32 %v3487, %v3506
      %v3511 = vadd.f32 %v3500, %v3507
      %v3514 = vrot.slane %v3511, 4
      %vm3515 = vcmask 1043456
      %v3516 = vsel %vm3515, %v3510, %v3514
      %3518 = vst [vmem:[%s271] sm:$0xff] %v3516
      %p3519 = scmp.lt.s32.totalorder %s17, 1
      %s3520 = scalar_select %p3519, %s17, 1
      %s3521 = smul.addr %s3520, 2
      %s3522 = smul.addr %s3521, 4
      %s3523 = scalar_lea.vmem %s6, %s3522
      // Predicated region
      $region45: #{resnet_block.3} parent=43 // pred_check
        %p3524 = pneg %p171
      $region46: #{resnet_block.3} parent=43 // pred_check_branch
        %3526 = sbr.rel (%p3524) target = $region48
      $region47: #{resnet_block.3} parent=43 // pred_region
        _
      $region48: #{resnet_block.3} parent=43 // pred_fallthru
        _
    $region44: #{resnet_block.3} parent=5 // pred_fallthru
      _
    %p3527 = scmp.le.s32.totalorder 2, %s12
    // Predicated region
    $region49: #{resnet_block.3} parent=5 // pred_check
      %p3528 = pneg %p3527
    $region50: #{resnet_block.3} parent=5 // pred_check_branch
      %3530 = sbr.rel (%p3528) target = $region52
    $region51: #{resnet_block.3} parent=5 // pred_region
      %s3531 = ssub.s32 %s12, 2
      // Predicated region
      $region53: #{resnet_block.3} parent=51 // pred_check
        %p3532 = pneg %p177
      $region54: #{resnet_block.3} parent=51 // pred_check_branch
        %3534 = sbr.rel (%p3532) target = $region56
      $region55: #{resnet_block.3} parent=51 // pred_region
        %p3535 = scmp.lt.s32.totalorder %s18, 1
        %s3536 = scalar_select %p3535, %s18, 1
        %s3537 = smul.addr %s3536, 2
        %s3538 = smul.addr %s3537, 4
        %s3539 = scalar_lea.vmem %s6, %s3538
      $region56: #{resnet_block.3} parent=51 // pred_fallthru
        _
    $region52: #{resnet_block.3} parent=5 // pred_fallthru
      _
  $region6: #{resnet_block.3} parent=0 // loop_footer
    %s16 = sadd.s32 1, %s12
  $region7: #{resnet_block.3} parent=0 // loop_footer_branch
    %11 = sbr.rel target = $region3
  $region8: #{resnet_block.3} parent=0 // loop_exit
    _

</llo_original>
